<compile_context>
chip_gen: v6e
topology: v6e:2x2x1
jax: 0.10.0
libtpu: 0.0.40
codegen_flags: <defaults>
</compile_context>

<pallas_src>
import functools

import jax
import jax.numpy as jnp
from jax import lax
from jax.experimental import pallas as pl
from jax.experimental.pallas import tpu as pltpu

_BN_EPS = 1e-5
_INV_SQRT2 = 0.7071067811865476


def _cdiv(a, b):
    return -(-a // b)


def _round_up(x, m):
    return _cdiv(x, m) * m


def make_bfm(ks: int, alpha) -> jnp.ndarray:
    """BFM[i,j,k] = alpha / (euclidean((i,j,k), center) + alpha), shape (ks,ks,ks)."""
    c = ks // 2
    r = jnp.arange(ks, dtype=jnp.float32)
    di, dj, dk = jnp.meshgrid(r, r, r, indexing="ij")
    dist = jnp.sqrt((di - c) ** 2 + (dj - c) ** 2 + (dk - c) ** 2)
    return alpha / (dist + alpha)


# ---------------------------------------------------------------------------
# Pass 1: depthwise conv + per-tile per-channel partial (sum, sumsq) stats.
# ---------------------------------------------------------------------------
def _make_conv_stats_kernel(*, ks, tD, nDt, D, W, Hout, Wout_p, Cp):
    halo = ks - 1

    def kernel(x_hbm, w_ref, feat_ref, stats_ref, xbuf, sem):
        n = pl.program_id(0)
        dt = pl.program_id(1)
        slot = dt % 2

        def start_fetch(d_idx, s):
            off = pl.multiple_of(d_idx * tD, tD)
            pltpu.make_async_copy(
                x_hbm.at[n, pl.ds(off, tD + halo)], xbuf.at[s], sem.at[s]
            ).start()

        # Prime the pipeline at the start of every batch row (dt == 0).  N is
        # the megacore-"parallel" axis: every core's first step for a given n
        # primes its own scratch, so there is no cross-core DMA carry.
        @pl.when(dt == 0)
        def _():
            start_fetch(0, slot)

        # Wait for this step's slab (only size/semaphore matter for the wait).
        pltpu.make_async_copy(
            x_hbm.at[n, pl.ds(0, tD + halo)], xbuf.at[slot], sem.at[slot]
        ).wait()

        # Prefetch the next slab of the same batch row behind the compute.
        @pl.when(dt + 1 < nDt)
        def _():
            start_fetch(dt + 1, 1 - slot)

        xv = xbuf.at[slot]            # (tD+halo, Hin, Win_p, Cp) VMEM view
        wv = w_ref[...]               # (ks^3, Cp)

        # Depthwise 3D conv as ks^3 shifted multiply-accumulates.  The W
        # (sublane) shift is hoisted: one retiled load per kw, then kd/kh are
        # cheap major-dim slices.  One independent partial accumulator per kw
        # avoids a single ks^3-long serial add chain.
        # TODO(synk): for large ks (e.g. 7/21 as in RepUX-Net) switch the kd/kh
        # loops to lax.fori_loop to keep code size bounded.
        partials = []
        for kw in range(ks):
            xw = xv[:, :, kw:kw + Wout_p, :]          # (tD+halo, Hin, Wout_p, Cp)
            pacc = xw[0:tD, 0:Hout] * wv[kw]          # tap (kd=0, kh=0, kw)
            for kd in range(ks):
                for kh in range(ks):
                    if kd == 0 and kh == 0:
                        continue
                    t = (kd * ks + kh) * ks + kw
                    pacc = pacc + xw[kd:kd + tD, kh:kh + Hout] * wv[t]
            partials.append(pacc)
        acc = partials[0]
        for pacc in partials[1:]:
            acc = acc + pacc                           # (tD, Hout, Wout_p, Cp) f32

        feat_ref[0] = acc.astype(feat_ref.dtype)

        # Per-channel partial statistics.  Output rows that only exist because
        # of alignment padding (W -> Wout_p, D -> nDt*tD) are masked out so the
        # batch statistics only see real voxels.  (Masks are compiled in only
        # when padding actually exists.)
        acc_m = acc
        if Wout_p > W:
            wmask = lax.broadcasted_iota(jnp.int32, (1, 1, Wout_p, 1), 2) < W
            acc_m = jnp.where(wmask, acc_m, 0.0)
        if nDt * tD > D:
            dmask = (lax.broadcasted_iota(jnp.int32, (tD, 1, 1, 1), 0) + dt * tD) < D
            acc_m = jnp.where(dmask, acc_m, 0.0)
        s1 = jnp.sum(acc_m, axis=(0, 1, 2))            # (Cp,)  sum
        s2 = jnp.sum(acc_m * acc, axis=(0, 1, 2))      # (Cp,)  sum of squares (masked)
        stats_ref[0, 0] = jnp.concatenate(
            [s1[None, :], s2[None, :], jnp.zeros((6, Cp), jnp.float32)], axis=0)

    return kernel


# ---------------------------------------------------------------------------
# Pass 2: fused BatchNorm affine (scale/shift) + exact-erf GELU.
# ---------------------------------------------------------------------------
def _bn_gelu_kernel(feat_ref, scale_ref, shift_ref, o_ref):
    y = feat_ref[...] * scale_ref[0] + shift_ref[0]
    o_ref[...] = (0.5 * y * (1.0 + lax.erf(y * _INV_SQRT2))).astype(o_ref.dtype)


# ---------------------------------------------------------------------------
# VMEM sizing helpers (budgeted against v7x's 64 MiB per-TC with headroom).
# ---------------------------------------------------------------------------
def _pass1_vmem_bytes(tD, ks, Hin, Hout, Win_p, Wout_p, Cp):
    f32 = 4
    halo = ks - 1
    xbuf = 2 * (tD + halo) * Hin * Win_p * Cp * f32        # manual double buffer
    featb = 2 * tD * Hout * Wout_p * Cp * f32              # pipelined output blocks
    temps = (2 * (tD + halo) * Hin * Wout_p * Cp           # hoisted kw slices
             + 4 * tD * Hout * Wout_p * Cp) * f32          # accumulators
    return xbuf + featb + temps


def _choose_tile_d(D, ks, Hin, Hout, Win_p, Wout_p, Cp,
                   budget_bytes=36 * 1024 * 1024):
    tD = 1
    for cand in range(1, D + 1):
        if _pass1_vmem_bytes(cand, ks, Hin, Hout, Win_p, Wout_p, Cp) <= budget_bytes:
            tD = cand
        else:
            break
    nDt = _cdiv(D, tD)
    tD = _cdiv(D, nDt)          # minimize D padding
    return tD, nDt


def _choose_pass2_mult(nDt, tD, Hout, Wout_p, Cp,
                       budget_bytes=24 * 1024 * 1024):
    """Largest divisor m of nDt s.t. pass-2 blocks of depth m*tD fit VMEM."""
    per_d = Hout * Wout_p * Cp * 4
    best = 1
    for m in range(1, nDt + 1):
        if nDt % m:
            continue
        # 2x double-buffer * (input block + output block)
        if 4 * m * tD * per_d <= budget_bytes:
            best = m
    return best


# ---------------------------------------------------------------------------
# Wrapper
# ---------------------------------------------------------------------------
@functools.partial(jax.jit, static_argnames=("ks", "tile_d"))
def repux_block_forward(x_ncdhw, dw_weight, dw_bias, bn_gamma, bn_beta,
                        ks, alpha, tile_d=None):
    """x_ncdhw: (N,C,D,H,W)  dw_weight: (C,1,ks,ks,ks)  dw_bias/bn_*: (C,)."""
    del dw_bias  # exactly cancelled by training-mode BatchNorm (see header note)
    N, C, D, H, W = x_ncdhw.shape
    p = ks // 2
    halo = ks - 1
    kk = ks ** 3

    Cp = _round_up(C, 128)                 # lane-dense channel axis
    Wout_p = _round_up(W, 8)               # sublane-aligned output width
    Win_p = _round_up(Wout_p + halo, 8)    # input width incl. halo, aligned
    Hout, Hin = H, H + 2 * p

    if tile_d is None:
        tD, nDt = _choose_tile_d(D, ks, Hin, Hout, Win_p, Wout_p, Cp)
    else:
        tD = max(1, min(int(tile_d), D))
        nDt = _cdiv(D, tD)
    D_p = nDt * tD
    Din = D_p + halo

    # ---- weight prep: BFM scaling, (C,1,ks,ks,ks) -> (ks^3, Cp) -----------
    bfm = make_bfm(ks, alpha)                                      # (ks,ks,ks)
    w1 = dw_weight[:, 0].astype(jnp.float32) * bfm[None]           # (C,ks,ks,ks)
    w_kkkc = jnp.transpose(w1, (1, 2, 3, 0)).reshape(kk, C)        # row = (kd*ks+kh)*ks+kw
    w_pad = jnp.pad(w_kkkc, ((0, 0), (0, Cp - C)))

    # ---- input prep: NCDHW -> NDHWC, zero-pad to aligned / halo'd extents -
    x_cl = jnp.transpose(x_ncdhw, (0, 2, 3, 4, 1)).astype(jnp.float32)
    x_pad = jnp.pad(
        x_cl,
        ((0, 0),
         (p, Din - D - p),
         (p, p),
         (p, Win_p - W - p),
         (0, Cp - C)))

    # Scoped-VMEM limit: cover the pass-1 working set with headroom, but stay
    # within v7x's 64 MiB physical VMEM (also fine on v5e/v6e's 128 MiB).
    est = _pass1_vmem_bytes(tD, ks, Hin, Hout, Win_p, Wout_p, Cp)
    vmem_limit = int(min(max(32 * 1024 * 1024, est + 8 * 1024 * 1024),
                         62 * 1024 * 1024))
    feat_bytes = N * D_p * Hout * Wout_p * Cp * 4

    # ---- pass 1: depthwise conv + partial batch statistics ----------------
    conv_kernel = _make_conv_stats_kernel(
        ks=ks, tD=tD, nDt=nDt, D=D, W=W, Hout=Hout, Wout_p=Wout_p, Cp=Cp)

    feat, stats = pl.pallas_call(
        conv_kernel,
        out_shape=(
            jax.ShapeDtypeStruct((N, D_p, Hout, Wout_p, Cp), jnp.float32),
            jax.ShapeDtypeStruct((N, nDt, 8, Cp), jnp.float32),
        ),
        grid_spec=pltpu.PrefetchScalarGridSpec(
            num_scalar_prefetch=0,
            grid=(N, nDt),
            in_specs=[
                pl.BlockSpec(memory_space=pl.ANY),                # x stays in HBM
                pl.BlockSpec((kk, Cp), lambda n, dt: (0, 0)),     # small weights
            ],
            out_specs=[
                pl.BlockSpec((1, tD, Hout, Wout_p, Cp),
                             lambda n, dt: (n, dt, 0, 0, 0)),
                pl.BlockSpec((1, 1, 8, Cp), lambda n, dt: (n, dt, 0, 0)),
            ],
            scratch_shapes=[
                pltpu.VMEM((2, tD + halo, Hin, Win_p, Cp), jnp.float32),
                pltpu.SemaphoreType.DMA((2,)),
            ],
        ),
        compiler_params=pltpu.CompilerParams(
            dimension_semantics=("parallel", "arbitrary"),
            vmem_limit_bytes=vmem_limit),
        cost_estimate=pl.CostEstimate(
            flops=2 * kk * N * D_p * Hout * Wout_p * Cp,
            transcendentals=0,
            bytes_accessed=(x_pad.size + w_pad.size) * 4
                           + feat_bytes + N * nDt * 8 * Cp * 4),
    )(x_pad, w_pad)

    # ---- glue: tiny O(C) stats reduction -> fused BN scale / shift --------
    count = float(N * D * H * W)
    s1 = jnp.sum(stats[:, :, 0, :], axis=(0, 1))                   # (Cp,)
    s2 = jnp.sum(stats[:, :, 1, :], axis=(0, 1))                   # (Cp,)
    mean = s1 / count
    var = jnp.maximum(s2 / count - mean * mean, 0.0)               # biased variance
    inv_std = lax.rsqrt(var + _BN_EPS)
    gamma_p = jnp.pad(bn_gamma.astype(jnp.float32), (0, Cp - C))
    beta_p = jnp.pad(bn_beta.astype(jnp.float32), (0, Cp - C))
    scale = (gamma_p * inv_std).reshape(1, Cp)
    shift = (beta_p - mean * gamma_p * inv_std).reshape(1, Cp)

    # ---- pass 2: y = feat*scale + shift, exact-erf GELU --------------------
    # Pass 2 is a pure streaming pass (no halo, no scratch), so use the largest
    # depth tile that is a multiple of tD, divides D_p exactly and fits VMEM.
    m2 = _choose_pass2_mult(nDt, tD, Hout, Wout_p, Cp)
    tD2 = tD * m2
    nDt2 = nDt // m2

    out_full = pl.pallas_call(
        _bn_gelu_kernel,
        out_shape=jax.ShapeDtypeStruct((N, D_p, Hout, Wout_p, Cp), jnp.float32),
        grid_spec=pltpu.PrefetchScalarGridSpec(
            num_scalar_prefetch=0,
            grid=(N, nDt2),
            in_specs=[
                pl.BlockSpec((1, tD2, Hout, Wout_p, Cp),
                             lambda n, dt: (n, dt, 0, 0, 0)),
                pl.BlockSpec((1, Cp), lambda n, dt: (0, 0)),
                pl.BlockSpec((1, Cp), lambda n, dt: (0, 0)),
            ],
            out_specs=pl.BlockSpec((1, tD2, Hout, Wout_p, Cp),
                                   lambda n, dt: (n, dt, 0, 0, 0)),
        ),
        compiler_params=pltpu.CompilerParams(
            dimension_semantics=("parallel", "parallel"),
            vmem_limit_bytes=vmem_limit),
        cost_estimate=pl.CostEstimate(
            flops=10 * N * D_p * Hout * Wout_p * Cp,
            transcendentals=N * D_p * Hout * Wout_p * Cp,
            bytes_accessed=2 * feat_bytes),
    )(feat, scale, shift)

    # ---- drop alignment padding, back to NCDHW -----------------------------
    out = out_full[:, :D, :, :W, :C]
    return jnp.transpose(out, (0, 4, 1, 2, 3))


# ---------------------------------------------------------------------------
# Pure-JAX reference of the PyTorch forward (for validation only).
# ---------------------------------------------------------------------------
def _reference(x_ncdhw, dw_weight, dw_bias, bn_gamma, bn_beta, ks, alpha):
    C = x_ncdhw.shape[1]
    bfm = make_bfm(ks, alpha)
    w1 = dw_weight * bfm[None, None]                               # (C,1,ks,ks,ks)
    feat = lax.conv_general_dilated(
        x_ncdhw.astype(jnp.float32), w1.astype(jnp.float32),
        window_strides=(1, 1, 1), padding=[(ks // 2, ks // 2)] * 3,
        dimension_numbers=("NCDHW", "OIDHW", "NCDHW"),
        feature_group_count=C)
    feat = feat + dw_bias.reshape(1, C, 1, 1, 1)
    mean = jnp.mean(feat, axis=(0, 2, 3, 4), keepdims=True)
    var = jnp.mean((feat - mean) ** 2, axis=(0, 2, 3, 4), keepdims=True)
    feat = (feat - mean) * lax.rsqrt(var + _BN_EPS)
    feat = feat * bn_gamma.reshape(1, C, 1, 1, 1) + bn_beta.reshape(1, C, 1, 1, 1)
    return jax.nn.gelu(feat, approximate=False)


def _run_case(key, N, C, D, H, W, ks, alpha, tile_d):
    kx, kwt, kb = jax.random.split(key, 3)
    x = jax.random.normal(kx, (N, C, D, H, W), dtype=jnp.float32)
    dw_weight = jax.random.normal(kwt, (C, 1, ks, ks, ks), dtype=jnp.float32) * 0.1
    dw_bias = jax.random.normal(kb, (C,), dtype=jnp.float32) * 0.1
    bn_gamma = jnp.ones((C,), jnp.float32)     # PyTorch BatchNorm3d default init
    bn_beta = jnp.zeros((C,), jnp.float32)

    out = repux_block_forward(x, dw_weight, dw_bias, bn_gamma, bn_beta,
                              ks=ks, alpha=alpha, tile_d=tile_d)
    out = jax.block_until_ready(out)
    ref = jax.block_until_ready(
        _reference(x, dw_weight, dw_bias, bn_gamma, bn_beta, ks, alpha))
    assert out.shape == (N, C, D, H, W)
    assert jnp.allclose(out, ref, atol=3e-4, rtol=3e-4), \
        float(jnp.max(jnp.abs(out - ref)))


if __name__ == "__main__":
    key = jax.random.PRNGKey(0)
    k1, k2, k3 = jax.random.split(key, 3)

    # Aligned shapes, multi-tile depth (exercises halo DMA + prefetch path).
    _run_case(k1, N=2, C=8, D=8, H=8, W=8, ks=3, alpha=2.0, tile_d=4)
    # Unaligned shapes (exercises channel/W/D padding + stats masking path).
    _run_case(k2, N=1, C=5, D=7, H=6, W=6, ks=3, alpha=2.0, tile_d=3)
    # Auto tile selection + pass-2 tile growth path.
    _run_case(k3, N=2, C=4, D=16, H=8, W=8, ks=3, alpha=2.0, tile_d=None)

    print("KERNEL_OK")
</pallas_src>

<mosaic_0001>
module attributes {stable_mosaic.version = 11 : i64} {
  func.func @_bn_gelu_kernel(%arg0: i32, %arg1: i32, %arg2: memref<1x8x8x8x128xf32, #tpu.memory_space<vmem>>, %arg3: memref<1x128xf32, #tpu.memory_space<vmem>>, %arg4: memref<1x128xf32, #tpu.memory_space<vmem>>, %arg5: memref<1x8x8x8x128xf32, #tpu.memory_space<vmem>>) attributes {dimension_semantics = [#tpu.dimension_semantics<parallel>, #tpu.dimension_semantics<parallel>], iteration_bounds = array<i64: 2, 1>, scalar_prefetch = 0 : i64, scratch_operands = 0 : i64, tpu.core_type = #tpu.core_type<tc>, window_params = [{transform_indices = @transform_0, window_bounds = array<i64: 1, 8, 8, 8, 128>}, {pipeline_mode = #tpu.pipeline_mode<synchronous>, transform_indices = @transform_1, window_bounds = array<i64: 1, 128>}, {pipeline_mode = #tpu.pipeline_mode<synchronous>, transform_indices = @transform_2, window_bounds = array<i64: 1, 128>}, {transform_indices = @transform_3, window_bounds = array<i64: 1, 8, 8, 8, 128>}]} {
    %c0 = arith.constant 0 : index
    %c0_0 = arith.constant 0 : index
    %c0_1 = arith.constant 0 : index
    %c0_2 = arith.constant 0 : index
    %c0_3 = arith.constant 0 : index
    %0 = vector.load %arg2[%c0, %c0_0, %c0_1, %c0_2, %c0_3] : memref<1x8x8x8x128xf32, #tpu.memory_space<vmem>>, vector<1x8x8x8x128xf32>
    %c0_4 = arith.constant 0 : index
    %c0_5 = arith.constant 0 : index
    %1 = vector.load %arg3[%c0_4, %c0_5] : memref<1x128xf32, #tpu.memory_space<vmem>>, vector<1x128xf32>
    %2 = vector.shape_cast %1 : vector<1x128xf32> to vector<128xf32>
    %3 = vector.shape_cast %2 : vector<128xf32> to vector<1x1x1x1x128xf32>
    %4 = vector.broadcast %3 : vector<1x1x1x1x128xf32> to vector<1x8x8x8x128xf32>
    %5 = arith.mulf %0, %4 : vector<1x8x8x8x128xf32>
    %c0_6 = arith.constant 0 : index
    %c0_7 = arith.constant 0 : index
    %6 = vector.load %arg4[%c0_6, %c0_7] : memref<1x128xf32, #tpu.memory_space<vmem>>, vector<1x128xf32>
    %7 = vector.shape_cast %6 : vector<1x128xf32> to vector<128xf32>
    %8 = vector.shape_cast %7 : vector<128xf32> to vector<1x1x1x1x128xf32>
    %9 = vector.broadcast %8 : vector<1x1x1x1x128xf32> to vector<1x8x8x8x128xf32>
    %10 = arith.addf %5, %9 : vector<1x8x8x8x128xf32>
    %cst = arith.constant 5.000000e-01 : f32
    %11 = vector.broadcast %cst : f32 to vector<1x8x8x8x128xf32>
    %12 = arith.mulf %11, %10 : vector<1x8x8x8x128xf32>
    %cst_8 = arith.constant 0.707106769 : f32
    %13 = vector.broadcast %cst_8 : f32 to vector<1x8x8x8x128xf32>
    %14 = arith.mulf %10, %13 : vector<1x8x8x8x128xf32>
    %15 = math.erf %14 : vector<1x8x8x8x128xf32>
    %cst_9 = arith.constant 1.000000e+00 : f32
    %16 = vector.broadcast %cst_9 : f32 to vector<1x8x8x8x128xf32>
    %17 = arith.addf %16, %15 : vector<1x8x8x8x128xf32>
    %18 = arith.mulf %12, %17 : vector<1x8x8x8x128xf32>
    %c0_10 = arith.constant 0 : index
    %c0_11 = arith.constant 0 : index
    %c0_12 = arith.constant 0 : index
    %c0_13 = arith.constant 0 : index
    %c0_14 = arith.constant 0 : index
    %19 = vector.load %arg5[%c0_10, %c0_11, %c0_12, %c0_13, %c0_14] : memref<1x8x8x8x128xf32, #tpu.memory_space<vmem>>, vector<1x8x8x8x128xf32>
    tpu.vector_store %arg5[%c0_10, %c0_11, %c0_12, %c0_13, %c0_14], %18 {strides = array<i32>} : memref<1x8x8x8x128xf32, #tpu.memory_space<vmem>>, vector<1x8x8x8x128xf32>,
    return
  }
  func.func @transform_0(%arg0: i32, %arg1: i32) -> (i32, i32, i32, i32, i32) {
    %c0_i32 = arith.constant 0 : i32
    %c0_i32_0 = arith.constant 0 : i32
    %c0_i32_1 = arith.constant 0 : i32
    %c0_i32_2 = arith.constant 0 : i32
    return %arg0, %arg1, %c0_i32, %c0_i32_0, %c0_i32_1 : i32, i32, i32, i32, i32
  }
  func.func @transform_1(%arg0: i32, %arg1: i32) -> (i32, i32) {
    %c0_i32 = arith.constant 0 : i32
    %c0_i32_0 = arith.constant 0 : i32
    %c0_i32_1 = arith.constant 0 : i32
    return %c0_i32, %c0_i32_0 : i32, i32
  }
  func.func @transform_2(%arg0: i32, %arg1: i32) -> (i32, i32) {
    %c0_i32 = arith.constant 0 : i32
    %c0_i32_0 = arith.constant 0 : i32
    %c0_i32_1 = arith.constant 0 : i32
    return %c0_i32, %c0_i32_0 : i32, i32
  }
  func.func @transform_3(%arg0: i32, %arg1: i32) -> (i32, i32, i32, i32, i32) {
    %c0_i32 = arith.constant 0 : i32
    %c0_i32_0 = arith.constant 0 : i32
    %c0_i32_1 = arith.constant 0 : i32
    %c0_i32_2 = arith.constant 0 : i32
    return %arg0, %arg1, %c0_i32, %c0_i32_0, %c0_i32_1 : i32, i32, i32, i32, i32
  }
}

module attributes {stable_mosaic.version = 11 : i64} {
  func.func @kernel(%arg0: i32, %arg1: i32, %arg2: memref<2x10x10x16x128xf32, #tpu.memory_space<any>>, %arg3: memref<27x128xf32, #tpu.memory_space<vmem>>, %arg4: memref<1x4x8x8x128xf32, #tpu.memory_space<vmem>>, %arg5: memref<1x1x8x128xf32, #tpu.memory_space<vmem>>, %arg6: memref<2x6x10x16x128xf32, #tpu.memory_space<vmem>>, %arg7: memref<2x!tpu.dma_semaphore, #tpu.memory_space<semaphore_mem>>) attributes {dimension_semantics = [#tpu.dimension_semantics<parallel>, #tpu.dimension_semantics<arbitrary>], iteration_bounds = array<i64: 2, 2>, scalar_prefetch = 0 : i64, scratch_operands = 2 : i64, tpu.core_type = #tpu.core_type<tc>, window_params = [{}, {pipeline_mode = #tpu.pipeline_mode<synchronous>, transform_indices = @transform_1, window_bounds = array<i64: 27, 128>}, {transform_indices = @transform_2, window_bounds = array<i64: 1, 4, 8, 8, 128>}, {transform_indices = @transform_3, window_bounds = array<i64: 1, 1, 8, 128>}]} {
    %c2_i32 = arith.constant 2 : i32
    %c0_i32 = arith.constant 0 : i32
    %0 = arith.cmpi eq, %c2_i32, %c0_i32 : i32
    %c1_i32 = arith.constant 1 : i32
    %1 = arith.select %0, %c1_i32, %c2_i32 : i32
    %2 = arith.remsi %arg1, %1 : i32
    %c0_i32_0 = arith.constant 0 : i32
    %3 = arith.cmpi ne, %2, %c0_i32_0 : i32
    %c0_i32_1 = arith.constant 0 : i32
    %4 = arith.cmpi slt, %2, %c0_i32_1 : i32
    %c0_i32_2 = arith.constant 0 : i32
    %5 = arith.cmpi slt, %1, %c0_i32_2 : i32
    %6 = arith.xori %4, %5 : i1
    %7 = arith.andi %6, %3 : i1
    %8 = arith.addi %2, %1 : i32
    %9 = arith.select %7, %8, %2 : i32
    %c0_i32_3 = arith.constant 0 : i32
    %10 = arith.cmpi eq, %arg1, %c0_i32_3 : i32
    %11 = arith.extui %10 : i1 to i32
    %c0_i32_4 = arith.constant 0 : i32
    %12 = arith.cmpi ne, %11, %c0_i32_4 : i32
    scf.if %12 {
      %c0_i32_50 = arith.constant 0 : i32
      %234 = tpu.assume_multiple %c0_i32_50, 4 : i32
      %c0_i32_51 = arith.constant 0 : i32
      %c0_i32_52 = arith.constant 0 : i32
      %c0_i32_53 = arith.constant 0 : i32
      %235 = tpu.memref_slice %arg2[%arg0, %234, %c0_i32_51, %c0_i32_52, %c0_i32_53] : memref<2x10x10x16x128xf32, #tpu.memory_space<any>> -> memref<1x6x10x16x128xf32, #tpu.memory_space<any>>
      %236 = tpu.memref_squeeze %235 : memref<1x6x10x16x128xf32, #tpu.memory_space<any>> -> memref<6x10x16x128xf32, #tpu.memory_space<any>>
      %c0_i32_54 = arith.constant 0 : i32
      %c0_i32_55 = arith.constant 0 : i32
      %c0_i32_56 = arith.constant 0 : i32
      %c0_i32_57 = arith.constant 0 : i32
      %237 = tpu.memref_slice %arg6[%9, %c0_i32_54, %c0_i32_55, %c0_i32_56, %c0_i32_57] : memref<2x6x10x16x128xf32, #tpu.memory_space<vmem>> -> memref<1x6x10x16x128xf32, #tpu.memory_space<vmem>>
      %238 = tpu.memref_squeeze %237 : memref<1x6x10x16x128xf32, #tpu.memory_space<vmem>> -> memref<6x10x16x128xf32, #tpu.memory_space<vmem>>
      %239 = tpu.memref_slice %arg7[%9] : memref<2x!tpu.dma_semaphore, #tpu.memory_space<semaphore_mem>> -> memref<1x!tpu.dma_semaphore, #tpu.memory_space<semaphore_mem>>
      %240 = tpu.memref_squeeze %239 : memref<1x!tpu.dma_semaphore, #tpu.memory_space<semaphore_mem>> -> memref<!tpu.dma_semaphore, #tpu.memory_space<semaphore_mem>>
      tpu.enqueue_dma source(%236 : memref<6x10x16x128xf32, #tpu.memory_space<any>>) target(%238 : memref<6x10x16x128xf32, #tpu.memory_space<vmem>>) target_semaphore(%240 : memref<!tpu.dma_semaphore, #tpu.memory_space<semaphore_mem>>)
    } else {
    }
    %c0_i32_5 = arith.constant 0 : i32
    %c0_i32_6 = arith.constant 0 : i32
    %c0_i32_7 = arith.constant 0 : i32
    %c0_i32_8 = arith.constant 0 : i32
    %13 = tpu.memref_slice %arg2[%arg0, %c0_i32_5, %c0_i32_6, %c0_i32_7, %c0_i32_8] : memref<2x10x10x16x128xf32, #tpu.memory_space<any>> -> memref<1x6x10x16x128xf32, #tpu.memory_space<any>>
    %14 = tpu.memref_squeeze %13 : memref<1x6x10x16x128xf32, #tpu.memory_space<any>> -> memref<6x10x16x128xf32, #tpu.memory_space<any>>
    %c0_i32_9 = arith.constant 0 : i32
    %c0_i32_10 = arith.constant 0 : i32
    %c0_i32_11 = arith.constant 0 : i32
    %c0_i32_12 = arith.constant 0 : i32
    %15 = tpu.memref_slice %arg6[%9, %c0_i32_9, %c0_i32_10, %c0_i32_11, %c0_i32_12] : memref<2x6x10x16x128xf32, #tpu.memory_space<vmem>> -> memref<1x6x10x16x128xf32, #tpu.memory_space<vmem>>
    %16 = tpu.memref_squeeze %15 : memref<1x6x10x16x128xf32, #tpu.memory_space<vmem>> -> memref<6x10x16x128xf32, #tpu.memory_space<vmem>>
    %17 = tpu.memref_slice %arg7[%9] : memref<2x!tpu.dma_semaphore, #tpu.memory_space<semaphore_mem>> -> memref<1x!tpu.dma_semaphore, #tpu.memory_space<semaphore_mem>>
    %18 = tpu.memref_squeeze %17 : memref<1x!tpu.dma_semaphore, #tpu.memory_space<semaphore_mem>> -> memref<!tpu.dma_semaphore, #tpu.memory_space<semaphore_mem>>
    tpu.wait_dma2 semaphore(%18 : memref<!tpu.dma_semaphore, #tpu.memory_space<semaphore_mem>>) src(%14 : memref<6x10x16x128xf32, #tpu.memory_space<any>>) dst(%16 : memref<6x10x16x128xf32, #tpu.memory_space<vmem>>)
    %c1_i32_13 = arith.constant 1 : i32
    %19 = arith.addi %arg1, %c1_i32_13 : i32
    %c2_i32_14 = arith.constant 2 : i32
    %20 = arith.cmpi slt, %19, %c2_i32_14 : i32
    %21 = arith.extui %20 : i1 to i32
    %c0_i32_15 = arith.constant 0 : i32
    %22 = arith.cmpi ne, %21, %c0_i32_15 : i32
    scf.if %22 {
      %c1_i32_50 = arith.constant 1 : i32
      %234 = arith.addi %arg1, %c1_i32_50 : i32
      %c1_i32_51 = arith.constant 1 : i32
      %235 = arith.subi %c1_i32_51, %9 : i32
      %c4_i32 = arith.constant 4 : i32
      %236 = arith.muli %234, %c4_i32 : i32
      %237 = tpu.assume_multiple %236, 4 : i32
      %c0_i32_52 = arith.constant 0 : i32
      %c0_i32_53 = arith.constant 0 : i32
      %c0_i32_54 = arith.constant 0 : i32
      %238 = tpu.memref_slice %arg2[%arg0, %237, %c0_i32_52, %c0_i32_53, %c0_i32_54] : memref<2x10x10x16x128xf32, #tpu.memory_space<any>> -> memref<1x6x10x16x128xf32, #tpu.memory_space<any>>
      %239 = tpu.memref_squeeze %238 : memref<1x6x10x16x128xf32, #tpu.memory_space<any>> -> memref<6x10x16x128xf32, #tpu.memory_space<any>>
      %c0_i32_55 = arith.constant 0 : i32
      %c0_i32_56 = arith.constant 0 : i32
      %c0_i32_57 = arith.constant 0 : i32
      %c0_i32_58 = arith.constant 0 : i32
      %240 = tpu.memref_slice %arg6[%235, %c0_i32_55, %c0_i32_56, %c0_i32_57, %c0_i32_58] : memref<2x6x10x16x128xf32, #tpu.memory_space<vmem>> -> memref<1x6x10x16x128xf32, #tpu.memory_space<vmem>>
      %241 = tpu.memref_squeeze %240 : memref<1x6x10x16x128xf32, #tpu.memory_space<vmem>> -> memref<6x10x16x128xf32, #tpu.memory_space<vmem>>
      %242 = tpu.memref_slice %arg7[%235] : memref<2x!tpu.dma_semaphore, #tpu.memory_space<semaphore_mem>> -> memref<1x!tpu.dma_semaphore, #tpu.memory_space<semaphore_mem>>
      %243 = tpu.memref_squeeze %242 : memref<1x!tpu.dma_semaphore, #tpu.memory_space<semaphore_mem>> -> memref<!tpu.dma_semaphore, #tpu.memory_space<semaphore_mem>>
      tpu.enqueue_dma source(%239 : memref<6x10x16x128xf32, #tpu.memory_space<any>>) target(%241 : memref<6x10x16x128xf32, #tpu.memory_space<vmem>>) target_semaphore(%243 : memref<!tpu.dma_semaphore, #tpu.memory_space<semaphore_mem>>)
    } else {
    }
    %c0 = arith.constant 0 : index
    %c0_16 = arith.constant 0 : index
    %23 = vector.load %arg3[%c0, %c0_16] : memref<27x128xf32, #tpu.memory_space<vmem>>, vector<27x128xf32>
    %c0_i32_17 = arith.constant 0 : i32
    %c0_i32_18 = arith.constant 0 : i32
    %c0_i32_19 = arith.constant 0 : i32
    %c0_i32_20 = arith.constant 0 : i32
    %24 = tpu.memref_slice %arg6[%9, %c0_i32_17, %c0_i32_18, %c0_i32_19, %c0_i32_20] : memref<2x6x10x16x128xf32, #tpu.memory_space<vmem>> -> memref<1x6x10x16x128xf32, #tpu.memory_space<vmem>>
    %25 = tpu.memref_squeeze %24 : memref<1x6x10x16x128xf32, #tpu.memory_space<vmem>> -> memref<6x10x16x128xf32, #tpu.memory_space<vmem>>
    %c0_21 = arith.constant 0 : index
    %c0_22 = arith.constant 0 : index
    %c0_23 = arith.constant 0 : index
    %c0_24 = arith.constant 0 : index
    %26 = vector.load %25[%c0_21, %c0_22, %c0_23, %c0_24] : memref<6x10x16x128xf32, #tpu.memory_space<vmem>>, vector<6x10x8x128xf32>
    %27 = vector.extract_strided_slice %26 {offsets = [0, 0, 0, 0], sizes = [4, 8, 8, 128], strides = [1, 1, 1, 1]} : vector<6x10x8x128xf32> to vector<4x8x8x128xf32>
    %28 = vector.extract_strided_slice %23 {offsets = [0, 0], sizes = [1, 128], strides = [1, 1]} : vector<27x128xf32> to vector<1x128xf32>
    %29 = vector.shape_cast %28 : vector<1x128xf32> to vector<128xf32>
    %30 = vector.shape_cast %29 : vector<128xf32> to vector<1x1x1x128xf32>
    %31 = vector.broadcast %30 : vector<1x1x1x128xf32> to vector<4x8x8x128xf32>
    %32 = arith.mulf %27, %31 : vector<4x8x8x128xf32>
    %33 = vector.extract_strided_slice %26 {offsets = [0, 1, 0, 0], sizes = [4, 8, 8, 128], strides = [1, 1, 1, 1]} : vector<6x10x8x128xf32> to vector<4x8x8x128xf32>
    %34 = vector.extract_strided_slice %23 {offsets = [3, 0], sizes = [1, 128], strides = [1, 1]} : vector<27x128xf32> to vector<1x128xf32>
    %35 = vector.shape_cast %34 : vector<1x128xf32> to vector<128xf32>
    %36 = vector.shape_cast %35 : vector<128xf32> to vector<1x1x1x128xf32>
    %37 = vector.broadcast %36 : vector<1x1x1x128xf32> to vector<4x8x8x128xf32>
    %38 = arith.mulf %33, %37 : vector<4x8x8x128xf32>
    %39 = arith.addf %32, %38 : vector<4x8x8x128xf32>
    %40 = vector.extract_strided_slice %26 {offsets = [0, 2, 0, 0], sizes = [4, 8, 8, 128], strides = [1, 1, 1, 1]} : vector<6x10x8x128xf32> to vector<4x8x8x128xf32>
    %41 = vector.extract_strided_slice %23 {offsets = [6, 0], sizes = [1, 128], strides = [1, 1]} : vector<27x128xf32> to vector<1x128xf32>
    %42 = vector.shape_cast %41 : vector<1x128xf32> to vector<128xf32>
    %43 = vector.shape_cast %42 : vector<128xf32> to vector<1x1x1x128xf32>
    %44 = vector.broadcast %43 : vector<1x1x1x128xf32> to vector<4x8x8x128xf32>
    %45 = arith.mulf %40, %44 : vector<4x8x8x128xf32>
    %46 = arith.addf %39, %45 : vector<4x8x8x128xf32>
    %47 = vector.extract_strided_slice %26 {offsets = [1, 0, 0, 0], sizes = [4, 8, 8, 128], strides = [1, 1, 1, 1]} : vector<6x10x8x128xf32> to vector<4x8x8x128xf32>
    %48 = vector.extract_strided_slice %23 {offsets = [9, 0], sizes = [1, 128], strides = [1, 1]} : vector<27x128xf32> to vector<1x128xf32>
    %49 = vector.shape_cast %48 : vector<1x128xf32> to vector<128xf32>
    %50 = vector.shape_cast %49 : vector<128xf32> to vector<1x1x1x128xf32>
    %51 = vector.broadcast %50 : vector<1x1x1x128xf32> to vector<4x8x8x128xf32>
    %52 = arith.mulf %47, %51 : vector<4x8x8x128xf32>
    %53 = arith.addf %46, %52 : vector<4x8x8x128xf32>
    %54 = vector.extract_strided_slice %26 {offsets = [1, 1, 0, 0], sizes = [4, 8, 8, 128], strides = [1, 1, 1, 1]} : vector<6x10x8x128xf32> to vector<4x8x8x128xf32>
    %55 = vector.extract_strided_slice %23 {offsets = [12, 0], sizes = [1, 128], strides = [1, 1]} : vector<27x128xf32> to vector<1x128xf32>
    %56 = vector.shape_cast %55 : vector<1x128xf32> to vector<128xf32>
    %57 = vector.shape_cast %56 : vector<128xf32> to vector<1x1x1x128xf32>
    %58 = vector.broadcast %57 : vector<1x1x1x128xf32> to vector<4x8x8x128xf32>
    %59 = arith.mulf %54, %58 : vector<4x8x8x128xf32>
    %60 = arith.addf %53, %59 : vector<4x8x8x128xf32>
    %61 = vector.extract_strided_slice %26 {offsets = [1, 2, 0, 0], sizes = [4, 8, 8, 128], strides = [1, 1, 1, 1]} : vector<6x10x8x128xf32> to vector<4x8x8x128xf32>
    %62 = vector.extract_strided_slice %23 {offsets = [15, 0], sizes = [1, 128], strides = [1, 1]} : vector<27x128xf32> to vector<1x128xf32>
    %63 = vector.shape_cast %62 : vector<1x128xf32> to vector<128xf32>
    %64 = vector.shape_cast %63 : vector<128xf32> to vector<1x1x1x128xf32>
    %65 = vector.broadcast %64 : vector<1x1x1x128xf32> to vector<4x8x8x128xf32>
    %66 = arith.mulf %61, %65 : vector<4x8x8x128xf32>
    %67 = arith.addf %60, %66 : vector<4x8x8x128xf32>
    %68 = vector.extract_strided_slice %26 {offsets = [2, 0, 0, 0], sizes = [4, 8, 8, 128], strides = [1, 1, 1, 1]} : vector<6x10x8x128xf32> to vector<4x8x8x128xf32>
    %69 = vector.extract_strided_slice %23 {offsets = [18, 0], sizes = [1, 128], strides = [1, 1]} : vector<27x128xf32> to vector<1x128xf32>
    %70 = vector.shape_cast %69 : vector<1x128xf32> to vector<128xf32>
    %71 = vector.shape_cast %70 : vector<128xf32> to vector<1x1x1x128xf32>
    %72 = vector.broadcast %71 : vector<1x1x1x128xf32> to vector<4x8x8x128xf32>
    %73 = arith.mulf %68, %72 : vector<4x8x8x128xf32>
    %74 = arith.addf %67, %73 : vector<4x8x8x128xf32>
    %75 = vector.extract_strided_slice %26 {offsets = [2, 1, 0, 0], sizes = [4, 8, 8, 128], strides = [1, 1, 1, 1]} : vector<6x10x8x128xf32> to vector<4x8x8x128xf32>
    %76 = vector.extract_strided_slice %23 {offsets = [21, 0], sizes = [1, 128], strides = [1, 1]} : vector<27x128xf32> to vector<1x128xf32>
    %77 = vector.shape_cast %76 : vector<1x128xf32> to vector<128xf32>
    %78 = vector.shape_cast %77 : vector<128xf32> to vector<1x1x1x128xf32>
    %79 = vector.broadcast %78 : vector<1x1x1x128xf32> to vector<4x8x8x128xf32>
    %80 = arith.mulf %75, %79 : vector<4x8x8x128xf32>
    %81 = arith.addf %74, %80 : vector<4x8x8x128xf32>
    %82 = vector.extract_strided_slice %26 {offsets = [2, 2, 0, 0], sizes = [4, 8, 8, 128], strides = [1, 1, 1, 1]} : vector<6x10x8x128xf32> to vector<4x8x8x128xf32>
    %83 = vector.extract_strided_slice %23 {offsets = [24, 0], sizes = [1, 128], strides = [1, 1]} : vector<27x128xf32> to vector<1x128xf32>
    %84 = vector.shape_cast %83 : vector<1x128xf32> to vector<128xf32>
    %85 = vector.shape_cast %84 : vector<128xf32> to vector<1x1x1x128xf32>
    %86 = vector.broadcast %85 : vector<1x1x1x128xf32> to vector<4x8x8x128xf32>
    %87 = arith.mulf %82, %86 : vector<4x8x8x128xf32>
    %88 = arith.addf %81, %87 : vector<4x8x8x128xf32>
    %c0_i32_25 = arith.constant 0 : i32
    %c0_i32_26 = arith.constant 0 : i32
    %c0_i32_27 = arith.constant 0 : i32
    %c0_i32_28 = arith.constant 0 : i32
    %89 = tpu.memref_slice %arg6[%9, %c0_i32_25, %c0_i32_26, %c0_i32_27, %c0_i32_28] : memref<2x6x10x16x128xf32, #tpu.memory_space<vmem>> -> memref<1x6x10x16x128xf32, #tpu.memory_space<vmem>>
    %90 = tpu.memref_squeeze %89 : memref<1x6x10x16x128xf32, #tpu.memory_space<vmem>> -> memref<6x10x16x128xf32, #tpu.memory_space<vmem>>
    %c0_29 = arith.constant 0 : index
    %c0_30 = arith.constant 0 : index
    %c1 = arith.constant 1 : index
    %c0_31 = arith.constant 0 : index
    %91 = vector.load %90[%c0_29, %c0_30, %c1, %c0_31] : memref<6x10x16x128xf32, #tpu.memory_space<vmem>>, vector<6x10x8x128xf32>
    %92 = vector.extract_strided_slice %91 {offsets = [0, 0, 0, 0], sizes = [4, 8, 8, 128], strides = [1, 1, 1, 1]} : vector<6x10x8x128xf32> to vector<4x8x8x128xf32>
    %93 = vector.extract_strided_slice %23 {offsets = [1, 0], sizes = [1, 128], strides = [1, 1]} : vector<27x128xf32> to vector<1x128xf32>
    %94 = vector.shape_cast %93 : vector<1x128xf32> to vector<128xf32>
    %95 = vector.shape_cast %94 : vector<128xf32> to vector<1x1x1x128xf32>
    %96 = vector.broadcast %95 : vector<1x1x1x128xf32> to vector<4x8x8x128xf32>
    %97 = arith.mulf %92, %96 : vector<4x8x8x128xf32>
    %98 = vector.extract_strided_slice %91 {offsets = [0, 1, 0, 0], sizes = [4, 8, 8, 128], strides = [1, 1, 1, 1]} : vector<6x10x8x128xf32> to vector<4x8x8x128xf32>
    %99 = vector.extract_strided_slice %23 {offsets = [4, 0], sizes = [1, 128], strides = [1, 1]} : vector<27x128xf32> to vector<1x128xf32>
    %100 = vector.shape_cast %99 : vector<1x128xf32> to vector<128xf32>
    %101 = vector.shape_cast %100 : vector<128xf32> to vector<1x1x1x128xf32>
    %102 = vector.broadcast %101 : vector<1x1x1x128xf32> to vector<4x8x8x128xf32>
    %103 = arith.mulf %98, %102 : vector<4x8x8x128xf32>
    %104 = arith.addf %97, %103 : vector<4x8x8x128xf32>
    %105 = vector.extract_strided_slice %91 {offsets = [0, 2, 0, 0], sizes = [4, 8, 8, 128], strides = [1, 1, 1, 1]} : vector<6x10x8x128xf32> to vector<4x8x8x128xf32>
    %106 = vector.extract_strided_slice %23 {offsets = [7, 0], sizes = [1, 128], strides = [1, 1]} : vector<27x128xf32> to vector<1x128xf32>
    %107 = vector.shape_cast %106 : vector<1x128xf32> to vector<128xf32>
    %108 = vector.shape_cast %107 : vector<128xf32> to vector<1x1x1x128xf32>
    %109 = vector.broadcast %108 : vector<1x1x1x128xf32> to vector<4x8x8x128xf32>
    %110 = arith.mulf %105, %109 : vector<4x8x8x128xf32>
    %111 = arith.addf %104, %110 : vector<4x8x8x128xf32>
    %112 = vector.extract_strided_slice %91 {offsets = [1, 0, 0, 0], sizes = [4, 8, 8, 128], strides = [1, 1, 1, 1]} : vector<6x10x8x128xf32> to vector<4x8x8x128xf32>
    %113 = vector.extract_strided_slice %23 {offsets = [10, 0], sizes = [1, 128], strides = [1, 1]} : vector<27x128xf32> to vector<1x128xf32>
    %114 = vector.shape_cast %113 : vector<1x128xf32> to vector<128xf32>
    %115 = vector.shape_cast %114 : vector<128xf32> to vector<1x1x1x128xf32>
    %116 = vector.broadcast %115 : vector<1x1x1x128xf32> to vector<4x8x8x128xf32>
    %117 = arith.mulf %112, %116 : vector<4x8x8x128xf32>
    %118 = arith.addf %111, %117 : vector<4x8x8x128xf32>
    %119 = vector.extract_strided_slice %91 {offsets = [1, 1, 0, 0], sizes = [4, 8, 8, 128], strides = [1, 1, 1, 1]} : vector<6x10x8x128xf32> to vector<4x8x8x128xf32>
    %120 = vector.extract_strided_slice %23 {offsets = [13, 0], sizes = [1, 128], strides = [1, 1]} : vector<27x128xf32> to vector<1x128xf32>
    %121 = vector.shape_cast %120 : vector<1x128xf32> to vector<128xf32>
    %122 = vector.shape_cast %121 : vector<128xf32> to vector<1x1x1x128xf32>
    %123 = vector.broadcast %122 : vector<1x1x1x128xf32> to vector<4x8x8x128xf32>
    %124 = arith.mulf %119, %123 : vector<4x8x8x128xf32>
    %125 = arith.addf %118, %124 : vector<4x8x8x128xf32>
    %126 = vector.extract_strided_slice %91 {offsets = [1, 2, 0, 0], sizes = [4, 8, 8, 128], strides = [1, 1, 1, 1]} : vector<6x10x8x128xf32> to vector<4x8x8x128xf32>
    %127 = vector.extract_strided_slice %23 {offsets = [16, 0], sizes = [1, 128], strides = [1, 1]} : vector<27x128xf32> to vector<1x128xf32>
    %128 = vector.shape_cast %127 : vector<1x128xf32> to vector<128xf32>
    %129 = vector.shape_cast %128 : vector<128xf32> to vector<1x1x1x128xf32>
    %130 = vector.broadcast %129 : vector<1x1x1x128xf32> to vector<4x8x8x128xf32>
    %131 = arith.mulf %126, %130 : vector<4x8x8x128xf32>
    %132 = arith.addf %125, %131 : vector<4x8x8x128xf32>
    %133 = vector.extract_strided_slice %91 {offsets = [2, 0, 0, 0], sizes = [4, 8, 8, 128], strides = [1, 1, 1, 1]} : vector<6x10x8x128xf32> to vector<4x8x8x128xf32>
    %134 = vector.extract_strided_slice %23 {offsets = [19, 0], sizes = [1, 128], strides = [1, 1]} : vector<27x128xf32> to vector<1x128xf32>
    %135 = vector.shape_cast %134 : vector<1x128xf32> to vector<128xf32>
    %136 = vector.shape_cast %135 : vector<128xf32> to vector<1x1x1x128xf32>
    %137 = vector.broadcast %136 : vector<1x1x1x128xf32> to vector<4x8x8x128xf32>
    %138 = arith.mulf %133, %137 : vector<4x8x8x128xf32>
    %139 = arith.addf %132, %138 : vector<4x8x8x128xf32>
    %140 = vector.extract_strided_slice %91 {offsets = [2, 1, 0, 0], sizes = [4, 8, 8, 128], strides = [1, 1, 1, 1]} : vector<6x10x8x128xf32> to vector<4x8x8x128xf32>
    %141 = vector.extract_strided_slice %23 {offsets = [22, 0], sizes = [1, 128], strides = [1, 1]} : vector<27x128xf32> to vector<1x128xf32>
    %142 = vector.shape_cast %141 : vector<1x128xf32> to vector<128xf32>
    %143 = vector.shape_cast %142 : vector<128xf32> to vector<1x1x1x128xf32>
    %144 = vector.broadcast %143 : vector<1x1x1x128xf32> to vector<4x8x8x128xf32>
    %145 = arith.mulf %140, %144 : vector<4x8x8x128xf32>
    %146 = arith.addf %139, %145 : vector<4x8x8x128xf32>
    %147 = vector.extract_strided_slice %91 {offsets = [2, 2, 0, 0], sizes = [4, 8, 8, 128], strides = [1, 1, 1, 1]} : vector<6x10x8x128xf32> to vector<4x8x8x128xf32>
    %148 = vector.extract_strided_slice %23 {offsets = [25, 0], sizes = [1, 128], strides = [1, 1]} : vector<27x128xf32> to vector<1x128xf32>
    %149 = vector.shape_cast %148 : vector<1x128xf32> to vector<128xf32>
    %150 = vector.shape_cast %149 : vector<128xf32> to vector<1x1x1x128xf32>
    %151 = vector.broadcast %150 : vector<1x1x1x128xf32> to vector<4x8x8x128xf32>
    %152 = arith.mulf %147, %151 : vector<4x8x8x128xf32>
    %153 = arith.addf %146, %152 : vector<4x8x8x128xf32>
    %c0_i32_32 = arith.constant 0 : i32
    %c0_i32_33 = arith.constant 0 : i32
    %c0_i32_34 = arith.constant 0 : i32
    %c0_i32_35 = arith.constant 0 : i32
    %154 = tpu.memref_slice %arg6[%9, %c0_i32_32, %c0_i32_33, %c0_i32_34, %c0_i32_35] : memref<2x6x10x16x128xf32, #tpu.memory_space<vmem>> -> memref<1x6x10x16x128xf32, #tpu.memory_space<vmem>>
    %155 = tpu.memref_squeeze %154 : memref<1x6x10x16x128xf32, #tpu.memory_space<vmem>> -> memref<6x10x16x128xf32, #tpu.memory_space<vmem>>
    %c0_36 = arith.constant 0 : index
    %c0_37 = arith.constant 0 : index
    %c2 = arith.constant 2 : index
    %c0_38 = arith.constant 0 : index
    %156 = vector.load %155[%c0_36, %c0_37, %c2, %c0_38] : memref<6x10x16x128xf32, #tpu.memory_space<vmem>>, vector<6x10x8x128xf32>
    %157 = vector.extract_strided_slice %156 {offsets = [0, 0, 0, 0], sizes = [4, 8, 8, 128], strides = [1, 1, 1, 1]} : vector<6x10x8x128xf32> to vector<4x8x8x128xf32>
    %158 = vector.extract_strided_slice %23 {offsets = [2, 0], sizes = [1, 128], strides = [1, 1]} : vector<27x128xf32> to vector<1x128xf32>
    %159 = vector.shape_cast %158 : vector<1x128xf32> to vector<128xf32>
    %160 = vector.shape_cast %159 : vector<128xf32> to vector<1x1x1x128xf32>
    %161 = vector.broadcast %160 : vector<1x1x1x128xf32> to vector<4x8x8x128xf32>
    %162 = arith.mulf %157, %161 : vector<4x8x8x128xf32>
    %163 = vector.extract_strided_slice %156 {offsets = [0, 1, 0, 0], sizes = [4, 8, 8, 128], strides = [1, 1, 1, 1]} : vector<6x10x8x128xf32> to vector<4x8x8x128xf32>
    %164 = vector.extract_strided_slice %23 {offsets = [5, 0], sizes = [1, 128], strides = [1, 1]} : vector<27x128xf32> to vector<1x128xf32>
    %165 = vector.shape_cast %164 : vector<1x128xf32> to vector<128xf32>
    %166 = vector.shape_cast %165 : vector<128xf32> to vector<1x1x1x128xf32>
    %167 = vector.broadcast %166 : vector<1x1x1x128xf32> to vector<4x8x8x128xf32>
    %168 = arith.mulf %163, %167 : vector<4x8x8x128xf32>
    %169 = arith.addf %162, %168 : vector<4x8x8x128xf32>
    %170 = vector.extract_strided_slice %156 {offsets = [0, 2, 0, 0], sizes = [4, 8, 8, 128], strides = [1, 1, 1, 1]} : vector<6x10x8x128xf32> to vector<4x8x8x128xf32>
    %171 = vector.extract_strided_slice %23 {offsets = [8, 0], sizes = [1, 128], strides = [1, 1]} : vector<27x128xf32> to vector<1x128xf32>
    %172 = vector.shape_cast %171 : vector<1x128xf32> to vector<128xf32>
    %173 = vector.shape_cast %172 : vector<128xf32> to vector<1x1x1x128xf32>
    %174 = vector.broadcast %173 : vector<1x1x1x128xf32> to vector<4x8x8x128xf32>
    %175 = arith.mulf %170, %174 : vector<4x8x8x128xf32>
    %176 = arith.addf %169, %175 : vector<4x8x8x128xf32>
    %177 = vector.extract_strided_slice %156 {offsets = [1, 0, 0, 0], sizes = [4, 8, 8, 128], strides = [1, 1, 1, 1]} : vector<6x10x8x128xf32> to vector<4x8x8x128xf32>
    %178 = vector.extract_strided_slice %23 {offsets = [11, 0], sizes = [1, 128], strides = [1, 1]} : vector<27x128xf32> to vector<1x128xf32>
    %179 = vector.shape_cast %178 : vector<1x128xf32> to vector<128xf32>
    %180 = vector.shape_cast %179 : vector<128xf32> to vector<1x1x1x128xf32>
    %181 = vector.broadcast %180 : vector<1x1x1x128xf32> to vector<4x8x8x128xf32>
    %182 = arith.mulf %177, %181 : vector<4x8x8x128xf32>
    %183 = arith.addf %176, %182 : vector<4x8x8x128xf32>
    %184 = vector.extract_strided_slice %156 {offsets = [1, 1, 0, 0], sizes = [4, 8, 8, 128], strides = [1, 1, 1, 1]} : vector<6x10x8x128xf32> to vector<4x8x8x128xf32>
    %185 = vector.extract_strided_slice %23 {offsets = [14, 0], sizes = [1, 128], strides = [1, 1]} : vector<27x128xf32> to vector<1x128xf32>
    %186 = vector.shape_cast %185 : vector<1x128xf32> to vector<128xf32>
    %187 = vector.shape_cast %186 : vector<128xf32> to vector<1x1x1x128xf32>
    %188 = vector.broadcast %187 : vector<1x1x1x128xf32> to vector<4x8x8x128xf32>
    %189 = arith.mulf %184, %188 : vector<4x8x8x128xf32>
    %190 = arith.addf %183, %189 : vector<4x8x8x128xf32>
    %191 = vector.extract_strided_slice %156 {offsets = [1, 2, 0, 0], sizes = [4, 8, 8, 128], strides = [1, 1, 1, 1]} : vector<6x10x8x128xf32> to vector<4x8x8x128xf32>
    %192 = vector.extract_strided_slice %23 {offsets = [17, 0], sizes = [1, 128], strides = [1, 1]} : vector<27x128xf32> to vector<1x128xf32>
    %193 = vector.shape_cast %192 : vector<1x128xf32> to vector<128xf32>
    %194 = vector.shape_cast %193 : vector<128xf32> to vector<1x1x1x128xf32>
    %195 = vector.broadcast %194 : vector<1x1x1x128xf32> to vector<4x8x8x128xf32>
    %196 = arith.mulf %191, %195 : vector<4x8x8x128xf32>
    %197 = arith.addf %190, %196 : vector<4x8x8x128xf32>
    %198 = vector.extract_strided_slice %156 {offsets = [2, 0, 0, 0], sizes = [4, 8, 8, 128], strides = [1, 1, 1, 1]} : vector<6x10x8x128xf32> to vector<4x8x8x128xf32>
    %199 = vector.extract_strided_slice %23 {offsets = [20, 0], sizes = [1, 128], strides = [1, 1]} : vector<27x128xf32> to vector<1x128xf32>
    %200 = vector.shape_cast %199 : vector<1x128xf32> to vector<128xf32>
    %201 = vector.shape_cast %200 : vector<128xf32> to vector<1x1x1x128xf32>
    %202 = vector.broadcast %201 : vector<1x1x1x128xf32> to vector<4x8x8x128xf32>
    %203 = arith.mulf %198, %202 : vector<4x8x8x128xf32>
    %204 = arith.addf %197, %203 : vector<4x8x8x128xf32>
    %205 = vector.extract_strided_slice %156 {offsets = [2, 1, 0, 0], sizes = [4, 8, 8, 128], strides = [1, 1, 1, 1]} : vector<6x10x8x128xf32> to vector<4x8x8x128xf32>
    %206 = vector.extract_strided_slice %23 {offsets = [23, 0], sizes = [1, 128], strides = [1, 1]} : vector<27x128xf32> to vector<1x128xf32>
    %207 = vector.shape_cast %206 : vector<1x128xf32> to vector<128xf32>
    %208 = vector.shape_cast %207 : vector<128xf32> to vector<1x1x1x128xf32>
    %209 = vector.broadcast %208 : vector<1x1x1x128xf32> to vector<4x8x8x128xf32>
    %210 = arith.mulf %205, %209 : vector<4x8x8x128xf32>
    %211 = arith.addf %204, %210 : vector<4x8x8x128xf32>
    %212 = vector.extract_strided_slice %156 {offsets = [2, 2, 0, 0], sizes = [4, 8, 8, 128], strides = [1, 1, 1, 1]} : vector<6x10x8x128xf32> to vector<4x8x8x128xf32>
    %213 = vector.extract_strided_slice %23 {offsets = [26, 0], sizes = [1, 128], strides = [1, 1]} : vector<27x128xf32> to vector<1x128xf32>
    %214 = vector.shape_cast %213 : vector<1x128xf32> to vector<128xf32>
    %215 = vector.shape_cast %214 : vector<128xf32> to vector<1x1x1x128xf32>
    %216 = vector.broadcast %215 : vector<1x1x1x128xf32> to vector<4x8x8x128xf32>
    %217 = arith.mulf %212, %216 : vector<4x8x8x128xf32>
    %218 = arith.addf %211, %217 : vector<4x8x8x128xf32>
    %219 = arith.addf %88, %153 : vector<4x8x8x128xf32>
    %220 = arith.addf %219, %218 : vector<4x8x8x128xf32>
    %c0_39 = arith.constant 0 : index
    %c0_40 = arith.constant 0 : index
    %c0_41 = arith.constant 0 : index
    %c0_42 = arith.constant 0 : index
    %c0_43 = arith.constant 0 : index
    %221 = vector.load %arg4[%c0_39, %c0_40, %c0_41, %c0_42, %c0_43] : memref<1x4x8x8x128xf32, #tpu.memory_space<vmem>>, vector<1x4x8x8x128xf32>
    %222 = vector.shape_cast %221 : vector<1x4x8x8x128xf32> to vector<4x8x8x128xf32>
    %223 = vector.shape_cast %220 : vector<4x8x8x128xf32> to vector<1x4x8x8x128xf32>
    tpu.vector_store %arg4[%c0_39, %c0_40, %c0_41, %c0_42, %c0_43], %223 {strides = array<i32>} : memref<1x4x8x8x128xf32, #tpu.memory_space<vmem>>, vector<1x4x8x8x128xf32>,
    %cst = arith.constant dense<0.000000e+00> : vector<128xf32>
    %224 = vector.multi_reduction <add>, %220, %cst [0, 1, 2] : vector<4x8x8x128xf32> to vector<128xf32>
    %225 = arith.mulf %220, %220 : vector<4x8x8x128xf32>
    %cst_44 = arith.constant dense<0.000000e+00> : vector<128xf32>
    %226 = vector.multi_reduction <add>, %225, %cst_44 [0, 1, 2] : vector<4x8x8x128xf32> to vector<128xf32>
    %227 = vector.shape_cast %224 : vector<128xf32> to vector<1x128xf32>
    %228 = vector.shape_cast %226 : vector<128xf32> to vector<1x128xf32>
    %cst_45 = arith.constant 0.000000e+00 : f32
    %229 = vector.broadcast %cst_45 : f32 to vector<6x128xf32>
    %230 = tpu.concatenate %227, %228, %229 in 0 : vector<1x128xf32>, vector<1x128xf32>, vector<6x128xf32> -> vector<8x128xf32>
    %c0_46 = arith.constant 0 : index
    %c0_47 = arith.constant 0 : index
    %c0_48 = arith.constant 0 : index
    %c0_49 = arith.constant 0 : index
    %231 = vector.load %arg5[%c0_46, %c0_47, %c0_48, %c0_49] : memref<1x1x8x128xf32, #tpu.memory_space<vmem>>, vector<1x1x8x128xf32>
    %232 = vector.shape_cast %231 : vector<1x1x8x128xf32> to vector<8x128xf32>
    %233 = vector.shape_cast %230 : vector<8x128xf32> to vector<1x1x8x128xf32>
    tpu.vector_store %arg5[%c0_46, %c0_47, %c0_48, %c0_49], %233 {strides = array<i32>} : memref<1x1x8x128xf32, #tpu.memory_space<vmem>>, vector<1x1x8x128xf32>,
    return
  }
  func.func @transform_1(%arg0: i32, %arg1: i32) -> (i32, i32) {
    %c0_i32 = arith.constant 0 : i32
    %c0_i32_0 = arith.constant 0 : i32
    %c0_i32_1 = arith.constant 0 : i32
    return %c0_i32, %c0_i32_0 : i32, i32
  }
  func.func @transform_2(%arg0: i32, %arg1: i32) -> (i32, i32, i32, i32, i32) {
    %c0_i32 = arith.constant 0 : i32
    %c0_i32_0 = arith.constant 0 : i32
    %c0_i32_1 = arith.constant 0 : i32
    %c0_i32_2 = arith.constant 0 : i32
    return %arg0, %arg1, %c0_i32, %c0_i32_0, %c0_i32_1 : i32, i32, i32, i32, i32
  }
  func.func @transform_3(%arg0: i32, %arg1: i32) -> (i32, i32, i32, i32) {
    %c0_i32 = arith.constant 0 : i32
    %c0_i32_0 = arith.constant 0 : i32
    %c0_i32_1 = arith.constant 0 : i32
    return %arg0, %arg1, %c0_i32, %c0_i32_0 : i32, i32, i32, i32
  }
}

</mosaic_0001>

<llo_original>
// kernel: repux_block_forward.3
$region0: #{repux_block_forward.3}
  #allocation0 [shape = 'u32[]', space=smem, size = 0x4, offset = 0x4, fixed_abs, tag = 'smem constant byte address 0x4 - core index']
  #allocation1 [shape = 'u32[144,128]{1,0:T(1,128)}', space=vmem, size = 0x12000, scoped, tag = 'internal scratch']
  %s0 = inlined_call_operand.vmem [shape: f32[2,8,8,8,128], index: 0, kind: input, shape index: {}]
  %s1 = inlined_call_operand.vmem [shape: f32[1,128], index: 1, kind: input, shape index: {}]
  %s2 = inlined_call_operand.vmem [shape: f32[1,128], index: 2, kind: input, shape index: {}]
  %s3 = inlined_call_operand.vmem [shape: f32[2,8,8,8,128], index: 3, kind: output, shape index: {}]
  %s4 = sld [smem:[#allocation0]]
  $region45: #{repux_block_forward.3} parent=0
    _
  %s6 = ssub.s32 1, %s4
  %s7 = scalar_select 0, %s6, %s4
  loop: start=0, step=1, limit=4
  $region2: #{repux_block_forward.3} parent=0 // loop_pre_header
    _
  $region3: #{repux_block_forward.3} parent=0 // loop_header
    %s9 = sphi 0, %s13
    %p10 = scmp.ge.s32.totalorder %s9, 4
    %s16 = sphi 0, %s28
    %s17 = sphi 0, %s24
    %s18 = sphi 0, %s16
    %s19 = sphi 0, %s17
    %s20 = sphi 0, %s18
    %s21 = sphi 0, %s19
    %s33 = sphi 0, %s35
    %s36 = sphi 0, %s33
    %s37 = sphi 0, %s36
    %s53 = sphi 0, %s37
    %s57 = sphi 0, %s57
    %s59 = sphi 0, %s57
    %s60 = sphi 0, %s59
    %s74 = sphi 0, %s60
    %s78 = sphi 0, %s78
    %s80 = sphi 0, %s78
    %s81 = sphi 0, %s80
    %s95 = sphi 0, %s81
    %s103 = sphi 0, %s105
    %s106 = sphi 0, %s103
    %s107 = sphi 0, %s106
    %s123 = sphi 0, %s107
  $region4: #{repux_block_forward.3} parent=0 // loop_header_branch
    %12 = sbr.rel (%p10) target = $region8
  $region5: #{repux_block_forward.3} parent=0 // loop_body
    %s14 = ssub.s32 %s9, 1
    %s15 = ssub.s32 %s9, 2
    %s22 = sadd.s32 1, %s17
    %p23 = scmp.ge.s32.totalorder %s22, 1
    %s24 = scalar_select %p23, 0, %s22
    %s25 = sadd.s32 1, %s16
    %s26 = scalar_select %p23, %s25, %s16
    %p27 = scmp.ge.s32.totalorder %s26, 2
    %s28 = scalar_select %p27, 0, %s26
    %s29 = ssub.s32 %s16, %s28
    %s30 = ssub.s32 %s17, %s24
    %s31 = sor.u32 %s29, %s30
    %p32 = scmp.eq.s32.totalorder %s31, 0
    %s34 = sadd.s32 %s33, 1
    %s35 = scalar_select %p32, %s33, %s34
    %p38 = pneg %p32
    %p39 = scmp.eq.s32.totalorder %s9, 1
    %p40 = por %p38, %p39
    %p41 = scmp.ne.s32.totalorder %s33, %s36
    %p42 = scmp.eq.s32.totalorder %s9, 0
    %p43 = por %p41, %p42
    %p44 = scmp.ne.s32.totalorder %s33, %s36
    %p45 = scmp.eq.s32.totalorder %s14, 1
    %p46 = por %p44, %p45
    %p47 = scmp.ne.s32.totalorder %s36, %s37
    %p48 = scmp.eq.s32.totalorder %s14, 0
    %p49 = por %p47, %p48
    %p50 = scmp.ne.s32.totalorder %s36, %s37
    %p51 = scmp.eq.s32.totalorder %s15, 1
    %p52 = por %p50, %p51
    %p54 = scmp.ne.s32.totalorder %s37, %s53
    %p55 = scmp.eq.s32.totalorder %s15, 0
    %p56 = por %p54, %p55
    %s58 = sadd.s32 %s57, 1
    %p61 = scmp.eq.s32.totalorder %s9, 1
    %p62 = scmp.ne.s32.totalorder %s57, %s59
    %p63 = scmp.eq.s32.totalorder %s9, 0
    %p64 = por %p62, %p63
    %p65 = scmp.ne.s32.totalorder %s57, %s59
    %p66 = scmp.eq.s32.totalorder %s14, 1
    %p67 = por %p65, %p66
    %p68 = scmp.ne.s32.totalorder %s59, %s60
    %p69 = scmp.eq.s32.totalorder %s14, 0
    %p70 = por %p68, %p69
    %p71 = scmp.ne.s32.totalorder %s59, %s60
    %p72 = scmp.eq.s32.totalorder %s15, 1
    %p73 = por %p71, %p72
    %p75 = scmp.ne.s32.totalorder %s60, %s74
    %p76 = scmp.eq.s32.totalorder %s15, 0
    %p77 = por %p75, %p76
    %s79 = sadd.s32 %s78, 1
    %p82 = scmp.eq.s32.totalorder %s9, 1
    %p83 = scmp.ne.s32.totalorder %s78, %s80
    %p84 = scmp.eq.s32.totalorder %s9, 0
    %p85 = por %p83, %p84
    %p86 = scmp.ne.s32.totalorder %s78, %s80
    %p87 = scmp.eq.s32.totalorder %s14, 1
    %p88 = por %p86, %p87
    %p89 = scmp.ne.s32.totalorder %s80, %s81
    %p90 = scmp.eq.s32.totalorder %s14, 0
    %p91 = por %p89, %p90
    %p92 = scmp.ne.s32.totalorder %s80, %s81
    %p93 = scmp.eq.s32.totalorder %s15, 1
    %p94 = por %p92, %p93
    %p96 = scmp.ne.s32.totalorder %s81, %s95
    %p97 = scmp.eq.s32.totalorder %s15, 0
    %p98 = por %p96, %p97
    %s99 = ssub.s32 %s16, %s28
    %s100 = ssub.s32 %s17, %s24
    %s101 = sor.u32 %s99, %s100
    %p102 = scmp.eq.s32.totalorder %s101, 0
    %s104 = sadd.s32 %s103, 1
    %s105 = scalar_select %p102, %s103, %s104
    %p108 = pneg %p102
    %p109 = scmp.eq.s32.totalorder %s9, 1
    %p110 = por %p108, %p109
    %p111 = scmp.ne.s32.totalorder %s103, %s106
    %p112 = scmp.eq.s32.totalorder %s9, 0
    %p113 = por %p111, %p112
    %p114 = scmp.ne.s32.totalorder %s103, %s106
    %p115 = scmp.eq.s32.totalorder %s14, 1
    %p116 = por %p114, %p115
    %p117 = scmp.ne.s32.totalorder %s106, %s107
    %p118 = scmp.eq.s32.totalorder %s14, 0
    %p119 = por %p117, %p118
    %p120 = scmp.ne.s32.totalorder %s106, %s107
    %p121 = scmp.eq.s32.totalorder %s15, 1
    %p122 = por %p120, %p121
    %p124 = scmp.ne.s32.totalorder %s107, %s123
    %p125 = scmp.eq.s32.totalorder %s15, 0
    %p126 = por %p124, %p125
    %p127 = scmp.le.s32.totalorder 1, %s9
    %p128 = scmp.lt.s32.totalorder %s9, 3
    %p129 = pnand %p127, %p128
    %p130 = pneg %p129
    // Predicated region
    $region9: #{repux_block_forward.3} parent=5 // pred_check
      _
    $region10: #{repux_block_forward.3} parent=5 // pred_check_branch
      %132 = sbr.rel (%p129) target = $region12
    $region11: #{repux_block_forward.3} parent=5 // pred_region
      %s133 = ssub.s32 %s9, 1
      // Predicated region
      $region13: #{repux_block_forward.3} parent=11 // pred_check
        %p134 = pneg %p70
      $region14: #{repux_block_forward.3} parent=11 // pred_check_branch
        %136 = sbr.rel (%p134) target = $region16
      $region15: #{repux_block_forward.3} parent=11 // pred_region
        _
      $region16: #{repux_block_forward.3} parent=11 // pred_fallthru
        _
      // Predicated region
      $region17: #{repux_block_forward.3} parent=11 // pred_check
        %p137 = pneg %p91
      $region18: #{repux_block_forward.3} parent=11 // pred_check_branch
        %139 = sbr.rel (%p137) target = $region20
      $region19: #{repux_block_forward.3} parent=11 // pred_region
        _
      $region20: #{repux_block_forward.3} parent=11 // pred_fallthru
        _
    $region12: #{repux_block_forward.3} parent=5 // pred_fallthru
      _
    %p140 = scmp.lt.s32.totalorder %s9, 2
    // Predicated region
    $region21: #{repux_block_forward.3} parent=5 // pred_check
      %p141 = pneg %p140
    $region22: #{repux_block_forward.3} parent=5 // pred_check_branch
      %143 = sbr.rel (%p141) target = $region24
    $region23: #{repux_block_forward.3} parent=5 // pred_region
      // Predicated region
      $region25: #{repux_block_forward.3} parent=23 // pred_check
        %p144 = pneg %p43
      $region26: #{repux_block_forward.3} parent=23 // pred_check_branch
        %146 = sbr.rel (%p144) target = $region28
      $region27: #{repux_block_forward.3} parent=23 // pred_region
        %s147 = smul.u32 8, %s17
        %p148 = scmp.lt.s32.totalorder %s16, 1
        %s149 = scalar_select %p148, %s16, 1
        %p150 = scmp.lt.s32.totalorder %s147, 7
        %s151 = scalar_select %p150, %s147, 7
        %s152 = smul.addr %s151, 8
        %s153 = smul.addr %s149, 64
        %s154 = sadd.s32 %s152, %s153
        %s155 = smul.addr %s154, 8
        %s156 = scalar_lea.vmem %s0, %s155
        %s157 = smul.u32 8, %s17
      $region28: #{repux_block_forward.3} parent=23 // pred_fallthru
        _
    $region24: #{repux_block_forward.3} parent=5 // pred_fallthru
      _
    %p158 = scmp.le.s32.totalorder 1, %s9
    %p159 = scmp.lt.s32.totalorder %s9, 3
    %p160 = pnand %p158, %p159
    %p161 = pneg %p160
    // Predicated region
    $region29: #{repux_block_forward.3} parent=5 // pred_check
      _
    $region30: #{repux_block_forward.3} parent=5 // pred_check_branch
      %163 = sbr.rel (%p160) target = $region32
    $region31: #{repux_block_forward.3} parent=5 // pred_region
      %s164 = ssub.s32 %s9, 1
      %s165 = smul.u32 8, %s19
      %p166 = scmp.lt.s32.totalorder %s18, 1
      %s167 = scalar_select %p166, %s18, 1
      %p168 = scmp.lt.s32.totalorder %s165, 7
      %s169 = scalar_select %p168, %s165, 7
      %s170 = smul.addr %s169, 8
      %s171 = smul.addr %s167, 64
      %s172 = sadd.s32 %s170, %s171
      %s173 = smul.addr %s172, 8
      %s174 = scalar_lea.vmem %s0, %s173
      %p175 = pneg %p49
      %p176 = pneg %p46
      %p177 = pneg %p70
      %p178 = pneg %p67
      %p179 = pneg %p91
      %p180 = pneg %p88
      %p181 = pneg %p119
      %p182 = pneg %p116
      %s183 = smul.u32 8, %s19
      %p184 = scmp.lt.s32.totalorder %s18, 1
      %s185 = scalar_select %p184, %s18, 1
      %p186 = scmp.lt.s32.totalorder %s183, 7
      %s187 = scalar_select %p186, %s183, 7
      %s188 = smul.addr %s187, 8
      %s189 = smul.addr %s185, 64
      %s190 = sadd.s32 %s188, %s189
      %s191 = smul.addr %s190, 8
      %s192 = scalar_lea.vmem %s3, %s191
      %s193 = smul.u32 8, %s19
      %p194 = scmp.lt.s32.totalorder %s18, 1
      %s195 = scalar_select %p194, %s18, 1
      %p196 = scmp.lt.s32.totalorder %s193, 7
      %s197 = scalar_select %p196, %s193, 7
      %s198 = smul.addr %s197, 8
      %s199 = smul.addr %s195, 64
      %s200 = sadd.s32 %s198, %s199
      %s201 = smul.addr %s200, 8
      %s202 = scalar_lea.vmem %s0, %s201
      %s203 = smul.u32 8, %s19
      %s204 = smul.u32 8, %s19
      %p205 = scmp.lt.s32.totalorder %s18, 1
      %s206 = scalar_select %p205, %s18, 1
      %p207 = scmp.lt.s32.totalorder %s204, 7
      %s208 = scalar_select %p207, %s204, 7
      %s209 = smul.addr %s208, 8
      %s210 = smul.addr %s206, 64
      %s211 = sadd.s32 %s209, %s210
      %s212 = smul.addr %s211, 8
      %s213 = scalar_lea.vmem %s3, %s212
      %s214 = smul.u32 8, %s19
      %v215 = vld [vmem:[%s202] sm:$0xff]
      %v216 = vld [vmem:[%s202 + $0x8] sm:$0xff]
      %v217 = vld [vmem:[%s202 + $0x10] sm:$0xff]
      %v218 = vld [vmem:[%s202 + $0x18] sm:$0xff]
      %v219 = vld [vmem:[%s202 + $0x20] sm:$0xff]
      %v220 = vld [vmem:[%s202 + $0x28] sm:$0xff]
      %v221 = vld [vmem:[%s202 + $0x30] sm:$0xff]
      %v222 = vld [vmem:[%s202 + $0x38] sm:$0xff]
      %v223 = vld [vmem:[%s202 + $0x40] sm:$0xff]
      %v224 = vld [vmem:[%s202 + $0x48] sm:$0xff]
      %v225 = vld [vmem:[%s202 + $0x50] sm:$0xff]
      %v226 = vld [vmem:[%s202 + $0x58] sm:$0xff]
      %v227 = vld [vmem:[%s202 + $0x60] sm:$0xff]
      %v228 = vld [vmem:[%s202 + $0x68] sm:$0xff]
      %v229 = vld [vmem:[%s202 + $0x70] sm:$0xff]
      %v230 = vld [vmem:[%s202 + $0x78] sm:$0xff]
      %v231 = vld [vmem:[%s202 + $0x80] sm:$0xff]
      %v232 = vld [vmem:[%s202 + $0x88] sm:$0xff]
      %v233 = vld [vmem:[%s202 + $0x90] sm:$0xff]
      %v234 = vld [vmem:[%s202 + $0x98] sm:$0xff]
      %v235 = vld [vmem:[%s202 + $0xa0] sm:$0xff]
      %v236 = vld [vmem:[%s202 + $0xa8] sm:$0xff]
      %v237 = vld [vmem:[%s202 + $0xb0] sm:$0xff]
      %v238 = vld [vmem:[%s202 + $0xb8] sm:$0xff]
      %v239 = vld [vmem:[%s202 + $0xc0] sm:$0xff]
      %v240 = vld [vmem:[%s202 + $0xc8] sm:$0xff]
      %v241 = vld [vmem:[%s202 + $0xd0] sm:$0xff]
      %v242 = vld [vmem:[%s202 + $0xd8] sm:$0xff]
      %v243 = vld [vmem:[%s202 + $0xe0] sm:$0xff]
      %v244 = vld [vmem:[%s202 + $0xe8] sm:$0xff]
      %v245 = vld [vmem:[%s202 + $0xf0] sm:$0xff]
      %v246 = vld [vmem:[%s202 + $0xf8] sm:$0xff]
      %v247 = vld [vmem:[%s202 + $0x100] sm:$0xff]
      %v248 = vld [vmem:[%s202 + $0x108] sm:$0xff]
      %v249 = vld [vmem:[%s202 + $0x110] sm:$0xff]
      %v250 = vld [vmem:[%s202 + $0x118] sm:$0xff]
      %v251 = vld [vmem:[%s202 + $0x120] sm:$0xff]
      %v252 = vld [vmem:[%s202 + $0x128] sm:$0xff]
      %v253 = vld [vmem:[%s202 + $0x130] sm:$0xff]
      %v254 = vld [vmem:[%s202 + $0x138] sm:$0xff]
      %v255 = vld [vmem:[%s202 + $0x140] sm:$0xff]
      %v256 = vld [vmem:[%s202 + $0x148] sm:$0xff]
      %v257 = vld [vmem:[%s202 + $0x150] sm:$0xff]
      %v258 = vld [vmem:[%s202 + $0x158] sm:$0xff]
      %v259 = vld [vmem:[%s202 + $0x160] sm:$0xff]
      %v260 = vld [vmem:[%s202 + $0x168] sm:$0xff]
      %v261 = vld [vmem:[%s202 + $0x170] sm:$0xff]
      %v262 = vld [vmem:[%s202 + $0x178] sm:$0xff]
      %v263 = vld [vmem:[%s202 + $0x180] sm:$0xff]
      %v264 = vld [vmem:[%s202 + $0x188] sm:$0xff]
      %v265 = vld [vmem:[%s202 + $0x190] sm:$0xff]
      %v266 = vld [vmem:[%s202 + $0x198] sm:$0xff]
      %v267 = vld [vmem:[%s202 + $0x1a0] sm:$0xff]
      %v268 = vld [vmem:[%s202 + $0x1a8] sm:$0xff]
      %v269 = vld [vmem:[%s202 + $0x1b0] sm:$0xff]
      %v270 = vld [vmem:[%s202 + $0x1b8] sm:$0xff]
      %v271 = vld [vmem:[%s202 + $0x1c0] sm:$0xff]
      %v272 = vld [vmem:[%s202 + $0x1c8] sm:$0xff]
      %v273 = vld [vmem:[%s202 + $0x1d0] sm:$0xff]
      %v274 = vld [vmem:[%s202 + $0x1d8] sm:$0xff]
      %v275 = vld [vmem:[%s202 + $0x1e0] sm:$0xff]
      %v276 = vld [vmem:[%s202 + $0x1e8] sm:$0xff]
      %v277 = vld [vmem:[%s202 + $0x1f0] sm:$0xff]
      %v278 = vld [vmem:[%s202 + $0x1f8] sm:$0xff]
      %v279 = vld [vmem:[%s1] sm:$0x1]
      %v281 = vlaneseq
      %v282 = vshrl.u32 %v281, 7
      %v283 = vsub.s32 0, %v282
      %v284 = vrot.slane %v279, %v283
      %v286 = vmul.f32 %v215, %v284
      %v287 = vmul.f32 %v216, %v284
      %v288 = vmul.f32 %v217, %v284
      %v289 = vmul.f32 %v218, %v284
      %v290 = vmul.f32 %v219, %v284
      %v291 = vmul.f32 %v220, %v284
      %v292 = vmul.f32 %v221, %v284
      %v293 = vmul.f32 %v222, %v284
      %v294 = vmul.f32 %v223, %v284
      %v295 = vmul.f32 %v224, %v284
      %v296 = vmul.f32 %v225, %v284
      %v297 = vmul.f32 %v226, %v284
      %v298 = vmul.f32 %v227, %v284
      %v299 = vmul.f32 %v228, %v284
      %v300 = vmul.f32 %v229, %v284
      %v301 = vmul.f32 %v230, %v284
      %v302 = vmul.f32 %v231, %v284
      %v303 = vmul.f32 %v232, %v284
      %v304 = vmul.f32 %v233, %v284
      %v305 = vmul.f32 %v234, %v284
      %v306 = vmul.f32 %v235, %v284
      %v307 = vmul.f32 %v236, %v284
      %v308 = vmul.f32 %v237, %v284
      %v309 = vmul.f32 %v238, %v284
      %v310 = vmul.f32 %v239, %v284
      %v311 = vmul.f32 %v240, %v284
      %v312 = vmul.f32 %v241, %v284
      %v313 = vmul.f32 %v242, %v284
      %v314 = vmul.f32 %v243, %v284
      %v315 = vmul.f32 %v244, %v284
      %v316 = vmul.f32 %v245, %v284
      %v317 = vmul.f32 %v246, %v284
      %v318 = vmul.f32 %v247, %v284
      %v319 = vmul.f32 %v248, %v284
      %v320 = vmul.f32 %v249, %v284
      %v321 = vmul.f32 %v250, %v284
      %v322 = vmul.f32 %v251, %v284
      %v323 = vmul.f32 %v252, %v284
      %v324 = vmul.f32 %v253, %v284
      %v325 = vmul.f32 %v254, %v284
      %v326 = vmul.f32 %v255, %v284
      %v327 = vmul.f32 %v256, %v284
      %v328 = vmul.f32 %v257, %v284
      %v329 = vmul.f32 %v258, %v284
      %v330 = vmul.f32 %v259, %v284
      %v331 = vmul.f32 %v260, %v284
      %v332 = vmul.f32 %v261, %v284
      %v333 = vmul.f32 %v262, %v284
      %v334 = vmul.f32 %v263, %v284
      %v335 = vmul.f32 %v264, %v284
      %v336 = vmul.f32 %v265, %v284
      %v337 = vmul.f32 %v266, %v284
      %v338 = vmul.f32 %v267, %v284
      %v339 = vmul.f32 %v268, %v284
      %v340 = vmul.f32 %v269, %v284
      %v341 = vmul.f32 %v270, %v284
      %v342 = vmul.f32 %v271, %v284
      %v343 = vmul.f32 %v272, %v284
      %v344 = vmul.f32 %v273, %v284
      %v345 = vmul.f32 %v274, %v284
      %v346 = vmul.f32 %v275, %v284
      %v347 = vmul.f32 %v276, %v284
      %v348 = vmul.f32 %v277, %v284
      %v349 = vmul.f32 %v278, %v284
      %v350 = vld [vmem:[%s2] sm:$0x1]
      %v352 = vlaneseq
      %v353 = vshrl.u32 %v352, 7
      %v354 = vsub.s32 0, %v353
      %v355 = vrot.slane %v350, %v354
      %v357 = vadd.f32 %v286, %v355
      %v358 = vadd.f32 %v287, %v355
      %v359 = vadd.f32 %v288, %v355
      %v360 = vadd.f32 %v289, %v355
      %v361 = vadd.f32 %v290, %v355
      %v362 = vadd.f32 %v291, %v355
      %v363 = vadd.f32 %v292, %v355
      %v364 = vadd.f32 %v293, %v355
      %v365 = vadd.f32 %v294, %v355
      %v366 = vadd.f32 %v295, %v355
      %v367 = vadd.f32 %v296, %v355
      %v368 = vadd.f32 %v297, %v355
      %v369 = vadd.f32 %v298, %v355
      %v370 = vadd.f32 %v299, %v355
      %v371 = vadd.f32 %v300, %v355
      %v372 = vadd.f32 %v301, %v355
      %v373 = vadd.f32 %v302, %v355
      %v374 = vadd.f32 %v303, %v355
      %v375 = vadd.f32 %v304, %v355
      %v376 = vadd.f32 %v305, %v355
      %v377 = vadd.f32 %v306, %v355
      %v378 = vadd.f32 %v307, %v355
      %v379 = vadd.f32 %v308, %v355
      %v380 = vadd.f32 %v309, %v355
      %v381 = vadd.f32 %v310, %v355
      %v382 = vadd.f32 %v311, %v355
      %v383 = vadd.f32 %v312, %v355
      %v384 = vadd.f32 %v313, %v355
      %v385 = vadd.f32 %v314, %v355
      %v386 = vadd.f32 %v315, %v355
      %v387 = vadd.f32 %v316, %v355
      %v388 = vadd.f32 %v317, %v355
      %v389 = vadd.f32 %v318, %v355
      %v390 = vadd.f32 %v319, %v355
      %v391 = vadd.f32 %v320, %v355
      %v392 = vadd.f32 %v321, %v355
      %v393 = vadd.f32 %v322, %v355
      %v394 = vadd.f32 %v323, %v355
      %v395 = vadd.f32 %v324, %v355
      %v396 = vadd.f32 %v325, %v355
      %v397 = vadd.f32 %v326, %v355
      %v398 = vadd.f32 %v327, %v355
      %v399 = vadd.f32 %v328, %v355
      %v400 = vadd.f32 %v329, %v355
      %v401 = vadd.f32 %v330, %v355
      %v402 = vadd.f32 %v331, %v355
      %v403 = vadd.f32 %v332, %v355
      %v404 = vadd.f32 %v333, %v355
      %v405 = vadd.f32 %v334, %v355
      %v406 = vadd.f32 %v335, %v355
      %v407 = vadd.f32 %v336, %v355
      %v408 = vadd.f32 %v337, %v355
      %v409 = vadd.f32 %v338, %v355
      %v410 = vadd.f32 %v339, %v355
      %v411 = vadd.f32 %v340, %v355
      %v412 = vadd.f32 %v341, %v355
      %v413 = vadd.f32 %v342, %v355
      %v414 = vadd.f32 %v343, %v355
      %v415 = vadd.f32 %v344, %v355
      %v416 = vadd.f32 %v345, %v355
      %v417 = vadd.f32 %v346, %v355
      %v418 = vadd.f32 %v347, %v355
      %v419 = vadd.f32 %v348, %v355
      %v420 = vadd.f32 %v349, %v355
      %v421 = vmul.f32 %v357, 0.5
      %v422 = vmul.f32 %v358, 0.5
      %v423 = vmul.f32 %v359, 0.5
      %v424 = vmul.f32 %v360, 0.5
      %v425 = vmul.f32 %v361, 0.5
      %v426 = vmul.f32 %v362, 0.5
      %v427 = vmul.f32 %v363, 0.5
      %v428 = vmul.f32 %v364, 0.5
      %v429 = vmul.f32 %v365, 0.5
      %v430 = vmul.f32 %v366, 0.5
      %v431 = vmul.f32 %v367, 0.5
      %v432 = vmul.f32 %v368, 0.5
      %v433 = vmul.f32 %v369, 0.5
      %v434 = vmul.f32 %v370, 0.5
      %v435 = vmul.f32 %v371, 0.5
      %v436 = vmul.f32 %v372, 0.5
      %v437 = vmul.f32 %v373, 0.5
      %v438 = vmul.f32 %v374, 0.5
      %v439 = vmul.f32 %v375, 0.5
      %v440 = vmul.f32 %v376, 0.5
      %v441 = vmul.f32 %v377, 0.5
      %v442 = vmul.f32 %v378, 0.5
      %v443 = vmul.f32 %v379, 0.5
      %v444 = vmul.f32 %v380, 0.5
      %v445 = vmul.f32 %v381, 0.5
      %v446 = vmul.f32 %v382, 0.5
      %v447 = vmul.f32 %v383, 0.5
      %v448 = vmul.f32 %v384, 0.5
      %v449 = vmul.f32 %v385, 0.5
      %v450 = vmul.f32 %v386, 0.5
      %v451 = vmul.f32 %v387, 0.5
      %v452 = vmul.f32 %v388, 0.5
      %v453 = vmul.f32 %v389, 0.5
      %v454 = vmul.f32 %v390, 0.5
      %v455 = vmul.f32 %v391, 0.5
      %v456 = vmul.f32 %v392, 0.5
      %v457 = vmul.f32 %v393, 0.5
      %v458 = vmul.f32 %v394, 0.5
      %v459 = vmul.f32 %v395, 0.5
      %v460 = vmul.f32 %v396, 0.5
      %v461 = vmul.f32 %v397, 0.5
      %v462 = vmul.f32 %v398, 0.5
      %v463 = vmul.f32 %v399, 0.5
      %v464 = vmul.f32 %v400, 0.5
      %v465 = vmul.f32 %v401, 0.5
      %v466 = vmul.f32 %v402, 0.5
      %v467 = vmul.f32 %v403, 0.5
      %v468 = vmul.f32 %v404, 0.5
      %v469 = vmul.f32 %v405, 0.5
      %v470 = vmul.f32 %v406, 0.5
      %v471 = vmul.f32 %v407, 0.5
      %v472 = vmul.f32 %v408, 0.5
      %v473 = vmul.f32 %v409, 0.5
      %v474 = vmul.f32 %v410, 0.5
      %v475 = vmul.f32 %v411, 0.5
      %v476 = vmul.f32 %v412, 0.5
      %v477 = vmul.f32 %v413, 0.5
      %v478 = vmul.f32 %v414, 0.5
      %v479 = vmul.f32 %v415, 0.5
      %v480 = vmul.f32 %v416, 0.5
      %v481 = vmul.f32 %v417, 0.5
      %v482 = vmul.f32 %v418, 0.5
      %v483 = vmul.f32 %v419, 0.5
      %v484 = vmul.f32 %v420, 0.5
      %v485 = vmul.f32 %v357, 0.70710677
      %v486 = vmul.f32 %v358, 0.70710677
      %v487 = vmul.f32 %v359, 0.70710677
      %v488 = vmul.f32 %v360, 0.70710677
      %v489 = vmul.f32 %v361, 0.70710677
      %v490 = vmul.f32 %v362, 0.70710677
      %v491 = vmul.f32 %v363, 0.70710677
      %v492 = vmul.f32 %v364, 0.70710677
      %v493 = vmul.f32 %v365, 0.70710677
      %v494 = vmul.f32 %v366, 0.70710677
      %v495 = vmul.f32 %v367, 0.70710677
      %v496 = vmul.f32 %v368, 0.70710677
      %v497 = vmul.f32 %v369, 0.70710677
      %v498 = vmul.f32 %v370, 0.70710677
      %v499 = vmul.f32 %v371, 0.70710677
      %v500 = vmul.f32 %v372, 0.70710677
      %v501 = vmul.f32 %v373, 0.70710677
      %v502 = vmul.f32 %v374, 0.70710677
      %v503 = vmul.f32 %v375, 0.70710677
      %v504 = vmul.f32 %v376, 0.70710677
      %v505 = vmul.f32 %v377, 0.70710677
      %v506 = vmul.f32 %v378, 0.70710677
      %v507 = vmul.f32 %v379, 0.70710677
      %v508 = vmul.f32 %v380, 0.70710677
      %v509 = vmul.f32 %v381, 0.70710677
      %v510 = vmul.f32 %v382, 0.70710677
      %v511 = vmul.f32 %v383, 0.70710677
      %v512 = vmul.f32 %v384, 0.70710677
      %v513 = vmul.f32 %v385, 0.70710677
      %v514 = vmul.f32 %v386, 0.70710677
      %v515 = vmul.f32 %v387, 0.70710677
      %v516 = vmul.f32 %v388, 0.70710677
      %v517 = vmul.f32 %v389, 0.70710677
      %v518 = vmul.f32 %v390, 0.70710677
      %v519 = vmul.f32 %v391, 0.70710677
      %v520 = vmul.f32 %v392, 0.70710677
      %v521 = vmul.f32 %v393, 0.70710677
      %v522 = vmul.f32 %v394, 0.70710677
      %v523 = vmul.f32 %v395, 0.70710677
      %v524 = vmul.f32 %v396, 0.70710677
      %v525 = vmul.f32 %v397, 0.70710677
      %v526 = vmul.f32 %v398, 0.70710677
      %v527 = vmul.f32 %v399, 0.70710677
      %v528 = vmul.f32 %v400, 0.70710677
      %v529 = vmul.f32 %v401, 0.70710677
      %v530 = vmul.f32 %v402, 0.70710677
      %v531 = vmul.f32 %v403, 0.70710677
      %v532 = vmul.f32 %v404, 0.70710677
      %v533 = vmul.f32 %v405, 0.70710677
      %v534 = vmul.f32 %v406, 0.70710677
      %v535 = vmul.f32 %v407, 0.70710677
      %v536 = vmul.f32 %v408, 0.70710677
      %v537 = vmul.f32 %v409, 0.70710677
      %v538 = vmul.f32 %v410, 0.70710677
      %v539 = vmul.f32 %v411, 0.70710677
      %v540 = vmul.f32 %v412, 0.70710677
      %v541 = vmul.f32 %v413, 0.70710677
      %v542 = vmul.f32 %v414, 0.70710677
      %v543 = vmul.f32 %v415, 0.70710677
      %v544 = vmul.f32 %v416, 0.70710677
      %v545 = vmul.f32 %v417, 0.70710677
      %v546 = vmul.f32 %v418, 0.70710677
      %v547 = vmul.f32 %v419, 0.70710677
      %v548 = vmul.f32 %v420, 0.70710677
      %v549 = verf.f32.pop %v485
      %v550 = verf.f32.pop %v486
      %v551 = verf.f32.pop %v487
      %v552 = verf.f32.pop %v488
      %v553 = verf.f32.pop %v489
      %v554 = verf.f32.pop %v490
      %v555 = verf.f32.pop %v491
      %v556 = verf.f32.pop %v492
      %v557 = verf.f32.pop %v493
      %v558 = verf.f32.pop %v494
      %v559 = verf.f32.pop %v495
      %v560 = verf.f32.pop %v496
      %v561 = verf.f32.pop %v497
      %v562 = verf.f32.pop %v498
      %v563 = verf.f32.pop %v499
      %v564 = verf.f32.pop %v500
      %v565 = verf.f32.pop %v501
      %v566 = verf.f32.pop %v502
      %v567 = verf.f32.pop %v503
      %v568 = verf.f32.pop %v504
      %v569 = verf.f32.pop %v505
      %v570 = verf.f32.pop %v506
      %v571 = verf.f32.pop %v507
      %v572 = verf.f32.pop %v508
      %v573 = verf.f32.pop %v509
      %v574 = verf.f32.pop %v510
      %v575 = verf.f32.pop %v511
      %v576 = verf.f32.pop %v512
      %v577 = verf.f32.pop %v513
      %v578 = verf.f32.pop %v514
      %v579 = verf.f32.pop %v515
      %v580 = verf.f32.pop %v516
      %v581 = verf.f32.pop %v517
      %v582 = verf.f32.pop %v518
      %v583 = verf.f32.pop %v519
      %v584 = verf.f32.pop %v520
      %v585 = verf.f32.pop %v521
      %v586 = verf.f32.pop %v522
      %v587 = verf.f32.pop %v523
      %v588 = verf.f32.pop %v524
      %v589 = verf.f32.pop %v525
      %v590 = verf.f32.pop %v526
      %v591 = verf.f32.pop %v527
      %v592 = verf.f32.pop %v528
      %v593 = verf.f32.pop %v529
      %v594 = verf.f32.pop %v530
      %v595 = verf.f32.pop %v531
      %v596 = verf.f32.pop %v532
      %v597 = verf.f32.pop %v533
      %v598 = verf.f32.pop %v534
      %v599 = verf.f32.pop %v535
      %v600 = verf.f32.pop %v536
      %v601 = verf.f32.pop %v537
      %v602 = verf.f32.pop %v538
      %v603 = verf.f32.pop %v539
      %v604 = verf.f32.pop %v540
      %v605 = verf.f32.pop %v541
      %v606 = verf.f32.pop %v542
      %v607 = verf.f32.pop %v543
      %v608 = verf.f32.pop %v544
      %v609 = verf.f32.pop %v545
      %v610 = verf.f32.pop %v546
      %v611 = verf.f32.pop %v547
      %v612 = verf.f32.pop %v548
      %v613 = vadd.f32 %v549, 1.0
      %v614 = vadd.f32 %v550, 1.0
      %v615 = vadd.f32 %v551, 1.0
      %v616 = vadd.f32 %v552, 1.0
      %v617 = vadd.f32 %v553, 1.0
      %v618 = vadd.f32 %v554, 1.0
      %v619 = vadd.f32 %v555, 1.0
      %v620 = vadd.f32 %v556, 1.0
      %v621 = vadd.f32 %v557, 1.0
      %v622 = vadd.f32 %v558, 1.0
      %v623 = vadd.f32 %v559, 1.0
      %v624 = vadd.f32 %v560, 1.0
      %v625 = vadd.f32 %v561, 1.0
      %v626 = vadd.f32 %v562, 1.0
      %v627 = vadd.f32 %v563, 1.0
      %v628 = vadd.f32 %v564, 1.0
      %v629 = vadd.f32 %v565, 1.0
      %v630 = vadd.f32 %v566, 1.0
      %v631 = vadd.f32 %v567, 1.0
      %v632 = vadd.f32 %v568, 1.0
      %v633 = vadd.f32 %v569, 1.0
      %v634 = vadd.f32 %v570, 1.0
      %v635 = vadd.f32 %v571, 1.0
      %v636 = vadd.f32 %v572, 1.0
      %v637 = vadd.f32 %v573, 1.0
      %v638 = vadd.f32 %v574, 1.0
      %v639 = vadd.f32 %v575, 1.0
      %v640 = vadd.f32 %v576, 1.0
      %v641 = vadd.f32 %v577, 1.0
      %v642 = vadd.f32 %v578, 1.0
      %v643 = vadd.f32 %v579, 1.0
      %v644 = vadd.f32 %v580, 1.0
      %v645 = vadd.f32 %v581, 1.0
      %v646 = vadd.f32 %v582, 1.0
      %v647 = vadd.f32 %v583, 1.0
      %v648 = vadd.f32 %v584, 1.0
      %v649 = vadd.f32 %v585, 1.0
      %v650 = vadd.f32 %v586, 1.0
      %v651 = vadd.f32 %v587, 1.0
      %v652 = vadd.f32 %v588, 1.0
      %v653 = vadd.f32 %v589, 1.0
      %v654 = vadd.f32 %v590, 1.0
      %v655 = vadd.f32 %v591, 1.0
      %v656 = vadd.f32 %v592, 1.0
      %v657 = vadd.f32 %v593, 1.0
      %v658 = vadd.f32 %v594, 1.0
      %v659 = vadd.f32 %v595, 1.0
      %v660 = vadd.f32 %v596, 1.0
      %v661 = vadd.f32 %v597, 1.0
      %v662 = vadd.f32 %v598, 1.0
      %v663 = vadd.f32 %v599, 1.0
      %v664 = vadd.f32 %v600, 1.0
      %v665 = vadd.f32 %v601, 1.0
      %v666 = vadd.f32 %v602, 1.0
      %v667 = vadd.f32 %v603, 1.0
      %v668 = vadd.f32 %v604, 1.0
      %v669 = vadd.f32 %v605, 1.0
      %v670 = vadd.f32 %v606, 1.0
      %v671 = vadd.f32 %v607, 1.0
      %v672 = vadd.f32 %v608, 1.0
      %v673 = vadd.f32 %v609, 1.0
      %v674 = vadd.f32 %v610, 1.0
      %v675 = vadd.f32 %v611, 1.0
      %v676 = vadd.f32 %v612, 1.0
      %v677 = vmul.f32 %v421, %v613
      %v678 = vmul.f32 %v422, %v614
      %v679 = vmul.f32 %v423, %v615
      %v680 = vmul.f32 %v424, %v616
      %v681 = vmul.f32 %v425, %v617
      %v682 = vmul.f32 %v426, %v618
      %v683 = vmul.f32 %v427, %v619
      %v684 = vmul.f32 %v428, %v620
      %v685 = vmul.f32 %v429, %v621
      %v686 = vmul.f32 %v430, %v622
      %v687 = vmul.f32 %v431, %v623
      %v688 = vmul.f32 %v432, %v624
      %v689 = vmul.f32 %v433, %v625
      %v690 = vmul.f32 %v434, %v626
      %v691 = vmul.f32 %v435, %v627
      %v692 = vmul.f32 %v436, %v628
      %v693 = vmul.f32 %v437, %v629
      %v694 = vmul.f32 %v438, %v630
      %v695 = vmul.f32 %v439, %v631
      %v696 = vmul.f32 %v440, %v632
      %v697 = vmul.f32 %v441, %v633
      %v698 = vmul.f32 %v442, %v634
      %v699 = vmul.f32 %v443, %v635
      %v700 = vmul.f32 %v444, %v636
      %v701 = vmul.f32 %v445, %v637
      %v702 = vmul.f32 %v446, %v638
      %v703 = vmul.f32 %v447, %v639
      %v704 = vmul.f32 %v448, %v640
      %v705 = vmul.f32 %v449, %v641
      %v706 = vmul.f32 %v450, %v642
      %v707 = vmul.f32 %v451, %v643
      %v708 = vmul.f32 %v452, %v644
      %v709 = vmul.f32 %v453, %v645
      %v710 = vmul.f32 %v454, %v646
      %v711 = vmul.f32 %v455, %v647
      %v712 = vmul.f32 %v456, %v648
      %v713 = vmul.f32 %v457, %v649
      %v714 = vmul.f32 %v458, %v650
      %v715 = vmul.f32 %v459, %v651
      %v716 = vmul.f32 %v460, %v652
      %v717 = vmul.f32 %v461, %v653
      %v718 = vmul.f32 %v462, %v654
      %v719 = vmul.f32 %v463, %v655
      %v720 = vmul.f32 %v464, %v656
      %v721 = vmul.f32 %v465, %v657
      %v722 = vmul.f32 %v466, %v658
      %v723 = vmul.f32 %v467, %v659
      %v724 = vmul.f32 %v468, %v660
      %v725 = vmul.f32 %v469, %v661
      %v726 = vmul.f32 %v470, %v662
      %v727 = vmul.f32 %v471, %v663
      %v728 = vmul.f32 %v472, %v664
      %v729 = vmul.f32 %v473, %v665
      %v730 = vmul.f32 %v474, %v666
      %v731 = vmul.f32 %v475, %v667
      %v732 = vmul.f32 %v476, %v668
      %v733 = vmul.f32 %v477, %v669
      %v734 = vmul.f32 %v478, %v670
      %v735 = vmul.f32 %v479, %v671
      %v736 = vmul.f32 %v480, %v672
      %v737 = vmul.f32 %v481, %v673
      %v738 = vmul.f32 %v482, %v674
      %v739 = vmul.f32 %v483, %v675
      %v740 = vmul.f32 %v484, %v676
      %741 = vst [vmem:[%s213] sm:$0xff] %v677
      %742 = vst [vmem:[%s213 + $0x8] sm:$0xff] %v678
      %743 = vst [vmem:[%s213 + $0x10] sm:$0xff] %v679
      %744 = vst [vmem:[%s213 + $0x18] sm:$0xff] %v680
      %745 = vst [vmem:[%s213 + $0x20] sm:$0xff] %v681
      %746 = vst [vmem:[%s213 + $0x28] sm:$0xff] %v682
      %747 = vst [vmem:[%s213 + $0x30] sm:$0xff] %v683
      %748 = vst [vmem:[%s213 + $0x38] sm:$0xff] %v684
      %749 = vst [vmem:[%s213 + $0x40] sm:$0xff] %v685
      %750 = vst [vmem:[%s213 + $0x48] sm:$0xff] %v686
      %751 = vst [vmem:[%s213 + $0x50] sm:$0xff] %v687
      %752 = vst [vmem:[%s213 + $0x58] sm:$0xff] %v688
      %753 = vst [vmem:[%s213 + $0x60] sm:$0xff] %v689
      %754 = vst [vmem:[%s213 + $0x68] sm:$0xff] %v690
      %755 = vst [vmem:[%s213 + $0x70] sm:$0xff] %v691
      %756 = vst [vmem:[%s213 + $0x78] sm:$0xff] %v692
      %757 = vst [vmem:[%s213 + $0x80] sm:$0xff] %v693
      %758 = vst [vmem:[%s213 + $0x88] sm:$0xff] %v694
      %759 = vst [vmem:[%s213 + $0x90] sm:$0xff] %v695
      %760 = vst [vmem:[%s213 + $0x98] sm:$0xff] %v696
      %761 = vst [vmem:[%s213 + $0xa0] sm:$0xff] %v697
      %762 = vst [vmem:[%s213 + $0xa8] sm:$0xff] %v698
      %763 = vst [vmem:[%s213 + $0xb0] sm:$0xff] %v699
      %764 = vst [vmem:[%s213 + $0xb8] sm:$0xff] %v700
      %765 = vst [vmem:[%s213 + $0xc0] sm:$0xff] %v701
      %766 = vst [vmem:[%s213 + $0xc8] sm:$0xff] %v702
      %767 = vst [vmem:[%s213 + $0xd0] sm:$0xff] %v703
      %768 = vst [vmem:[%s213 + $0xd8] sm:$0xff] %v704
      %769 = vst [vmem:[%s213 + $0xe0] sm:$0xff] %v705
      %770 = vst [vmem:[%s213 + $0xe8] sm:$0xff] %v706
      %771 = vst [vmem:[%s213 + $0xf0] sm:$0xff] %v707
      %772 = vst [vmem:[%s213 + $0xf8] sm:$0xff] %v708
      %773 = vst [vmem:[%s213 + $0x100] sm:$0xff] %v709
      %774 = vst [vmem:[%s213 + $0x108] sm:$0xff] %v710
      %775 = vst [vmem:[%s213 + $0x110] sm:$0xff] %v711
      %776 = vst [vmem:[%s213 + $0x118] sm:$0xff] %v712
      %777 = vst [vmem:[%s213 + $0x120] sm:$0xff] %v713
      %778 = vst [vmem:[%s213 + $0x128] sm:$0xff] %v714
      %779 = vst [vmem:[%s213 + $0x130] sm:$0xff] %v715
      %780 = vst [vmem:[%s213 + $0x138] sm:$0xff] %v716
      %781 = vst [vmem:[%s213 + $0x140] sm:$0xff] %v717
      %782 = vst [vmem:[%s213 + $0x148] sm:$0xff] %v718
      %783 = vst [vmem:[%s213 + $0x150] sm:$0xff] %v719
      %784 = vst [vmem:[%s213 + $0x158] sm:$0xff] %v720
      %785 = vst [vmem:[%s213 + $0x160] sm:$0xff] %v721
      %786 = vst [vmem:[%s213 + $0x168] sm:$0xff] %v722
      %787 = vst [vmem:[%s213 + $0x170] sm:$0xff] %v723
      %788 = vst [vmem:[%s213 + $0x178] sm:$0xff] %v724
      %789 = vst [vmem:[%s213 + $0x180] sm:$0xff] %v725
      %790 = vst [vmem:[%s213 + $0x188] sm:$0xff] %v726
      %791 = vst [vmem:[%s213 + $0x190] sm:$0xff] %v727
      %792 = vst [vmem:[%s213 + $0x198] sm:$0xff] %v728
      %793 = vst [vmem:[%s213 + $0x1a0] sm:$0xff] %v729
      %794 = vst [vmem:[%s213 + $0x1a8] sm:$0xff] %v730
      %795 = vst [vmem:[%s213 + $0x1b0] sm:$0xff] %v731
      %796 = vst [vmem:[%s213 + $0x1b8] sm:$0xff] %v732
      %797 = vst [vmem:[%s213 + $0x1c0] sm:$0xff] %v733
      %798 = vst [vmem:[%s213 + $0x1c8] sm:$0xff] %v734
      %799 = vst [vmem:[%s213 + $0x1d0] sm:$0xff] %v735
      %800 = vst [vmem:[%s213 + $0x1d8] sm:$0xff] %v736
      %801 = vst [vmem:[%s213 + $0x1e0] sm:$0xff] %v737
      %802 = vst [vmem:[%s213 + $0x1e8] sm:$0xff] %v738
      %803 = vst [vmem:[%s213 + $0x1f0] sm:$0xff] %v739
      %804 = vst [vmem:[%s213 + $0x1f8] sm:$0xff] %v740
      %s805 = smul.u32 8, %s19
      %p806 = scmp.lt.s32.totalorder %s18, 1
      %s807 = scalar_select %p806, %s18, 1
      %p808 = scmp.lt.s32.totalorder %s805, 7
      %s809 = scalar_select %p808, %s805, 7
      %s810 = smul.addr %s809, 8
      %s811 = smul.addr %s807, 64
      %s812 = sadd.s32 %s810, %s811
      %s813 = smul.addr %s812, 8
      %s814 = scalar_lea.vmem %s3, %s813
      // Predicated region
      $region33: #{repux_block_forward.3} parent=31 // pred_check
        %p815 = pneg %p116
      $region34: #{repux_block_forward.3} parent=31 // pred_check_branch
        %817 = sbr.rel (%p815) target = $region36
      $region35: #{repux_block_forward.3} parent=31 // pred_region
        %s818 = smul.u32 8, %s19
      $region36: #{repux_block_forward.3} parent=31 // pred_fallthru
        _
    $region32: #{repux_block_forward.3} parent=5 // pred_fallthru
      _
    %p819 = scmp.le.s32.totalorder 2, %s9
    // Predicated region
    $region37: #{repux_block_forward.3} parent=5 // pred_check
      %p820 = pneg %p819
    $region38: #{repux_block_forward.3} parent=5 // pred_check_branch
      %822 = sbr.rel (%p820) target = $region40
    $region39: #{repux_block_forward.3} parent=5 // pred_region
      %s823 = ssub.s32 %s9, 2
      // Predicated region
      $region41: #{repux_block_forward.3} parent=39 // pred_check
        %p824 = pneg %p122
      $region42: #{repux_block_forward.3} parent=39 // pred_check_branch
        %826 = sbr.rel (%p824) target = $region44
      $region43: #{repux_block_forward.3} parent=39 // pred_region
        %s827 = smul.u32 8, %s21
        %p828 = scmp.lt.s32.totalorder %s20, 1
        %s829 = scalar_select %p828, %s20, 1
        %p830 = scmp.lt.s32.totalorder %s827, 7
        %s831 = scalar_select %p830, %s827, 7
        %s832 = smul.addr %s831, 8
        %s833 = smul.addr %s829, 64
        %s834 = sadd.s32 %s832, %s833
        %s835 = smul.addr %s834, 8
        %s836 = scalar_lea.vmem %s3, %s835
      $region44: #{repux_block_forward.3} parent=39 // pred_fallthru
        _
    $region40: #{repux_block_forward.3} parent=5 // pred_fallthru
      _
  $region6: #{repux_block_forward.3} parent=0 // loop_footer
    %s13 = sadd.s32 1, %s9
  $region7: #{repux_block_forward.3} parent=0 // loop_footer_branch
    %8 = sbr.rel target = $region3
  $region8: #{repux_block_forward.3} parent=0 // loop_exit
    _

// kernel: repux_block_forward.2
$region0: #{repux_block_forward.2}
  #allocation0 [shape = 'u32[]', space=smem, size = 0x4, offset = 0x4, fixed_abs, tag = 'smem constant byte address 0x4 - core index']
  #allocation1 [shape = 'u32[144,128]{1,0:T(1,128)}', space=vmem, size = 0x12000, scoped, tag = 'internal scratch']
  #allocation2 [shape = 'f32[2,6,10,16,128]{4,3,2,1,0:T(8,128)}', space=vmem, size = 0xf0000, scoped, tag = 'scratch operand']
  #allocation3 [shape = 's32[2]{0}', space=sflag, size = 0x8, scoped, tag = 'scratch operand']
  #allocation4 [shape = 's32[]', space=sflag, size = 0x4, offset = 0, fixed_abs, tag = 'sflag constant byte address 0x0 - dummy sync flag']
  #allocation5 [shape = 's32[]', space=sflag, size = 0x4, offset = 0, fixed_abs, tag = 'sflag constant byte address 0x0 - dummy sync flag']
  %s0 = inlined_call_operand.vmem [shape: f32[2,10,10,16,128], index: 0, kind: input, shape index: {}]
  %s1 = inlined_call_operand.vmem [shape: f32[27,128], index: 1, kind: input, shape index: {}]
  %s2 = inlined_call_operand.vmem [shape: f32[2,8,8,8,128], index: 2, kind: output, shape index: {0}]
  %s3 = inlined_call_operand.vmem [shape: f32[2,2,8,128], index: 3, kind: output, shape index: {1}]
  %4 = xla_tuple %s2, %s3
  %s5 = sld [smem:[#allocation0]]
  $region121: #{repux_block_forward.2} parent=0
    _
  %s7 = ssub.s32 1, %s5
  %s8 = scalar_select 0, %s7, %s5
  loop: start=0, step=1, limit=6
  $region2: #{repux_block_forward.2} parent=0 // loop_pre_header
    _
  $region3: #{repux_block_forward.2} parent=0 // loop_header
    %s10 = sphi 0, %s14
    %p11 = scmp.ge.s32.totalorder %s10, 6
    %s17 = sphi 0, %s29
    %s18 = sphi 0, %s25
    %s19 = sphi 0, %s17
    %s20 = sphi 0, %s18
    %s21 = sphi 0, %s19
    %s22 = sphi 0, %s20
    %s30 = sphi 0, %s30
    %s32 = sphi 0, %s30
    %s33 = sphi 0, %s32
    %s47 = sphi 0, %s33
    %s55 = sphi 0, %s57
    %s58 = sphi 0, %s55
    %s59 = sphi 0, %s58
    %s75 = sphi 0, %s59
    %s83 = sphi 0, %s85
    %s86 = sphi 0, %s83
    %s87 = sphi 0, %s86
    %s103 = sphi 0, %s87
  $region4: #{repux_block_forward.2} parent=0 // loop_header_branch
    %13 = sbr.rel (%p11) target = $region8
  $region5: #{repux_block_forward.2} parent=0 // loop_body
    %s15 = ssub.s32 %s10, 1
    %s16 = ssub.s32 %s10, 2
    %s23 = sadd.s32 1, %s18
    %p24 = scmp.ge.s32.totalorder %s23, 2
    %s25 = scalar_select %p24, 0, %s23
    %s26 = sadd.s32 1, %s17
    %s27 = scalar_select %p24, %s26, %s17
    %p28 = scmp.ge.s32.totalorder %s27, 2
    %s29 = scalar_select %p28, 0, %s27
    %s31 = sadd.s32 %s30, 1
    %p34 = scmp.eq.s32.totalorder %s10, 3
    %p35 = scmp.ne.s32.totalorder %s30, %s32
    %p36 = scmp.eq.s32.totalorder %s10, 0
    %p37 = por %p35, %p36
    %p38 = scmp.ne.s32.totalorder %s30, %s32
    %p39 = scmp.eq.s32.totalorder %s15, 3
    %p40 = por %p38, %p39
    %p41 = scmp.ne.s32.totalorder %s32, %s33
    %p42 = scmp.eq.s32.totalorder %s15, 0
    %p43 = por %p41, %p42
    %p44 = scmp.ne.s32.totalorder %s32, %s33
    %p45 = scmp.eq.s32.totalorder %s16, 3
    %p46 = por %p44, %p45
    %p48 = scmp.ne.s32.totalorder %s33, %s47
    %p49 = scmp.eq.s32.totalorder %s16, 0
    %p50 = por %p48, %p49
    %s51 = ssub.s32 %s17, %s29
    %s52 = ssub.s32 %s18, %s25
    %s53 = sor.u32 %s51, %s52
    %p54 = scmp.eq.s32.totalorder %s53, 0
    %s56 = sadd.s32 %s55, 1
    %s57 = scalar_select %p54, %s55, %s56
    %p60 = pneg %p54
    %p61 = scmp.eq.s32.totalorder %s10, 3
    %p62 = por %p60, %p61
    %p63 = scmp.ne.s32.totalorder %s55, %s58
    %p64 = scmp.eq.s32.totalorder %s10, 0
    %p65 = por %p63, %p64
    %p66 = scmp.ne.s32.totalorder %s55, %s58
    %p67 = scmp.eq.s32.totalorder %s15, 3
    %p68 = por %p66, %p67
    %p69 = scmp.ne.s32.totalorder %s58, %s59
    %p70 = scmp.eq.s32.totalorder %s15, 0
    %p71 = por %p69, %p70
    %p72 = scmp.ne.s32.totalorder %s58, %s59
    %p73 = scmp.eq.s32.totalorder %s16, 3
    %p74 = por %p72, %p73
    %p76 = scmp.ne.s32.totalorder %s59, %s75
    %p77 = scmp.eq.s32.totalorder %s16, 0
    %p78 = por %p76, %p77
    %s79 = ssub.s32 %s17, %s29
    %s80 = ssub.s32 %s18, %s25
    %s81 = sor.u32 %s79, %s80
    %p82 = scmp.eq.s32.totalorder %s81, 0
    %s84 = sadd.s32 %s83, 1
    %s85 = scalar_select %p82, %s83, %s84
    %p88 = pneg %p82
    %p89 = scmp.eq.s32.totalorder %s10, 3
    %p90 = por %p88, %p89
    %p91 = scmp.ne.s32.totalorder %s83, %s86
    %p92 = scmp.eq.s32.totalorder %s10, 0
    %p93 = por %p91, %p92
    %p94 = scmp.ne.s32.totalorder %s83, %s86
    %p95 = scmp.eq.s32.totalorder %s15, 3
    %p96 = por %p94, %p95
    %p97 = scmp.ne.s32.totalorder %s86, %s87
    %p98 = scmp.eq.s32.totalorder %s15, 0
    %p99 = por %p97, %p98
    %p100 = scmp.ne.s32.totalorder %s86, %s87
    %p101 = scmp.eq.s32.totalorder %s16, 3
    %p102 = por %p100, %p101
    %p104 = scmp.ne.s32.totalorder %s87, %s103
    %p105 = scmp.eq.s32.totalorder %s16, 0
    %p106 = por %p104, %p105
    %p107 = scmp.le.s32.totalorder 1, %s10
    %p108 = scmp.lt.s32.totalorder %s10, 5
    %p109 = pnand %p107, %p108
    %p110 = pneg %p109
    // Predicated region
    $region9: #{repux_block_forward.2} parent=5 // pred_check
      _
    $region10: #{repux_block_forward.2} parent=5 // pred_check_branch
      %112 = sbr.rel (%p109) target = $region12
    $region11: #{repux_block_forward.2} parent=5 // pred_region
      %s113 = ssub.s32 %s10, 1
      // Predicated region
      $region13: #{repux_block_forward.2} parent=11 // pred_check
        %p114 = pneg %p43
      $region14: #{repux_block_forward.2} parent=11 // pred_check_branch
        %116 = sbr.rel (%p114) target = $region16
      $region15: #{repux_block_forward.2} parent=11 // pred_region
        _
      $region16: #{repux_block_forward.2} parent=11 // pred_fallthru
        _
    $region12: #{repux_block_forward.2} parent=5 // pred_fallthru
      _
    %p117 = scmp.lt.s32.totalorder %s10, 4
    // Predicated region
    $region17: #{repux_block_forward.2} parent=5 // pred_check
      %p118 = pneg %p117
    $region18: #{repux_block_forward.2} parent=5 // pred_check_branch
      %120 = sbr.rel (%p118) target = $region20
    $region19: #{repux_block_forward.2} parent=5 // pred_region
      _
    $region20: #{repux_block_forward.2} parent=5 // pred_fallthru
      _
    %p121 = scmp.le.s32.totalorder 1, %s10
    %p122 = scmp.lt.s32.totalorder %s10, 5
    %p123 = pnand %p121, %p122
    %p124 = pneg %p123
    // Predicated region
    $region21: #{repux_block_forward.2} parent=5 // pred_check
      _
    $region22: #{repux_block_forward.2} parent=5 // pred_check_branch
      %126 = sbr.rel (%p123) target = $region24
    $region23: #{repux_block_forward.2} parent=5 // pred_region
      %s127 = ssub.s32 %s10, 1
      %p128 = pneg %p43
      %p129 = pneg %p40
      %p130 = pneg %p71
      %p131 = pneg %p68
      %s132 = smul.u32 4, %s20
      %p133 = scmp.lt.s32.totalorder %s19, 1
      %s134 = scalar_select %p133, %s19, 1
      %p135 = scmp.lt.s32.totalorder %s132, 7
      %s136 = scalar_select %p135, %s132, 7
      %s137 = smul.addr %s136, 8
      %s138 = smul.addr %s134, 64
      %s139 = sadd.s32 %s137, %s138
      %s140 = smul.addr %s139, 8
      %s141 = scalar_lea.vmem %s2, %s140
      %p142 = pneg %p99
      %p143 = pneg %p96
      %p144 = scmp.lt.s32.totalorder %s19, 1
      %s145 = scalar_select %p144, %s19, 1
      %p146 = scmp.lt.s32.totalorder %s20, 1
      %s147 = scalar_select %p146, %s20, 1
      %s148 = smul.addr %s145, 2
      %s149 = sadd.s32 %s147, %s148
      %s150 = smul.addr %s149, 8
      %s151 = scalar_lea.vmem %s3, %s150
      %s152 = smul.u32 4, %s20
      %p153 = scmp.lt.s32.totalorder %s19, 1
      %s154 = scalar_select %p153, %s19, 1
      %p155 = scmp.lt.s32.totalorder %s152, 7
      %s156 = scalar_select %p155, %s152, 7
      %s157 = smul.addr %s156, 8
      %s158 = smul.addr %s154, 64
      %s159 = sadd.s32 %s157, %s158
      %s160 = smul.addr %s159, 8
      %s161 = scalar_lea.vmem %s2, %s160
      %s162 = smul.u32 4, %s20
      %p163 = scmp.lt.s32.totalorder %s19, 1
      %s164 = scalar_select %p163, %s19, 1
      %p165 = scmp.lt.s32.totalorder %s20, 1
      %s166 = scalar_select %p165, %s20, 1
      %s167 = smul.addr %s164, 2
      %s168 = sadd.s32 %s166, %s167
      %s169 = smul.addr %s168, 8
      %s170 = scalar_lea.vmem %s3, %s169
      %p171 = scmp.lt.s32.totalorder %s20, 0
      %s172 = ssub.s32 0, %s20
      %s173 = scalar_select %p171, %s172, %s20
      %s174 = sand.u32 %s173, 1
      %s175 = ssub.s32 0, %s174
      %s176 = scalar_select %p171, %s175, %s174
      %p177 = scmp.ne.s32.totalorder %s176, 0
      %p178 = scmp.lt.s32.totalorder %s176, 0
      %p179 = pnand %p178, %p177
      %p180 = pneg %p179
      %s181 = sadd.s32 %s176, 2
      %s182 = scalar_select %p180, %s181, %s176
      %p183 = scmp.eq.s32.totalorder %s20, 0
      // Predicated region
      $region25: #{repux_block_forward.2} parent=23 // pred_check
        %p184 = pneg %p183
      $region26: #{repux_block_forward.2} parent=23 // pred_check_branch
        %186 = sbr.rel (%p184) target = $region28
      $region27: #{repux_block_forward.2} parent=23 // pred_region
        %s187 = smul.u32 0, 160
        %s188 = smul.u32 %s19, 1600
        %s189 = sadd.s32 %s187, %s188
        %s190 = scalar_lea.vmem %s0, %s189
        %s191 = smul.u32 %s182, 960
        %s192 = scalar_lea.vmem [#allocation2], %s191
        %s193 = scalar_lea.sflag [#allocation3], %s182
        %p195 = scmp.lt.u32.totalorder 960, 8
        %p196 = pneg %p195
        // Predicated region
        $region29: #{repux_block_forward.2} parent=27 // pred_check
          _
        $region30: #{repux_block_forward.2} parent=27 // pred_check_branch
          %198 = sbr.rel (%p195) target = $region32
        $region31: #{repux_block_forward.2} parent=27 // pred_region
          %s214 = sand.u32 960, 7
          %p215 = scmp.eq.s32.totalorder %s214, 0
          // Predicated region
          $region44: #{repux_block_forward.2} parent=31 // pred_check
            %p216 = pneg %p215
          $region45: #{repux_block_forward.2} parent=31 // pred_check_branch
            %218 = sbr.rel (%p216) target = $region47
          $region46: #{repux_block_forward.2} parent=31 // pred_region
            loop: start=0, step=1, limit=1
            $region48: #{repux_block_forward.2} parent=46 // loop_pre_header
              _
            $region49: #{repux_block_forward.2} parent=46 // loop_header
              %s220 = sphi 0, %s224
              %p221 = scmp.ge.s32.totalorder %s220, 1
              %s225 = sphi %s190, %s190
              %s226 = sphi %s192, %s192
            $region50: #{repux_block_forward.2} parent=46 // loop_header_branch
              %223 = sbr.rel (%p221) target = $region54
            $region51: #{repux_block_forward.2} parent=46 // loop_body
              %v227 = vld [vmem:[%s225] sm:$0xff]
              %228 = vst [vmem:[%s226] sm:$0xff] %v227
              %v229 = vld [vmem:[%s225 + $0x8] sm:$0xff]
              %230 = vst [vmem:[%s226 + $0x8] sm:$0xff] %v229
              %v231 = vld [vmem:[%s225 + $0x10] sm:$0xff]
              %232 = vst [vmem:[%s226 + $0x10] sm:$0xff] %v231
              %v233 = vld [vmem:[%s225 + $0x18] sm:$0xff]
              %234 = vst [vmem:[%s226 + $0x18] sm:$0xff] %v233
              %v235 = vld [vmem:[%s225 + $0x20] sm:$0xff]
              %236 = vst [vmem:[%s226 + $0x20] sm:$0xff] %v235
              %v237 = vld [vmem:[%s225 + $0x28] sm:$0xff]
              %238 = vst [vmem:[%s226 + $0x28] sm:$0xff] %v237
              %v239 = vld [vmem:[%s225 + $0x30] sm:$0xff]
              %240 = vst [vmem:[%s226 + $0x30] sm:$0xff] %v239
              %v241 = vld [vmem:[%s225 + $0x38] sm:$0xff]
              %242 = vst [vmem:[%s226 + $0x38] sm:$0xff] %v241
              %v243 = vld [vmem:[%s225 + $0x40] sm:$0xff]
              %244 = vst [vmem:[%s226 + $0x40] sm:$0xff] %v243
              %v245 = vld [vmem:[%s225 + $0x48] sm:$0xff]
              %246 = vst [vmem:[%s226 + $0x48] sm:$0xff] %v245
              %v247 = vld [vmem:[%s225 + $0x50] sm:$0xff]
              %248 = vst [vmem:[%s226 + $0x50] sm:$0xff] %v247
              %v249 = vld [vmem:[%s225 + $0x58] sm:$0xff]
              %250 = vst [vmem:[%s226 + $0x58] sm:$0xff] %v249
              %v251 = vld [vmem:[%s225 + $0x60] sm:$0xff]
              %252 = vst [vmem:[%s226 + $0x60] sm:$0xff] %v251
              %v253 = vld [vmem:[%s225 + $0x68] sm:$0xff]
              %254 = vst [vmem:[%s226 + $0x68] sm:$0xff] %v253
              %v255 = vld [vmem:[%s225 + $0x70] sm:$0xff]
              %256 = vst [vmem:[%s226 + $0x70] sm:$0xff] %v255
              %v257 = vld [vmem:[%s225 + $0x78] sm:$0xff]
              %258 = vst [vmem:[%s226 + $0x78] sm:$0xff] %v257
              %v259 = vld [vmem:[%s225 + $0x80] sm:$0xff]
              %260 = vst [vmem:[%s226 + $0x80] sm:$0xff] %v259
              %v261 = vld [vmem:[%s225 + $0x88] sm:$0xff]
              %262 = vst [vmem:[%s226 + $0x88] sm:$0xff] %v261
              %v263 = vld [vmem:[%s225 + $0x90] sm:$0xff]
              %264 = vst [vmem:[%s226 + $0x90] sm:$0xff] %v263
              %v265 = vld [vmem:[%s225 + $0x98] sm:$0xff]
              %266 = vst [vmem:[%s226 + $0x98] sm:$0xff] %v265
              %v267 = vld [vmem:[%s225 + $0xa0] sm:$0xff]
              %268 = vst [vmem:[%s226 + $0xa0] sm:$0xff] %v267
              %v269 = vld [vmem:[%s225 + $0xa8] sm:$0xff]
              %270 = vst [vmem:[%s226 + $0xa8] sm:$0xff] %v269
              %v271 = vld [vmem:[%s225 + $0xb0] sm:$0xff]
              %272 = vst [vmem:[%s226 + $0xb0] sm:$0xff] %v271
              %v273 = vld [vmem:[%s225 + $0xb8] sm:$0xff]
              %274 = vst [vmem:[%s226 + $0xb8] sm:$0xff] %v273
              %v275 = vld [vmem:[%s225 + $0xc0] sm:$0xff]
              %276 = vst [vmem:[%s226 + $0xc0] sm:$0xff] %v275
              %v277 = vld [vmem:[%s225 + $0xc8] sm:$0xff]
              %278 = vst [vmem:[%s226 + $0xc8] sm:$0xff] %v277
              %v279 = vld [vmem:[%s225 + $0xd0] sm:$0xff]
              %280 = vst [vmem:[%s226 + $0xd0] sm:$0xff] %v279
              %v281 = vld [vmem:[%s225 + $0xd8] sm:$0xff]
              %282 = vst [vmem:[%s226 + $0xd8] sm:$0xff] %v281
              %v283 = vld [vmem:[%s225 + $0xe0] sm:$0xff]
              %284 = vst [vmem:[%s226 + $0xe0] sm:$0xff] %v283
              %v285 = vld [vmem:[%s225 + $0xe8] sm:$0xff]
              %286 = vst [vmem:[%s226 + $0xe8] sm:$0xff] %v285
              %v287 = vld [vmem:[%s225 + $0xf0] sm:$0xff]
              %288 = vst [vmem:[%s226 + $0xf0] sm:$0xff] %v287
              %v289 = vld [vmem:[%s225 + $0xf8] sm:$0xff]
              %290 = vst [vmem:[%s226 + $0xf8] sm:$0xff] %v289
              %v291 = vld [vmem:[%s225 + $0x100] sm:$0xff]
              %292 = vst [vmem:[%s226 + $0x100] sm:$0xff] %v291
              %v293 = vld [vmem:[%s225 + $0x108] sm:$0xff]
              %294 = vst [vmem:[%s226 + $0x108] sm:$0xff] %v293
              %v295 = vld [vmem:[%s225 + $0x110] sm:$0xff]
              %296 = vst [vmem:[%s226 + $0x110] sm:$0xff] %v295
              %v297 = vld [vmem:[%s225 + $0x118] sm:$0xff]
              %298 = vst [vmem:[%s226 + $0x118] sm:$0xff] %v297
              %v299 = vld [vmem:[%s225 + $0x120] sm:$0xff]
              %300 = vst [vmem:[%s226 + $0x120] sm:$0xff] %v299
              %v301 = vld [vmem:[%s225 + $0x128] sm:$0xff]
              %302 = vst [vmem:[%s226 + $0x128] sm:$0xff] %v301
              %v303 = vld [vmem:[%s225 + $0x130] sm:$0xff]
              %304 = vst [vmem:[%s226 + $0x130] sm:$0xff] %v303
              %v305 = vld [vmem:[%s225 + $0x138] sm:$0xff]
              %306 = vst [vmem:[%s226 + $0x138] sm:$0xff] %v305
              %v307 = vld [vmem:[%s225 + $0x140] sm:$0xff]
              %308 = vst [vmem:[%s226 + $0x140] sm:$0xff] %v307
              %v309 = vld [vmem:[%s225 + $0x148] sm:$0xff]
              %310 = vst [vmem:[%s226 + $0x148] sm:$0xff] %v309
              %v311 = vld [vmem:[%s225 + $0x150] sm:$0xff]
              %312 = vst [vmem:[%s226 + $0x150] sm:$0xff] %v311
              %v313 = vld [vmem:[%s225 + $0x158] sm:$0xff]
              %314 = vst [vmem:[%s226 + $0x158] sm:$0xff] %v313
              %v315 = vld [vmem:[%s225 + $0x160] sm:$0xff]
              %316 = vst [vmem:[%s226 + $0x160] sm:$0xff] %v315
              %v317 = vld [vmem:[%s225 + $0x168] sm:$0xff]
              %318 = vst [vmem:[%s226 + $0x168] sm:$0xff] %v317
              %v319 = vld [vmem:[%s225 + $0x170] sm:$0xff]
              %320 = vst [vmem:[%s226 + $0x170] sm:$0xff] %v319
              %v321 = vld [vmem:[%s225 + $0x178] sm:$0xff]
              %322 = vst [vmem:[%s226 + $0x178] sm:$0xff] %v321
              %v323 = vld [vmem:[%s225 + $0x180] sm:$0xff]
              %324 = vst [vmem:[%s226 + $0x180] sm:$0xff] %v323
              %v325 = vld [vmem:[%s225 + $0x188] sm:$0xff]
              %326 = vst [vmem:[%s226 + $0x188] sm:$0xff] %v325
              %v327 = vld [vmem:[%s225 + $0x190] sm:$0xff]
              %328 = vst [vmem:[%s226 + $0x190] sm:$0xff] %v327
              %v329 = vld [vmem:[%s225 + $0x198] sm:$0xff]
              %330 = vst [vmem:[%s226 + $0x198] sm:$0xff] %v329
              %v331 = vld [vmem:[%s225 + $0x1a0] sm:$0xff]
              %332 = vst [vmem:[%s226 + $0x1a0] sm:$0xff] %v331
              %v333 = vld [vmem:[%s225 + $0x1a8] sm:$0xff]
              %334 = vst [vmem:[%s226 + $0x1a8] sm:$0xff] %v333
              %v335 = vld [vmem:[%s225 + $0x1b0] sm:$0xff]
              %336 = vst [vmem:[%s226 + $0x1b0] sm:$0xff] %v335
              %v337 = vld [vmem:[%s225 + $0x1b8] sm:$0xff]
              %338 = vst [vmem:[%s226 + $0x1b8] sm:$0xff] %v337
              %v339 = vld [vmem:[%s225 + $0x1c0] sm:$0xff]
              %340 = vst [vmem:[%s226 + $0x1c0] sm:$0xff] %v339
              %v341 = vld [vmem:[%s225 + $0x1c8] sm:$0xff]
              %342 = vst [vmem:[%s226 + $0x1c8] sm:$0xff] %v341
              %v343 = vld [vmem:[%s225 + $0x1d0] sm:$0xff]
              %344 = vst [vmem:[%s226 + $0x1d0] sm:$0xff] %v343
              %v345 = vld [vmem:[%s225 + $0x1d8] sm:$0xff]
              %346 = vst [vmem:[%s226 + $0x1d8] sm:$0xff] %v345
              %v347 = vld [vmem:[%s225 + $0x1e0] sm:$0xff]
              %348 = vst [vmem:[%s226 + $0x1e0] sm:$0xff] %v347
              %v349 = vld [vmem:[%s225 + $0x1e8] sm:$0xff]
              %350 = vst [vmem:[%s226 + $0x1e8] sm:$0xff] %v349
              %v351 = vld [vmem:[%s225 + $0x1f0] sm:$0xff]
              %352 = vst [vmem:[%s226 + $0x1f0] sm:$0xff] %v351
              %v353 = vld [vmem:[%s225 + $0x1f8] sm:$0xff]
              %354 = vst [vmem:[%s226 + $0x1f8] sm:$0xff] %v353
              %v355 = vld [vmem:[%s225 + $0x200] sm:$0xff]
              %356 = vst [vmem:[%s226 + $0x200] sm:$0xff] %v355
              %v357 = vld [vmem:[%s225 + $0x208] sm:$0xff]
              %358 = vst [vmem:[%s226 + $0x208] sm:$0xff] %v357
              %v359 = vld [vmem:[%s225 + $0x210] sm:$0xff]
              %360 = vst [vmem:[%s226 + $0x210] sm:$0xff] %v359
              %v361 = vld [vmem:[%s225 + $0x218] sm:$0xff]
              %362 = vst [vmem:[%s226 + $0x218] sm:$0xff] %v361
              %v363 = vld [vmem:[%s225 + $0x220] sm:$0xff]
              %364 = vst [vmem:[%s226 + $0x220] sm:$0xff] %v363
              %v365 = vld [vmem:[%s225 + $0x228] sm:$0xff]
              %366 = vst [vmem:[%s226 + $0x228] sm:$0xff] %v365
              %v367 = vld [vmem:[%s225 + $0x230] sm:$0xff]
              %368 = vst [vmem:[%s226 + $0x230] sm:$0xff] %v367
              %v369 = vld [vmem:[%s225 + $0x238] sm:$0xff]
              %370 = vst [vmem:[%s226 + $0x238] sm:$0xff] %v369
              %v371 = vld [vmem:[%s225 + $0x240] sm:$0xff]
              %372 = vst [vmem:[%s226 + $0x240] sm:$0xff] %v371
              %v373 = vld [vmem:[%s225 + $0x248] sm:$0xff]
              %374 = vst [vmem:[%s226 + $0x248] sm:$0xff] %v373
              %v375 = vld [vmem:[%s225 + $0x250] sm:$0xff]
              %376 = vst [vmem:[%s226 + $0x250] sm:$0xff] %v375
              %v377 = vld [vmem:[%s225 + $0x258] sm:$0xff]
              %378 = vst [vmem:[%s226 + $0x258] sm:$0xff] %v377
              %v379 = vld [vmem:[%s225 + $0x260] sm:$0xff]
              %380 = vst [vmem:[%s226 + $0x260] sm:$0xff] %v379
              %v381 = vld [vmem:[%s225 + $0x268] sm:$0xff]
              %382 = vst [vmem:[%s226 + $0x268] sm:$0xff] %v381
              %v383 = vld [vmem:[%s225 + $0x270] sm:$0xff]
              %384 = vst [vmem:[%s226 + $0x270] sm:$0xff] %v383
              %v385 = vld [vmem:[%s225 + $0x278] sm:$0xff]
              %386 = vst [vmem:[%s226 + $0x278] sm:$0xff] %v385
              %v387 = vld [vmem:[%s225 + $0x280] sm:$0xff]
              %388 = vst [vmem:[%s226 + $0x280] sm:$0xff] %v387
              %v389 = vld [vmem:[%s225 + $0x288] sm:$0xff]
              %390 = vst [vmem:[%s226 + $0x288] sm:$0xff] %v389
              %v391 = vld [vmem:[%s225 + $0x290] sm:$0xff]
              %392 = vst [vmem:[%s226 + $0x290] sm:$0xff] %v391
              %v393 = vld [vmem:[%s225 + $0x298] sm:$0xff]
              %394 = vst [vmem:[%s226 + $0x298] sm:$0xff] %v393
              %v395 = vld [vmem:[%s225 + $0x2a0] sm:$0xff]
              %396 = vst [vmem:[%s226 + $0x2a0] sm:$0xff] %v395
              %v397 = vld [vmem:[%s225 + $0x2a8] sm:$0xff]
              %398 = vst [vmem:[%s226 + $0x2a8] sm:$0xff] %v397
              %v399 = vld [vmem:[%s225 + $0x2b0] sm:$0xff]
              %400 = vst [vmem:[%s226 + $0x2b0] sm:$0xff] %v399
              %v401 = vld [vmem:[%s225 + $0x2b8] sm:$0xff]
              %402 = vst [vmem:[%s226 + $0x2b8] sm:$0xff] %v401
              %v403 = vld [vmem:[%s225 + $0x2c0] sm:$0xff]
              %404 = vst [vmem:[%s226 + $0x2c0] sm:$0xff] %v403
              %v405 = vld [vmem:[%s225 + $0x2c8] sm:$0xff]
              %406 = vst [vmem:[%s226 + $0x2c8] sm:$0xff] %v405
              %v407 = vld [vmem:[%s225 + $0x2d0] sm:$0xff]
              %408 = vst [vmem:[%s226 + $0x2d0] sm:$0xff] %v407
              %v409 = vld [vmem:[%s225 + $0x2d8] sm:$0xff]
              %410 = vst [vmem:[%s226 + $0x2d8] sm:$0xff] %v409
              %v411 = vld [vmem:[%s225 + $0x2e0] sm:$0xff]
              %412 = vst [vmem:[%s226 + $0x2e0] sm:$0xff] %v411
              %v413 = vld [vmem:[%s225 + $0x2e8] sm:$0xff]
              %414 = vst [vmem:[%s226 + $0x2e8] sm:$0xff] %v413
              %v415 = vld [vmem:[%s225 + $0x2f0] sm:$0xff]
              %416 = vst [vmem:[%s226 + $0x2f0] sm:$0xff] %v415
              %v417 = vld [vmem:[%s225 + $0x2f8] sm:$0xff]
              %418 = vst [vmem:[%s226 + $0x2f8] sm:$0xff] %v417
              %v419 = vld [vmem:[%s225 + $0x300] sm:$0xff]
              %420 = vst [vmem:[%s226 + $0x300] sm:$0xff] %v419
              %v421 = vld [vmem:[%s225 + $0x308] sm:$0xff]
              %422 = vst [vmem:[%s226 + $0x308] sm:$0xff] %v421
              %v423 = vld [vmem:[%s225 + $0x310] sm:$0xff]
              %424 = vst [vmem:[%s226 + $0x310] sm:$0xff] %v423
              %v425 = vld [vmem:[%s225 + $0x318] sm:$0xff]
              %426 = vst [vmem:[%s226 + $0x318] sm:$0xff] %v425
              %v427 = vld [vmem:[%s225 + $0x320] sm:$0xff]
              %428 = vst [vmem:[%s226 + $0x320] sm:$0xff] %v427
              %v429 = vld [vmem:[%s225 + $0x328] sm:$0xff]
              %430 = vst [vmem:[%s226 + $0x328] sm:$0xff] %v429
              %v431 = vld [vmem:[%s225 + $0x330] sm:$0xff]
              %432 = vst [vmem:[%s226 + $0x330] sm:$0xff] %v431
              %v433 = vld [vmem:[%s225 + $0x338] sm:$0xff]
              %434 = vst [vmem:[%s226 + $0x338] sm:$0xff] %v433
              %v435 = vld [vmem:[%s225 + $0x340] sm:$0xff]
              %436 = vst [vmem:[%s226 + $0x340] sm:$0xff] %v435
              %v437 = vld [vmem:[%s225 + $0x348] sm:$0xff]
              %438 = vst [vmem:[%s226 + $0x348] sm:$0xff] %v437
              %v439 = vld [vmem:[%s225 + $0x350] sm:$0xff]
              %440 = vst [vmem:[%s226 + $0x350] sm:$0xff] %v439
              %v441 = vld [vmem:[%s225 + $0x358] sm:$0xff]
              %442 = vst [vmem:[%s226 + $0x358] sm:$0xff] %v441
              %v443 = vld [vmem:[%s225 + $0x360] sm:$0xff]
              %444 = vst [vmem:[%s226 + $0x360] sm:$0xff] %v443
              %v445 = vld [vmem:[%s225 + $0x368] sm:$0xff]
              %446 = vst [vmem:[%s226 + $0x368] sm:$0xff] %v445
              %v447 = vld [vmem:[%s225 + $0x370] sm:$0xff]
              %448 = vst [vmem:[%s226 + $0x370] sm:$0xff] %v447
              %v449 = vld [vmem:[%s225 + $0x378] sm:$0xff]
              %450 = vst [vmem:[%s226 + $0x378] sm:$0xff] %v449
              %v451 = vld [vmem:[%s225 + $0x380] sm:$0xff]
              %452 = vst [vmem:[%s226 + $0x380] sm:$0xff] %v451
              %v453 = vld [vmem:[%s225 + $0x388] sm:$0xff]
              %454 = vst [vmem:[%s226 + $0x388] sm:$0xff] %v453
              %v455 = vld [vmem:[%s225 + $0x390] sm:$0xff]
              %456 = vst [vmem:[%s226 + $0x390] sm:$0xff] %v455
              %v457 = vld [vmem:[%s225 + $0x398] sm:$0xff]
              %458 = vst [vmem:[%s226 + $0x398] sm:$0xff] %v457
              %v459 = vld [vmem:[%s225 + $0x3a0] sm:$0xff]
              %460 = vst [vmem:[%s226 + $0x3a0] sm:$0xff] %v459
              %v461 = vld [vmem:[%s225 + $0x3a8] sm:$0xff]
              %462 = vst [vmem:[%s226 + $0x3a8] sm:$0xff] %v461
              %v463 = vld [vmem:[%s225 + $0x3b0] sm:$0xff]
              %464 = vst [vmem:[%s226 + $0x3b0] sm:$0xff] %v463
              %v465 = vld [vmem:[%s225 + $0x3b8] sm:$0xff]
              %466 = vst [vmem:[%s226 + $0x3b8] sm:$0xff] %v465
            $region52: #{repux_block_forward.2} parent=46 // loop_footer
              %s224 = sadd.s32 1, %s220
            $region53: #{repux_block_forward.2} parent=46 // loop_footer_branch
              %219 = sbr.rel target = $region49
            $region54: #{repux_block_forward.2} parent=46 // loop_exit
              _
          $region47: #{repux_block_forward.2} parent=31 // pred_fallthru
            _
          %p467 = pneg %p215
          // Predicated region
          $region55: #{repux_block_forward.2} parent=31 // pred_check
            _
          $region56: #{repux_block_forward.2} parent=31 // pred_check_branch
            %469 = sbr.rel (%p215) target = $region58
          $region57: #{repux_block_forward.2} parent=31 // pred_region
            %s470 = sand.u32 960, 7
          $region58: #{repux_block_forward.2} parent=31 // pred_fallthru
            _
        $region32: #{repux_block_forward.2} parent=27 // pred_fallthru
          _
        // Predicated region
        $region33: #{repux_block_forward.2} parent=27 // pred_check
          %p199 = pneg %p195
        $region34: #{repux_block_forward.2} parent=27 // pred_check_branch
          %201 = sbr.rel (%p199) target = $region36
        $region35: #{repux_block_forward.2} parent=27 // pred_region
          %s202 = sshll.u32 1, 960
          %s203 = ssub.s32 %s202, 1
          loop: start=0, step=1, limit=1
          $region37: #{repux_block_forward.2} parent=35 // loop_pre_header
            _
          $region38: #{repux_block_forward.2} parent=35 // loop_header
            %s205 = sphi 0, %s209
            %p206 = scmp.ge.s32.totalorder %s205, 1
            %s210 = sphi %s190, %s190
            %s211 = sphi %s192, %s192
          $region39: #{repux_block_forward.2} parent=35 // loop_header_branch
            %208 = sbr.rel (%p206) target = $region43
          $region40: #{repux_block_forward.2} parent=35 // loop_body
            %v212 = vld [vmem:[%s210] sm:%s203]
            %213 = vst [vmem:[%s211] sm:%s203] %v212
          $region41: #{repux_block_forward.2} parent=35 // loop_footer
            %s209 = sadd.s32 1, %s205
          $region42: #{repux_block_forward.2} parent=35 // loop_footer_branch
            %204 = sbr.rel target = $region38
          $region43: #{repux_block_forward.2} parent=35 // loop_exit
            _
        $region36: #{repux_block_forward.2} parent=27 // pred_fallthru
          _
        // Predicated region
        $region59: #{repux_block_forward.2} parent=27 // pred_check
          _
        $region60: #{repux_block_forward.2} parent=27 // pred_check_branch
          %473 = sbr.rel (0) target = $region62
        $region61: #{repux_block_forward.2} parent=27 // pred_region
          %474 = vsyncadd %s193, 15360
        $region62: #{repux_block_forward.2} parent=27 // pred_fallthru
          _
      $region28: #{repux_block_forward.2} parent=23 // pred_fallthru
        _
      %s475 = smul.u32 %s182, 960
      %s476 = scalar_lea.vmem [#allocation2], %s475
      %s477 = scalar_lea.sflag [#allocation3], %s182
      %s478 = smul.u32 6, 10
      %s479 = smul.u32 %s478, 16
      %s480 = smul.u32 %s479, 1
      %s481 = sshll.u32 %s480, 4
      %482 = dma.done %s477, %s481
      %s483 = sadd.s32 %s20, 1
      %p484 = scmp.lt.s32.totalorder %s483, 2
      // Predicated region
      $region63: #{repux_block_forward.2} parent=23 // pred_check
        %p485 = pneg %p484
      $region64: #{repux_block_forward.2} parent=23 // pred_check_branch
        %487 = sbr.rel (%p485) target = $region66
      $region65: #{repux_block_forward.2} parent=23 // pred_region
        %s488 = ssub.s32 1, %s182
        %s489 = smul.u32 %s483, 4
        %s490 = smul.u32 %s489, 160
        %s491 = smul.u32 %s19, 1600
        %s492 = sadd.s32 %s490, %s491
        %s493 = scalar_lea.vmem %s0, %s492
        %s494 = smul.u32 %s488, 960
        %s495 = scalar_lea.vmem [#allocation2], %s494
        %s496 = scalar_lea.sflag [#allocation3], %s488
        %p498 = scmp.lt.u32.totalorder 960, 8
        %p499 = pneg %p498
        // Predicated region
        $region67: #{repux_block_forward.2} parent=65 // pred_check
          _
        $region68: #{repux_block_forward.2} parent=65 // pred_check_branch
          %501 = sbr.rel (%p498) target = $region70
        $region69: #{repux_block_forward.2} parent=65 // pred_region
          %s517 = sand.u32 960, 7
          %p518 = scmp.eq.s32.totalorder %s517, 0
          // Predicated region
          $region82: #{repux_block_forward.2} parent=69 // pred_check
            %p519 = pneg %p518
          $region83: #{repux_block_forward.2} parent=69 // pred_check_branch
            %521 = sbr.rel (%p519) target = $region85
          $region84: #{repux_block_forward.2} parent=69 // pred_region
            loop: start=0, step=1, limit=1
            $region86: #{repux_block_forward.2} parent=84 // loop_pre_header
              _
            $region87: #{repux_block_forward.2} parent=84 // loop_header
              %s523 = sphi 0, %s527
              %p524 = scmp.ge.s32.totalorder %s523, 1
              %s528 = sphi %s493, %s493
              %s529 = sphi %s495, %s495
            $region88: #{repux_block_forward.2} parent=84 // loop_header_branch
              %526 = sbr.rel (%p524) target = $region92
            $region89: #{repux_block_forward.2} parent=84 // loop_body
              %v530 = vld [vmem:[%s528] sm:$0xff]
              %531 = vst [vmem:[%s529] sm:$0xff] %v530
              %v532 = vld [vmem:[%s528 + $0x8] sm:$0xff]
              %533 = vst [vmem:[%s529 + $0x8] sm:$0xff] %v532
              %v534 = vld [vmem:[%s528 + $0x10] sm:$0xff]
              %535 = vst [vmem:[%s529 + $0x10] sm:$0xff] %v534
              %v536 = vld [vmem:[%s528 + $0x18] sm:$0xff]
              %537 = vst [vmem:[%s529 + $0x18] sm:$0xff] %v536
              %v538 = vld [vmem:[%s528 + $0x20] sm:$0xff]
              %539 = vst [vmem:[%s529 + $0x20] sm:$0xff] %v538
              %v540 = vld [vmem:[%s528 + $0x28] sm:$0xff]
              %541 = vst [vmem:[%s529 + $0x28] sm:$0xff] %v540
              %v542 = vld [vmem:[%s528 + $0x30] sm:$0xff]
              %543 = vst [vmem:[%s529 + $0x30] sm:$0xff] %v542
              %v544 = vld [vmem:[%s528 + $0x38] sm:$0xff]
              %545 = vst [vmem:[%s529 + $0x38] sm:$0xff] %v544
              %v546 = vld [vmem:[%s528 + $0x40] sm:$0xff]
              %547 = vst [vmem:[%s529 + $0x40] sm:$0xff] %v546
              %v548 = vld [vmem:[%s528 + $0x48] sm:$0xff]
              %549 = vst [vmem:[%s529 + $0x48] sm:$0xff] %v548
              %v550 = vld [vmem:[%s528 + $0x50] sm:$0xff]
              %551 = vst [vmem:[%s529 + $0x50] sm:$0xff] %v550
              %v552 = vld [vmem:[%s528 + $0x58] sm:$0xff]
              %553 = vst [vmem:[%s529 + $0x58] sm:$0xff] %v552
              %v554 = vld [vmem:[%s528 + $0x60] sm:$0xff]
              %555 = vst [vmem:[%s529 + $0x60] sm:$0xff] %v554
              %v556 = vld [vmem:[%s528 + $0x68] sm:$0xff]
              %557 = vst [vmem:[%s529 + $0x68] sm:$0xff] %v556
              %v558 = vld [vmem:[%s528 + $0x70] sm:$0xff]
              %559 = vst [vmem:[%s529 + $0x70] sm:$0xff] %v558
              %v560 = vld [vmem:[%s528 + $0x78] sm:$0xff]
              %561 = vst [vmem:[%s529 + $0x78] sm:$0xff] %v560
              %v562 = vld [vmem:[%s528 + $0x80] sm:$0xff]
              %563 = vst [vmem:[%s529 + $0x80] sm:$0xff] %v562
              %v564 = vld [vmem:[%s528 + $0x88] sm:$0xff]
              %565 = vst [vmem:[%s529 + $0x88] sm:$0xff] %v564
              %v566 = vld [vmem:[%s528 + $0x90] sm:$0xff]
              %567 = vst [vmem:[%s529 + $0x90] sm:$0xff] %v566
              %v568 = vld [vmem:[%s528 + $0x98] sm:$0xff]
              %569 = vst [vmem:[%s529 + $0x98] sm:$0xff] %v568
              %v570 = vld [vmem:[%s528 + $0xa0] sm:$0xff]
              %571 = vst [vmem:[%s529 + $0xa0] sm:$0xff] %v570
              %v572 = vld [vmem:[%s528 + $0xa8] sm:$0xff]
              %573 = vst [vmem:[%s529 + $0xa8] sm:$0xff] %v572
              %v574 = vld [vmem:[%s528 + $0xb0] sm:$0xff]
              %575 = vst [vmem:[%s529 + $0xb0] sm:$0xff] %v574
              %v576 = vld [vmem:[%s528 + $0xb8] sm:$0xff]
              %577 = vst [vmem:[%s529 + $0xb8] sm:$0xff] %v576
              %v578 = vld [vmem:[%s528 + $0xc0] sm:$0xff]
              %579 = vst [vmem:[%s529 + $0xc0] sm:$0xff] %v578
              %v580 = vld [vmem:[%s528 + $0xc8] sm:$0xff]
              %581 = vst [vmem:[%s529 + $0xc8] sm:$0xff] %v580
              %v582 = vld [vmem:[%s528 + $0xd0] sm:$0xff]
              %583 = vst [vmem:[%s529 + $0xd0] sm:$0xff] %v582
              %v584 = vld [vmem:[%s528 + $0xd8] sm:$0xff]
              %585 = vst [vmem:[%s529 + $0xd8] sm:$0xff] %v584
              %v586 = vld [vmem:[%s528 + $0xe0] sm:$0xff]
              %587 = vst [vmem:[%s529 + $0xe0] sm:$0xff] %v586
              %v588 = vld [vmem:[%s528 + $0xe8] sm:$0xff]
              %589 = vst [vmem:[%s529 + $0xe8] sm:$0xff] %v588
              %v590 = vld [vmem:[%s528 + $0xf0] sm:$0xff]
              %591 = vst [vmem:[%s529 + $0xf0] sm:$0xff] %v590
              %v592 = vld [vmem:[%s528 + $0xf8] sm:$0xff]
              %593 = vst [vmem:[%s529 + $0xf8] sm:$0xff] %v592
              %v594 = vld [vmem:[%s528 + $0x100] sm:$0xff]
              %595 = vst [vmem:[%s529 + $0x100] sm:$0xff] %v594
              %v596 = vld [vmem:[%s528 + $0x108] sm:$0xff]
              %597 = vst [vmem:[%s529 + $0x108] sm:$0xff] %v596
              %v598 = vld [vmem:[%s528 + $0x110] sm:$0xff]
              %599 = vst [vmem:[%s529 + $0x110] sm:$0xff] %v598
              %v600 = vld [vmem:[%s528 + $0x118] sm:$0xff]
              %601 = vst [vmem:[%s529 + $0x118] sm:$0xff] %v600
              %v602 = vld [vmem:[%s528 + $0x120] sm:$0xff]
              %603 = vst [vmem:[%s529 + $0x120] sm:$0xff] %v602
              %v604 = vld [vmem:[%s528 + $0x128] sm:$0xff]
              %605 = vst [vmem:[%s529 + $0x128] sm:$0xff] %v604
              %v606 = vld [vmem:[%s528 + $0x130] sm:$0xff]
              %607 = vst [vmem:[%s529 + $0x130] sm:$0xff] %v606
              %v608 = vld [vmem:[%s528 + $0x138] sm:$0xff]
              %609 = vst [vmem:[%s529 + $0x138] sm:$0xff] %v608
              %v610 = vld [vmem:[%s528 + $0x140] sm:$0xff]
              %611 = vst [vmem:[%s529 + $0x140] sm:$0xff] %v610
              %v612 = vld [vmem:[%s528 + $0x148] sm:$0xff]
              %613 = vst [vmem:[%s529 + $0x148] sm:$0xff] %v612
              %v614 = vld [vmem:[%s528 + $0x150] sm:$0xff]
              %615 = vst [vmem:[%s529 + $0x150] sm:$0xff] %v614
              %v616 = vld [vmem:[%s528 + $0x158] sm:$0xff]
              %617 = vst [vmem:[%s529 + $0x158] sm:$0xff] %v616
              %v618 = vld [vmem:[%s528 + $0x160] sm:$0xff]
              %619 = vst [vmem:[%s529 + $0x160] sm:$0xff] %v618
              %v620 = vld [vmem:[%s528 + $0x168] sm:$0xff]
              %621 = vst [vmem:[%s529 + $0x168] sm:$0xff] %v620
              %v622 = vld [vmem:[%s528 + $0x170] sm:$0xff]
              %623 = vst [vmem:[%s529 + $0x170] sm:$0xff] %v622
              %v624 = vld [vmem:[%s528 + $0x178] sm:$0xff]
              %625 = vst [vmem:[%s529 + $0x178] sm:$0xff] %v624
              %v626 = vld [vmem:[%s528 + $0x180] sm:$0xff]
              %627 = vst [vmem:[%s529 + $0x180] sm:$0xff] %v626
              %v628 = vld [vmem:[%s528 + $0x188] sm:$0xff]
              %629 = vst [vmem:[%s529 + $0x188] sm:$0xff] %v628
              %v630 = vld [vmem:[%s528 + $0x190] sm:$0xff]
              %631 = vst [vmem:[%s529 + $0x190] sm:$0xff] %v630
              %v632 = vld [vmem:[%s528 + $0x198] sm:$0xff]
              %633 = vst [vmem:[%s529 + $0x198] sm:$0xff] %v632
              %v634 = vld [vmem:[%s528 + $0x1a0] sm:$0xff]
              %635 = vst [vmem:[%s529 + $0x1a0] sm:$0xff] %v634
              %v636 = vld [vmem:[%s528 + $0x1a8] sm:$0xff]
              %637 = vst [vmem:[%s529 + $0x1a8] sm:$0xff] %v636
              %v638 = vld [vmem:[%s528 + $0x1b0] sm:$0xff]
              %639 = vst [vmem:[%s529 + $0x1b0] sm:$0xff] %v638
              %v640 = vld [vmem:[%s528 + $0x1b8] sm:$0xff]
              %641 = vst [vmem:[%s529 + $0x1b8] sm:$0xff] %v640
              %v642 = vld [vmem:[%s528 + $0x1c0] sm:$0xff]
              %643 = vst [vmem:[%s529 + $0x1c0] sm:$0xff] %v642
              %v644 = vld [vmem:[%s528 + $0x1c8] sm:$0xff]
              %645 = vst [vmem:[%s529 + $0x1c8] sm:$0xff] %v644
              %v646 = vld [vmem:[%s528 + $0x1d0] sm:$0xff]
              %647 = vst [vmem:[%s529 + $0x1d0] sm:$0xff] %v646
              %v648 = vld [vmem:[%s528 + $0x1d8] sm:$0xff]
              %649 = vst [vmem:[%s529 + $0x1d8] sm:$0xff] %v648
              %v650 = vld [vmem:[%s528 + $0x1e0] sm:$0xff]
              %651 = vst [vmem:[%s529 + $0x1e0] sm:$0xff] %v650
              %v652 = vld [vmem:[%s528 + $0x1e8] sm:$0xff]
              %653 = vst [vmem:[%s529 + $0x1e8] sm:$0xff] %v652
              %v654 = vld [vmem:[%s528 + $0x1f0] sm:$0xff]
              %655 = vst [vmem:[%s529 + $0x1f0] sm:$0xff] %v654
              %v656 = vld [vmem:[%s528 + $0x1f8] sm:$0xff]
              %657 = vst [vmem:[%s529 + $0x1f8] sm:$0xff] %v656
              %v658 = vld [vmem:[%s528 + $0x200] sm:$0xff]
              %659 = vst [vmem:[%s529 + $0x200] sm:$0xff] %v658
              %v660 = vld [vmem:[%s528 + $0x208] sm:$0xff]
              %661 = vst [vmem:[%s529 + $0x208] sm:$0xff] %v660
              %v662 = vld [vmem:[%s528 + $0x210] sm:$0xff]
              %663 = vst [vmem:[%s529 + $0x210] sm:$0xff] %v662
              %v664 = vld [vmem:[%s528 + $0x218] sm:$0xff]
              %665 = vst [vmem:[%s529 + $0x218] sm:$0xff] %v664
              %v666 = vld [vmem:[%s528 + $0x220] sm:$0xff]
              %667 = vst [vmem:[%s529 + $0x220] sm:$0xff] %v666
              %v668 = vld [vmem:[%s528 + $0x228] sm:$0xff]
              %669 = vst [vmem:[%s529 + $0x228] sm:$0xff] %v668
              %v670 = vld [vmem:[%s528 + $0x230] sm:$0xff]
              %671 = vst [vmem:[%s529 + $0x230] sm:$0xff] %v670
              %v672 = vld [vmem:[%s528 + $0x238] sm:$0xff]
              %673 = vst [vmem:[%s529 + $0x238] sm:$0xff] %v672
              %v674 = vld [vmem:[%s528 + $0x240] sm:$0xff]
              %675 = vst [vmem:[%s529 + $0x240] sm:$0xff] %v674
              %v676 = vld [vmem:[%s528 + $0x248] sm:$0xff]
              %677 = vst [vmem:[%s529 + $0x248] sm:$0xff] %v676
              %v678 = vld [vmem:[%s528 + $0x250] sm:$0xff]
              %679 = vst [vmem:[%s529 + $0x250] sm:$0xff] %v678
              %v680 = vld [vmem:[%s528 + $0x258] sm:$0xff]
              %681 = vst [vmem:[%s529 + $0x258] sm:$0xff] %v680
              %v682 = vld [vmem:[%s528 + $0x260] sm:$0xff]
              %683 = vst [vmem:[%s529 + $0x260] sm:$0xff] %v682
              %v684 = vld [vmem:[%s528 + $0x268] sm:$0xff]
              %685 = vst [vmem:[%s529 + $0x268] sm:$0xff] %v684
              %v686 = vld [vmem:[%s528 + $0x270] sm:$0xff]
              %687 = vst [vmem:[%s529 + $0x270] sm:$0xff] %v686
              %v688 = vld [vmem:[%s528 + $0x278] sm:$0xff]
              %689 = vst [vmem:[%s529 + $0x278] sm:$0xff] %v688
              %v690 = vld [vmem:[%s528 + $0x280] sm:$0xff]
              %691 = vst [vmem:[%s529 + $0x280] sm:$0xff] %v690
              %v692 = vld [vmem:[%s528 + $0x288] sm:$0xff]
              %693 = vst [vmem:[%s529 + $0x288] sm:$0xff] %v692
              %v694 = vld [vmem:[%s528 + $0x290] sm:$0xff]
              %695 = vst [vmem:[%s529 + $0x290] sm:$0xff] %v694
              %v696 = vld [vmem:[%s528 + $0x298] sm:$0xff]
              %697 = vst [vmem:[%s529 + $0x298] sm:$0xff] %v696
              %v698 = vld [vmem:[%s528 + $0x2a0] sm:$0xff]
              %699 = vst [vmem:[%s529 + $0x2a0] sm:$0xff] %v698
              %v700 = vld [vmem:[%s528 + $0x2a8] sm:$0xff]
              %701 = vst [vmem:[%s529 + $0x2a8] sm:$0xff] %v700
              %v702 = vld [vmem:[%s528 + $0x2b0] sm:$0xff]
              %703 = vst [vmem:[%s529 + $0x2b0] sm:$0xff] %v702
              %v704 = vld [vmem:[%s528 + $0x2b8] sm:$0xff]
              %705 = vst [vmem:[%s529 + $0x2b8] sm:$0xff] %v704
              %v706 = vld [vmem:[%s528 + $0x2c0] sm:$0xff]
              %707 = vst [vmem:[%s529 + $0x2c0] sm:$0xff] %v706
              %v708 = vld [vmem:[%s528 + $0x2c8] sm:$0xff]
              %709 = vst [vmem:[%s529 + $0x2c8] sm:$0xff] %v708
              %v710 = vld [vmem:[%s528 + $0x2d0] sm:$0xff]
              %711 = vst [vmem:[%s529 + $0x2d0] sm:$0xff] %v710
              %v712 = vld [vmem:[%s528 + $0x2d8] sm:$0xff]
              %713 = vst [vmem:[%s529 + $0x2d8] sm:$0xff] %v712
              %v714 = vld [vmem:[%s528 + $0x2e0] sm:$0xff]
              %715 = vst [vmem:[%s529 + $0x2e0] sm:$0xff] %v714
              %v716 = vld [vmem:[%s528 + $0x2e8] sm:$0xff]
              %717 = vst [vmem:[%s529 + $0x2e8] sm:$0xff] %v716
              %v718 = vld [vmem:[%s528 + $0x2f0] sm:$0xff]
              %719 = vst [vmem:[%s529 + $0x2f0] sm:$0xff] %v718
              %v720 = vld [vmem:[%s528 + $0x2f8] sm:$0xff]
              %721 = vst [vmem:[%s529 + $0x2f8] sm:$0xff] %v720
              %v722 = vld [vmem:[%s528 + $0x300] sm:$0xff]
              %723 = vst [vmem:[%s529 + $0x300] sm:$0xff] %v722
              %v724 = vld [vmem:[%s528 + $0x308] sm:$0xff]
              %725 = vst [vmem:[%s529 + $0x308] sm:$0xff] %v724
              %v726 = vld [vmem:[%s528 + $0x310] sm:$0xff]
              %727 = vst [vmem:[%s529 + $0x310] sm:$0xff] %v726
              %v728 = vld [vmem:[%s528 + $0x318] sm:$0xff]
              %729 = vst [vmem:[%s529 + $0x318] sm:$0xff] %v728
              %v730 = vld [vmem:[%s528 + $0x320] sm:$0xff]
              %731 = vst [vmem:[%s529 + $0x320] sm:$0xff] %v730
              %v732 = vld [vmem:[%s528 + $0x328] sm:$0xff]
              %733 = vst [vmem:[%s529 + $0x328] sm:$0xff] %v732
              %v734 = vld [vmem:[%s528 + $0x330] sm:$0xff]
              %735 = vst [vmem:[%s529 + $0x330] sm:$0xff] %v734
              %v736 = vld [vmem:[%s528 + $0x338] sm:$0xff]
              %737 = vst [vmem:[%s529 + $0x338] sm:$0xff] %v736
              %v738 = vld [vmem:[%s528 + $0x340] sm:$0xff]
              %739 = vst [vmem:[%s529 + $0x340] sm:$0xff] %v738
              %v740 = vld [vmem:[%s528 + $0x348] sm:$0xff]
              %741 = vst [vmem:[%s529 + $0x348] sm:$0xff] %v740
              %v742 = vld [vmem:[%s528 + $0x350] sm:$0xff]
              %743 = vst [vmem:[%s529 + $0x350] sm:$0xff] %v742
              %v744 = vld [vmem:[%s528 + $0x358] sm:$0xff]
              %745 = vst [vmem:[%s529 + $0x358] sm:$0xff] %v744
              %v746 = vld [vmem:[%s528 + $0x360] sm:$0xff]
              %747 = vst [vmem:[%s529 + $0x360] sm:$0xff] %v746
              %v748 = vld [vmem:[%s528 + $0x368] sm:$0xff]
              %749 = vst [vmem:[%s529 + $0x368] sm:$0xff] %v748
              %v750 = vld [vmem:[%s528 + $0x370] sm:$0xff]
              %751 = vst [vmem:[%s529 + $0x370] sm:$0xff] %v750
              %v752 = vld [vmem:[%s528 + $0x378] sm:$0xff]
              %753 = vst [vmem:[%s529 + $0x378] sm:$0xff] %v752
              %v754 = vld [vmem:[%s528 + $0x380] sm:$0xff]
              %755 = vst [vmem:[%s529 + $0x380] sm:$0xff] %v754
              %v756 = vld [vmem:[%s528 + $0x388] sm:$0xff]
              %757 = vst [vmem:[%s529 + $0x388] sm:$0xff] %v756
              %v758 = vld [vmem:[%s528 + $0x390] sm:$0xff]
              %759 = vst [vmem:[%s529 + $0x390] sm:$0xff] %v758
              %v760 = vld [vmem:[%s528 + $0x398] sm:$0xff]
              %761 = vst [vmem:[%s529 + $0x398] sm:$0xff] %v760
              %v762 = vld [vmem:[%s528 + $0x3a0] sm:$0xff]
              %763 = vst [vmem:[%s529 + $0x3a0] sm:$0xff] %v762
              %v764 = vld [vmem:[%s528 + $0x3a8] sm:$0xff]
              %765 = vst [vmem:[%s529 + $0x3a8] sm:$0xff] %v764
              %v766 = vld [vmem:[%s528 + $0x3b0] sm:$0xff]
              %767 = vst [vmem:[%s529 + $0x3b0] sm:$0xff] %v766
              %v768 = vld [vmem:[%s528 + $0x3b8] sm:$0xff]
              %769 = vst [vmem:[%s529 + $0x3b8] sm:$0xff] %v768
            $region90: #{repux_block_forward.2} parent=84 // loop_footer
              %s527 = sadd.s32 1, %s523
            $region91: #{repux_block_forward.2} parent=84 // loop_footer_branch
              %522 = sbr.rel target = $region87
            $region92: #{repux_block_forward.2} parent=84 // loop_exit
              _
          $region85: #{repux_block_forward.2} parent=69 // pred_fallthru
            _
          %p770 = pneg %p518
          // Predicated region
          $region93: #{repux_block_forward.2} parent=69 // pred_check
            _
          $region94: #{repux_block_forward.2} parent=69 // pred_check_branch
            %772 = sbr.rel (%p518) target = $region96
          $region95: #{repux_block_forward.2} parent=69 // pred_region
            %s773 = sand.u32 960, 7
          $region96: #{repux_block_forward.2} parent=69 // pred_fallthru
            _
        $region70: #{repux_block_forward.2} parent=65 // pred_fallthru
          _
        // Predicated region
        $region71: #{repux_block_forward.2} parent=65 // pred_check
          %p502 = pneg %p498
        $region72: #{repux_block_forward.2} parent=65 // pred_check_branch
          %504 = sbr.rel (%p502) target = $region74
        $region73: #{repux_block_forward.2} parent=65 // pred_region
          %s505 = sshll.u32 1, 960
          %s506 = ssub.s32 %s505, 1
          loop: start=0, step=1, limit=1
          $region75: #{repux_block_forward.2} parent=73 // loop_pre_header
            _
          $region76: #{repux_block_forward.2} parent=73 // loop_header
            %s508 = sphi 0, %s512
            %p509 = scmp.ge.s32.totalorder %s508, 1
            %s513 = sphi %s493, %s493
            %s514 = sphi %s495, %s495
          $region77: #{repux_block_forward.2} parent=73 // loop_header_branch
            %511 = sbr.rel (%p509) target = $region81
          $region78: #{repux_block_forward.2} parent=73 // loop_body
            %v515 = vld [vmem:[%s513] sm:%s506]
            %516 = vst [vmem:[%s514] sm:%s506] %v515
          $region79: #{repux_block_forward.2} parent=73 // loop_footer
            %s512 = sadd.s32 1, %s508
          $region80: #{repux_block_forward.2} parent=73 // loop_footer_branch
            %507 = sbr.rel target = $region76
          $region81: #{repux_block_forward.2} parent=73 // loop_exit
            _
        $region74: #{repux_block_forward.2} parent=65 // pred_fallthru
          _
        // Predicated region
        $region97: #{repux_block_forward.2} parent=65 // pred_check
          _
        $region98: #{repux_block_forward.2} parent=65 // pred_check_branch
          %776 = sbr.rel (0) target = $region100
        $region99: #{repux_block_forward.2} parent=65 // pred_region
          %777 = vsyncadd %s496, 15360
        $region100: #{repux_block_forward.2} parent=65 // pred_fallthru
          _
      $region66: #{repux_block_forward.2} parent=23 // pred_fallthru
        _
      %v778 = vld [vmem:[%s1] sm:$0xff]
      %v779 = vld [vmem:[%s1 + $0x8] sm:$0xff]
      %v780 = vld [vmem:[%s1 + $0x10] sm:$0xff]
      %v781 = vld [vmem:[%s1 + $0x18] sm:$0x7]
      %v782 = vld [vmem:[%s476] sm:$0xff]
      %v783 = vld [vmem:[%s476 + $0x10] sm:$0xff]
      %v784 = vld [vmem:[%s476 + $0x20] sm:$0xff]
      %v785 = vld [vmem:[%s476 + $0x30] sm:$0xff]
      %v786 = vld [vmem:[%s476 + $0x40] sm:$0xff]
      %v787 = vld [vmem:[%s476 + $0x50] sm:$0xff]
      %v788 = vld [vmem:[%s476 + $0x60] sm:$0xff]
      %v789 = vld [vmem:[%s476 + $0x70] sm:$0xff]
      %v790 = vld [vmem:[%s476 + $0x80] sm:$0xff]
      %v791 = vld [vmem:[%s476 + $0x90] sm:$0xff]
      %v792 = vld [vmem:[%s476 + $0xa0] sm:$0xff]
      %v793 = vld [vmem:[%s476 + $0xb0] sm:$0xff]
      %v794 = vld [vmem:[%s476 + $0xc0] sm:$0xff]
      %v795 = vld [vmem:[%s476 + $0xd0] sm:$0xff]
      %v796 = vld [vmem:[%s476 + $0xe0] sm:$0xff]
      %v797 = vld [vmem:[%s476 + $0xf0] sm:$0xff]
      %v798 = vld [vmem:[%s476 + $0x100] sm:$0xff]
      %v799 = vld [vmem:[%s476 + $0x110] sm:$0xff]
      %v800 = vld [vmem:[%s476 + $0x120] sm:$0xff]
      %v801 = vld [vmem:[%s476 + $0x130] sm:$0xff]
      %v802 = vld [vmem:[%s476 + $0x140] sm:$0xff]
      %v803 = vld [vmem:[%s476 + $0x150] sm:$0xff]
      %v804 = vld [vmem:[%s476 + $0x160] sm:$0xff]
      %v805 = vld [vmem:[%s476 + $0x170] sm:$0xff]
      %v806 = vld [vmem:[%s476 + $0x180] sm:$0xff]
      %v807 = vld [vmem:[%s476 + $0x190] sm:$0xff]
      %v808 = vld [vmem:[%s476 + $0x1a0] sm:$0xff]
      %v809 = vld [vmem:[%s476 + $0x1b0] sm:$0xff]
      %v810 = vld [vmem:[%s476 + $0x1c0] sm:$0xff]
      %v811 = vld [vmem:[%s476 + $0x1d0] sm:$0xff]
      %v812 = vld [vmem:[%s476 + $0x1e0] sm:$0xff]
      %v813 = vld [vmem:[%s476 + $0x1f0] sm:$0xff]
      %v814 = vld [vmem:[%s476 + $0x200] sm:$0xff]
      %v815 = vld [vmem:[%s476 + $0x210] sm:$0xff]
      %v816 = vld [vmem:[%s476 + $0x220] sm:$0xff]
      %v817 = vld [vmem:[%s476 + $0x230] sm:$0xff]
      %v818 = vld [vmem:[%s476 + $0x240] sm:$0xff]
      %v819 = vld [vmem:[%s476 + $0x250] sm:$0xff]
      %v820 = vld [vmem:[%s476 + $0x260] sm:$0xff]
      %v821 = vld [vmem:[%s476 + $0x270] sm:$0xff]
      %v822 = vld [vmem:[%s476 + $0x280] sm:$0xff]
      %v823 = vld [vmem:[%s476 + $0x290] sm:$0xff]
      %v824 = vld [vmem:[%s476 + $0x2a0] sm:$0xff]
      %v825 = vld [vmem:[%s476 + $0x2b0] sm:$0xff]
      %v826 = vld [vmem:[%s476 + $0x2c0] sm:$0xff]
      %v827 = vld [vmem:[%s476 + $0x2d0] sm:$0xff]
      %v828 = vld [vmem:[%s476 + $0x2e0] sm:$0xff]
      %v829 = vld [vmem:[%s476 + $0x2f0] sm:$0xff]
      %v830 = vld [vmem:[%s476 + $0x300] sm:$0xff]
      %v831 = vld [vmem:[%s476 + $0x310] sm:$0xff]
      %v832 = vld [vmem:[%s476 + $0x320] sm:$0xff]
      %v833 = vld [vmem:[%s476 + $0x330] sm:$0xff]
      %v834 = vld [vmem:[%s476 + $0x340] sm:$0xff]
      %v835 = vld [vmem:[%s476 + $0x350] sm:$0xff]
      %v836 = vld [vmem:[%s476 + $0x360] sm:$0xff]
      %v837 = vld [vmem:[%s476 + $0x370] sm:$0xff]
      %v838 = vld [vmem:[%s476 + $0x380] sm:$0xff]
      %v839 = vld [vmem:[%s476 + $0x390] sm:$0xff]
      %v840 = vld [vmem:[%s476 + $0x3a0] sm:$0xff]
      %v841 = vld [vmem:[%s476 + $0x3b0] sm:$0xff]
      %v842 = vlaneseq
      %v843 = vshrl.u32 %v842, 7
      %v844 = vsub.s32 0, %v843
      %v845 = vrot.slane %v778, %v844
      %v846 = vmul.f32 %v782, %v845
      %v847 = vmul.f32 %v783, %v845
      %v848 = vmul.f32 %v784, %v845
      %v849 = vmul.f32 %v785, %v845
      %v850 = vmul.f32 %v786, %v845
      %v851 = vmul.f32 %v787, %v845
      %v852 = vmul.f32 %v788, %v845
      %v853 = vmul.f32 %v789, %v845
      %v854 = vmul.f32 %v792, %v845
      %v855 = vmul.f32 %v793, %v845
      %v856 = vmul.f32 %v794, %v845
      %v857 = vmul.f32 %v795, %v845
      %v858 = vmul.f32 %v796, %v845
      %v859 = vmul.f32 %v797, %v845
      %v860 = vmul.f32 %v798, %v845
      %v861 = vmul.f32 %v799, %v845
      %v862 = vmul.f32 %v802, %v845
      %v863 = vmul.f32 %v803, %v845
      %v864 = vmul.f32 %v804, %v845
      %v865 = vmul.f32 %v805, %v845
      %v866 = vmul.f32 %v806, %v845
      %v867 = vmul.f32 %v807, %v845
      %v868 = vmul.f32 %v808, %v845
      %v869 = vmul.f32 %v809, %v845
      %v870 = vmul.f32 %v812, %v845
      %v871 = vmul.f32 %v813, %v845
      %v872 = vmul.f32 %v814, %v845
      %v873 = vmul.f32 %v815, %v845
      %v874 = vmul.f32 %v816, %v845
      %v875 = vmul.f32 %v817, %v845
      %v876 = vmul.f32 %v818, %v845
      %v877 = vmul.f32 %v819, %v845
      %v878 = vlaneseq
      %v879 = vshrl.u32 %v878, 7
      %v880 = vsub.s32 3, %v879
      %v881 = vrot.slane %v778, %v880
      %v882 = vmul.f32 %v783, %v881
      %v883 = vmul.f32 %v784, %v881
      %v884 = vmul.f32 %v785, %v881
      %v885 = vmul.f32 %v786, %v881
      %v886 = vmul.f32 %v787, %v881
      %v887 = vmul.f32 %v788, %v881
      %v888 = vmul.f32 %v789, %v881
      %v889 = vmul.f32 %v790, %v881
      %v890 = vmul.f32 %v793, %v881
      %v891 = vmul.f32 %v794, %v881
      %v892 = vmul.f32 %v795, %v881
      %v893 = vmul.f32 %v796, %v881
      %v894 = vmul.f32 %v797, %v881
      %v895 = vmul.f32 %v798, %v881
      %v896 = vmul.f32 %v799, %v881
      %v897 = vmul.f32 %v800, %v881
      %v898 = vmul.f32 %v803, %v881
      %v899 = vmul.f32 %v804, %v881
      %v900 = vmul.f32 %v805, %v881
      %v901 = vmul.f32 %v806, %v881
      %v902 = vmul.f32 %v807, %v881
      %v903 = vmul.f32 %v808, %v881
      %v904 = vmul.f32 %v809, %v881
      %v905 = vmul.f32 %v810, %v881
      %v906 = vmul.f32 %v813, %v881
      %v907 = vmul.f32 %v814, %v881
      %v908 = vmul.f32 %v815, %v881
      %v909 = vmul.f32 %v816, %v881
      %v910 = vmul.f32 %v817, %v881
      %v911 = vmul.f32 %v818, %v881
      %v912 = vmul.f32 %v819, %v881
      %v913 = vmul.f32 %v820, %v881
      %v914 = vadd.f32 %v846, %v882
      %v915 = vadd.f32 %v847, %v883
      %v916 = vadd.f32 %v848, %v884
      %v917 = vadd.f32 %v849, %v885
      %v918 = vadd.f32 %v850, %v886
      %v919 = vadd.f32 %v851, %v887
      %v920 = vadd.f32 %v852, %v888
      %v921 = vadd.f32 %v853, %v889
      %v922 = vadd.f32 %v854, %v890
      %v923 = vadd.f32 %v855, %v891
      %v924 = vadd.f32 %v856, %v892
      %v925 = vadd.f32 %v857, %v893
      %v926 = vadd.f32 %v858, %v894
      %v927 = vadd.f32 %v859, %v895
      %v928 = vadd.f32 %v860, %v896
      %v929 = vadd.f32 %v861, %v897
      %v930 = vadd.f32 %v862, %v898
      %v931 = vadd.f32 %v863, %v899
      %v932 = vadd.f32 %v864, %v900
      %v933 = vadd.f32 %v865, %v901
      %v934 = vadd.f32 %v866, %v902
      %v935 = vadd.f32 %v867, %v903
      %v936 = vadd.f32 %v868, %v904
      %v937 = vadd.f32 %v869, %v905
      %v938 = vadd.f32 %v870, %v906
      %v939 = vadd.f32 %v871, %v907
      %v940 = vadd.f32 %v872, %v908
      %v941 = vadd.f32 %v873, %v909
      %v942 = vadd.f32 %v874, %v910
      %v943 = vadd.f32 %v875, %v911
      %v944 = vadd.f32 %v876, %v912
      %v945 = vadd.f32 %v877, %v913
      %v946 = vlaneseq
      %v947 = vshrl.u32 %v946, 7
      %v948 = vsub.s32 6, %v947
      %v949 = vrot.slane %v778, %v948
      %v950 = vmul.f32 %v784, %v949
      %v951 = vmul.f32 %v785, %v949
      %v952 = vmul.f32 %v786, %v949
      %v953 = vmul.f32 %v787, %v949
      %v954 = vmul.f32 %v788, %v949
      %v955 = vmul.f32 %v789, %v949
      %v956 = vmul.f32 %v790, %v949
      %v957 = vmul.f32 %v791, %v949
      %v958 = vmul.f32 %v794, %v949
      %v959 = vmul.f32 %v795, %v949
      %v960 = vmul.f32 %v796, %v949
      %v961 = vmul.f32 %v797, %v949
      %v962 = vmul.f32 %v798, %v949
      %v963 = vmul.f32 %v799, %v949
      %v964 = vmul.f32 %v800, %v949
      %v965 = vmul.f32 %v801, %v949
      %v966 = vmul.f32 %v804, %v949
      %v967 = vmul.f32 %v805, %v949
      %v968 = vmul.f32 %v806, %v949
      %v969 = vmul.f32 %v807, %v949
      %v970 = vmul.f32 %v808, %v949
      %v971 = vmul.f32 %v809, %v949
      %v972 = vmul.f32 %v810, %v949
      %v973 = vmul.f32 %v811, %v949
      %v974 = vmul.f32 %v814, %v949
      %v975 = vmul.f32 %v815, %v949
      %v976 = vmul.f32 %v816, %v949
      %v977 = vmul.f32 %v817, %v949
      %v978 = vmul.f32 %v818, %v949
      %v979 = vmul.f32 %v819, %v949
      %v980 = vmul.f32 %v820, %v949
      %v981 = vmul.f32 %v821, %v949
      %v982 = vadd.f32 %v914, %v950
      %v983 = vadd.f32 %v915, %v951
      %v984 = vadd.f32 %v916, %v952
      %v985 = vadd.f32 %v917, %v953
      %v986 = vadd.f32 %v918, %v954
      %v987 = vadd.f32 %v919, %v955
      %v988 = vadd.f32 %v920, %v956
      %v989 = vadd.f32 %v921, %v957
      %v990 = vadd.f32 %v922, %v958
      %v991 = vadd.f32 %v923, %v959
      %v992 = vadd.f32 %v924, %v960
      %v993 = vadd.f32 %v925, %v961
      %v994 = vadd.f32 %v926, %v962
      %v995 = vadd.f32 %v927, %v963
      %v996 = vadd.f32 %v928, %v964
      %v997 = vadd.f32 %v929, %v965
      %v998 = vadd.f32 %v930, %v966
      %v999 = vadd.f32 %v931, %v967
      %v1000 = vadd.f32 %v932, %v968
      %v1001 = vadd.f32 %v933, %v969
      %v1002 = vadd.f32 %v934, %v970
      %v1003 = vadd.f32 %v935, %v971
      %v1004 = vadd.f32 %v936, %v972
      %v1005 = vadd.f32 %v937, %v973
      %v1006 = vadd.f32 %v938, %v974
      %v1007 = vadd.f32 %v939, %v975
      %v1008 = vadd.f32 %v940, %v976
      %v1009 = vadd.f32 %v941, %v977
      %v1010 = vadd.f32 %v942, %v978
      %v1011 = vadd.f32 %v943, %v979
      %v1012 = vadd.f32 %v944, %v980
      %v1013 = vadd.f32 %v945, %v981
      %v1014 = vlaneseq
      %v1015 = vshrl.u32 %v1014, 7
      %v1016 = vsub.s32 1, %v1015
      %v1017 = vrot.slane %v779, %v1016
      %v1018 = vmul.f32 %v792, %v1017
      %v1019 = vmul.f32 %v793, %v1017
      %v1020 = vmul.f32 %v794, %v1017
      %v1021 = vmul.f32 %v795, %v1017
      %v1022 = vmul.f32 %v796, %v1017
      %v1023 = vmul.f32 %v797, %v1017
      %v1024 = vmul.f32 %v798, %v1017
      %v1025 = vmul.f32 %v799, %v1017
      %v1026 = vmul.f32 %v802, %v1017
      %v1027 = vmul.f32 %v803, %v1017
      %v1028 = vmul.f32 %v804, %v1017
      %v1029 = vmul.f32 %v805, %v1017
      %v1030 = vmul.f32 %v806, %v1017
      %v1031 = vmul.f32 %v807, %v1017
      %v1032 = vmul.f32 %v808, %v1017
      %v1033 = vmul.f32 %v809, %v1017
      %v1034 = vmul.f32 %v812, %v1017
      %v1035 = vmul.f32 %v813, %v1017
      %v1036 = vmul.f32 %v814, %v1017
      %v1037 = vmul.f32 %v815, %v1017
      %v1038 = vmul.f32 %v816, %v1017
      %v1039 = vmul.f32 %v817, %v1017
      %v1040 = vmul.f32 %v818, %v1017
      %v1041 = vmul.f32 %v819, %v1017
      %v1042 = vmul.f32 %v822, %v1017
      %v1043 = vmul.f32 %v823, %v1017
      %v1044 = vmul.f32 %v824, %v1017
      %v1045 = vmul.f32 %v825, %v1017
      %v1046 = vmul.f32 %v826, %v1017
      %v1047 = vmul.f32 %v827, %v1017
      %v1048 = vmul.f32 %v828, %v1017
      %v1049 = vmul.f32 %v829, %v1017
      %v1050 = vadd.f32 %v982, %v1018
      %v1051 = vadd.f32 %v983, %v1019
      %v1052 = vadd.f32 %v984, %v1020
      %v1053 = vadd.f32 %v985, %v1021
      %v1054 = vadd.f32 %v986, %v1022
      %v1055 = vadd.f32 %v987, %v1023
      %v1056 = vadd.f32 %v988, %v1024
      %v1057 = vadd.f32 %v989, %v1025
      %v1058 = vadd.f32 %v990, %v1026
      %v1059 = vadd.f32 %v991, %v1027
      %v1060 = vadd.f32 %v992, %v1028
      %v1061 = vadd.f32 %v993, %v1029
      %v1062 = vadd.f32 %v994, %v1030
      %v1063 = vadd.f32 %v995, %v1031
      %v1064 = vadd.f32 %v996, %v1032
      %v1065 = vadd.f32 %v997, %v1033
      %v1066 = vadd.f32 %v998, %v1034
      %v1067 = vadd.f32 %v999, %v1035
      %v1068 = vadd.f32 %v1000, %v1036
      %v1069 = vadd.f32 %v1001, %v1037
      %v1070 = vadd.f32 %v1002, %v1038
      %v1071 = vadd.f32 %v1003, %v1039
      %v1072 = vadd.f32 %v1004, %v1040
      %v1073 = vadd.f32 %v1005, %v1041
      %v1074 = vadd.f32 %v1006, %v1042
      %v1075 = vadd.f32 %v1007, %v1043
      %v1076 = vadd.f32 %v1008, %v1044
      %v1077 = vadd.f32 %v1009, %v1045
      %v1078 = vadd.f32 %v1010, %v1046
      %v1079 = vadd.f32 %v1011, %v1047
      %v1080 = vadd.f32 %v1012, %v1048
      %v1081 = vadd.f32 %v1013, %v1049
      %v1082 = vlaneseq
      %v1083 = vshrl.u32 %v1082, 7
      %v1084 = vsub.s32 4, %v1083
      %v1085 = vrot.slane %v779, %v1084
      %v1086 = vmul.f32 %v793, %v1085
      %v1087 = vmul.f32 %v794, %v1085
      %v1088 = vmul.f32 %v795, %v1085
      %v1089 = vmul.f32 %v796, %v1085
      %v1090 = vmul.f32 %v797, %v1085
      %v1091 = vmul.f32 %v798, %v1085
      %v1092 = vmul.f32 %v799, %v1085
      %v1093 = vmul.f32 %v800, %v1085
      %v1094 = vmul.f32 %v803, %v1085
      %v1095 = vmul.f32 %v804, %v1085
      %v1096 = vmul.f32 %v805, %v1085
      %v1097 = vmul.f32 %v806, %v1085
      %v1098 = vmul.f32 %v807, %v1085
      %v1099 = vmul.f32 %v808, %v1085
      %v1100 = vmul.f32 %v809, %v1085
      %v1101 = vmul.f32 %v810, %v1085
      %v1102 = vmul.f32 %v813, %v1085
      %v1103 = vmul.f32 %v814, %v1085
      %v1104 = vmul.f32 %v815, %v1085
      %v1105 = vmul.f32 %v816, %v1085
      %v1106 = vmul.f32 %v817, %v1085
      %v1107 = vmul.f32 %v818, %v1085
      %v1108 = vmul.f32 %v819, %v1085
      %v1109 = vmul.f32 %v820, %v1085
      %v1110 = vmul.f32 %v823, %v1085
      %v1111 = vmul.f32 %v824, %v1085
      %v1112 = vmul.f32 %v825, %v1085
      %v1113 = vmul.f32 %v826, %v1085
      %v1114 = vmul.f32 %v827, %v1085
      %v1115 = vmul.f32 %v828, %v1085
      %v1116 = vmul.f32 %v829, %v1085
      %v1117 = vmul.f32 %v830, %v1085
      %v1118 = vadd.f32 %v1050, %v1086
      %v1119 = vadd.f32 %v1051, %v1087
      %v1120 = vadd.f32 %v1052, %v1088
      %v1121 = vadd.f32 %v1053, %v1089
      %v1122 = vadd.f32 %v1054, %v1090
      %v1123 = vadd.f32 %v1055, %v1091
      %v1124 = vadd.f32 %v1056, %v1092
      %v1125 = vadd.f32 %v1057, %v1093
      %v1126 = vadd.f32 %v1058, %v1094
      %v1127 = vadd.f32 %v1059, %v1095
      %v1128 = vadd.f32 %v1060, %v1096
      %v1129 = vadd.f32 %v1061, %v1097
      %v1130 = vadd.f32 %v1062, %v1098
      %v1131 = vadd.f32 %v1063, %v1099
      %v1132 = vadd.f32 %v1064, %v1100
      %v1133 = vadd.f32 %v1065, %v1101
      %v1134 = vadd.f32 %v1066, %v1102
      %v1135 = vadd.f32 %v1067, %v1103
      %v1136 = vadd.f32 %v1068, %v1104
      %v1137 = vadd.f32 %v1069, %v1105
      %v1138 = vadd.f32 %v1070, %v1106
      %v1139 = vadd.f32 %v1071, %v1107
      %v1140 = vadd.f32 %v1072, %v1108
      %v1141 = vadd.f32 %v1073, %v1109
      %v1142 = vadd.f32 %v1074, %v1110
      %v1143 = vadd.f32 %v1075, %v1111
      %v1144 = vadd.f32 %v1076, %v1112
      %v1145 = vadd.f32 %v1077, %v1113
      %v1146 = vadd.f32 %v1078, %v1114
      %v1147 = vadd.f32 %v1079, %v1115
      %v1148 = vadd.f32 %v1080, %v1116
      %v1149 = vadd.f32 %v1081, %v1117
      %v1150 = vlaneseq
      %v1151 = vshrl.u32 %v1150, 7
      %v1152 = vsub.s32 7, %v1151
      %v1153 = vrot.slane %v779, %v1152
      %v1154 = vmul.f32 %v794, %v1153
      %v1155 = vmul.f32 %v795, %v1153
      %v1156 = vmul.f32 %v796, %v1153
      %v1157 = vmul.f32 %v797, %v1153
      %v1158 = vmul.f32 %v798, %v1153
      %v1159 = vmul.f32 %v799, %v1153
      %v1160 = vmul.f32 %v800, %v1153
      %v1161 = vmul.f32 %v801, %v1153
      %v1162 = vmul.f32 %v804, %v1153
      %v1163 = vmul.f32 %v805, %v1153
      %v1164 = vmul.f32 %v806, %v1153
      %v1165 = vmul.f32 %v807, %v1153
      %v1166 = vmul.f32 %v808, %v1153
      %v1167 = vmul.f32 %v809, %v1153
      %v1168 = vmul.f32 %v810, %v1153
      %v1169 = vmul.f32 %v811, %v1153
      %v1170 = vmul.f32 %v814, %v1153
      %v1171 = vmul.f32 %v815, %v1153
      %v1172 = vmul.f32 %v816, %v1153
      %v1173 = vmul.f32 %v817, %v1153
      %v1174 = vmul.f32 %v818, %v1153
      %v1175 = vmul.f32 %v819, %v1153
      %v1176 = vmul.f32 %v820, %v1153
      %v1177 = vmul.f32 %v821, %v1153
      %v1178 = vmul.f32 %v824, %v1153
      %v1179 = vmul.f32 %v825, %v1153
      %v1180 = vmul.f32 %v826, %v1153
      %v1181 = vmul.f32 %v827, %v1153
      %v1182 = vmul.f32 %v828, %v1153
      %v1183 = vmul.f32 %v829, %v1153
      %v1184 = vmul.f32 %v830, %v1153
      %v1185 = vmul.f32 %v831, %v1153
      %v1186 = vadd.f32 %v1118, %v1154
      %v1187 = vadd.f32 %v1119, %v1155
      %v1188 = vadd.f32 %v1120, %v1156
      %v1189 = vadd.f32 %v1121, %v1157
      %v1190 = vadd.f32 %v1122, %v1158
      %v1191 = vadd.f32 %v1123, %v1159
      %v1192 = vadd.f32 %v1124, %v1160
      %v1193 = vadd.f32 %v1125, %v1161
      %v1194 = vadd.f32 %v1126, %v1162
      %v1195 = vadd.f32 %v1127, %v1163
      %v1196 = vadd.f32 %v1128, %v1164
      %v1197 = vadd.f32 %v1129, %v1165
      %v1198 = vadd.f32 %v1130, %v1166
      %v1199 = vadd.f32 %v1131, %v1167
      %v1200 = vadd.f32 %v1132, %v1168
      %v1201 = vadd.f32 %v1133, %v1169
      %v1202 = vadd.f32 %v1134, %v1170
      %v1203 = vadd.f32 %v1135, %v1171
      %v1204 = vadd.f32 %v1136, %v1172
      %v1205 = vadd.f32 %v1137, %v1173
      %v1206 = vadd.f32 %v1138, %v1174
      %v1207 = vadd.f32 %v1139, %v1175
      %v1208 = vadd.f32 %v1140, %v1176
      %v1209 = vadd.f32 %v1141, %v1177
      %v1210 = vadd.f32 %v1142, %v1178
      %v1211 = vadd.f32 %v1143, %v1179
      %v1212 = vadd.f32 %v1144, %v1180
      %v1213 = vadd.f32 %v1145, %v1181
      %v1214 = vadd.f32 %v1146, %v1182
      %v1215 = vadd.f32 %v1147, %v1183
      %v1216 = vadd.f32 %v1148, %v1184
      %v1217 = vadd.f32 %v1149, %v1185
      %v1218 = vlaneseq
      %v1219 = vshrl.u32 %v1218, 7
      %v1220 = vsub.s32 2, %v1219
      %v1221 = vrot.slane %v780, %v1220
      %v1222 = vmul.f32 %v802, %v1221
      %v1223 = vmul.f32 %v803, %v1221
      %v1224 = vmul.f32 %v804, %v1221
      %v1225 = vmul.f32 %v805, %v1221
      %v1226 = vmul.f32 %v806, %v1221
      %v1227 = vmul.f32 %v807, %v1221
      %v1228 = vmul.f32 %v808, %v1221
      %v1229 = vmul.f32 %v809, %v1221
      %v1230 = vmul.f32 %v812, %v1221
      %v1231 = vmul.f32 %v813, %v1221
      %v1232 = vmul.f32 %v814, %v1221
      %v1233 = vmul.f32 %v815, %v1221
      %v1234 = vmul.f32 %v816, %v1221
      %v1235 = vmul.f32 %v817, %v1221
      %v1236 = vmul.f32 %v818, %v1221
      %v1237 = vmul.f32 %v819, %v1221
      %v1238 = vmul.f32 %v822, %v1221
      %v1239 = vmul.f32 %v823, %v1221
      %v1240 = vmul.f32 %v824, %v1221
      %v1241 = vmul.f32 %v825, %v1221
      %v1242 = vmul.f32 %v826, %v1221
      %v1243 = vmul.f32 %v827, %v1221
      %v1244 = vmul.f32 %v828, %v1221
      %v1245 = vmul.f32 %v829, %v1221
      %v1246 = vmul.f32 %v832, %v1221
      %v1247 = vmul.f32 %v833, %v1221
      %v1248 = vmul.f32 %v834, %v1221
      %v1249 = vmul.f32 %v835, %v1221
      %v1250 = vmul.f32 %v836, %v1221
      %v1251 = vmul.f32 %v837, %v1221
      %v1252 = vmul.f32 %v838, %v1221
      %v1253 = vmul.f32 %v839, %v1221
      %v1254 = vadd.f32 %v1186, %v1222
      %v1255 = vadd.f32 %v1187, %v1223
      %v1256 = vadd.f32 %v1188, %v1224
      %v1257 = vadd.f32 %v1189, %v1225
      %v1258 = vadd.f32 %v1190, %v1226
      %v1259 = vadd.f32 %v1191, %v1227
      %v1260 = vadd.f32 %v1192, %v1228
      %v1261 = vadd.f32 %v1193, %v1229
      %v1262 = vadd.f32 %v1194, %v1230
      %v1263 = vadd.f32 %v1195, %v1231
      %v1264 = vadd.f32 %v1196, %v1232
      %v1265 = vadd.f32 %v1197, %v1233
      %v1266 = vadd.f32 %v1198, %v1234
      %v1267 = vadd.f32 %v1199, %v1235
      %v1268 = vadd.f32 %v1200, %v1236
      %v1269 = vadd.f32 %v1201, %v1237
      %v1270 = vadd.f32 %v1202, %v1238
      %v1271 = vadd.f32 %v1203, %v1239
      %v1272 = vadd.f32 %v1204, %v1240
      %v1273 = vadd.f32 %v1205, %v1241
      %v1274 = vadd.f32 %v1206, %v1242
      %v1275 = vadd.f32 %v1207, %v1243
      %v1276 = vadd.f32 %v1208, %v1244
      %v1277 = vadd.f32 %v1209, %v1245
      %v1278 = vadd.f32 %v1210, %v1246
      %v1279 = vadd.f32 %v1211, %v1247
      %v1280 = vadd.f32 %v1212, %v1248
      %v1281 = vadd.f32 %v1213, %v1249
      %v1282 = vadd.f32 %v1214, %v1250
      %v1283 = vadd.f32 %v1215, %v1251
      %v1284 = vadd.f32 %v1216, %v1252
      %v1285 = vadd.f32 %v1217, %v1253
      %v1286 = vlaneseq
      %v1287 = vshrl.u32 %v1286, 7
      %v1288 = vsub.s32 5, %v1287
      %v1289 = vrot.slane %v780, %v1288
      %v1290 = vmul.f32 %v803, %v1289
      %v1291 = vmul.f32 %v804, %v1289
      %v1292 = vmul.f32 %v805, %v1289
      %v1293 = vmul.f32 %v806, %v1289
      %v1294 = vmul.f32 %v807, %v1289
      %v1295 = vmul.f32 %v808, %v1289
      %v1296 = vmul.f32 %v809, %v1289
      %v1297 = vmul.f32 %v810, %v1289
      %v1298 = vmul.f32 %v813, %v1289
      %v1299 = vmul.f32 %v814, %v1289
      %v1300 = vmul.f32 %v815, %v1289
      %v1301 = vmul.f32 %v816, %v1289
      %v1302 = vmul.f32 %v817, %v1289
      %v1303 = vmul.f32 %v818, %v1289
      %v1304 = vmul.f32 %v819, %v1289
      %v1305 = vmul.f32 %v820, %v1289
      %v1306 = vmul.f32 %v823, %v1289
      %v1307 = vmul.f32 %v824, %v1289
      %v1308 = vmul.f32 %v825, %v1289
      %v1309 = vmul.f32 %v826, %v1289
      %v1310 = vmul.f32 %v827, %v1289
      %v1311 = vmul.f32 %v828, %v1289
      %v1312 = vmul.f32 %v829, %v1289
      %v1313 = vmul.f32 %v830, %v1289
      %v1314 = vmul.f32 %v833, %v1289
      %v1315 = vmul.f32 %v834, %v1289
      %v1316 = vmul.f32 %v835, %v1289
      %v1317 = vmul.f32 %v836, %v1289
      %v1318 = vmul.f32 %v837, %v1289
      %v1319 = vmul.f32 %v838, %v1289
      %v1320 = vmul.f32 %v839, %v1289
      %v1321 = vmul.f32 %v840, %v1289
      %v1322 = vadd.f32 %v1254, %v1290
      %v1323 = vadd.f32 %v1255, %v1291
      %v1324 = vadd.f32 %v1256, %v1292
      %v1325 = vadd.f32 %v1257, %v1293
      %v1326 = vadd.f32 %v1258, %v1294
      %v1327 = vadd.f32 %v1259, %v1295
      %v1328 = vadd.f32 %v1260, %v1296
      %v1329 = vadd.f32 %v1261, %v1297
      %v1330 = vadd.f32 %v1262, %v1298
      %v1331 = vadd.f32 %v1263, %v1299
      %v1332 = vadd.f32 %v1264, %v1300
      %v1333 = vadd.f32 %v1265, %v1301
      %v1334 = vadd.f32 %v1266, %v1302
      %v1335 = vadd.f32 %v1267, %v1303
      %v1336 = vadd.f32 %v1268, %v1304
      %v1337 = vadd.f32 %v1269, %v1305
      %v1338 = vadd.f32 %v1270, %v1306
      %v1339 = vadd.f32 %v1271, %v1307
      %v1340 = vadd.f32 %v1272, %v1308
      %v1341 = vadd.f32 %v1273, %v1309
      %v1342 = vadd.f32 %v1274, %v1310
      %v1343 = vadd.f32 %v1275, %v1311
      %v1344 = vadd.f32 %v1276, %v1312
      %v1345 = vadd.f32 %v1277, %v1313
      %v1346 = vadd.f32 %v1278, %v1314
      %v1347 = vadd.f32 %v1279, %v1315
      %v1348 = vadd.f32 %v1280, %v1316
      %v1349 = vadd.f32 %v1281, %v1317
      %v1350 = vadd.f32 %v1282, %v1318
      %v1351 = vadd.f32 %v1283, %v1319
      %v1352 = vadd.f32 %v1284, %v1320
      %v1353 = vadd.f32 %v1285, %v1321
      %v1354 = vlaneseq
      %v1355 = vshrl.u32 %v1354, 7
      %v1356 = vsub.s32 0, %v1355
      %v1357 = vrot.slane %v781, %v1356
      %v1358 = vmul.f32 %v804, %v1357
      %v1359 = vmul.f32 %v805, %v1357
      %v1360 = vmul.f32 %v806, %v1357
      %v1361 = vmul.f32 %v807, %v1357
      %v1362 = vmul.f32 %v808, %v1357
      %v1363 = vmul.f32 %v809, %v1357
      %v1364 = vmul.f32 %v810, %v1357
      %v1365 = vmul.f32 %v811, %v1357
      %v1366 = vmul.f32 %v814, %v1357
      %v1367 = vmul.f32 %v815, %v1357
      %v1368 = vmul.f32 %v816, %v1357
      %v1369 = vmul.f32 %v817, %v1357
      %v1370 = vmul.f32 %v818, %v1357
      %v1371 = vmul.f32 %v819, %v1357
      %v1372 = vmul.f32 %v820, %v1357
      %v1373 = vmul.f32 %v821, %v1357
      %v1374 = vmul.f32 %v824, %v1357
      %v1375 = vmul.f32 %v825, %v1357
      %v1376 = vmul.f32 %v826, %v1357
      %v1377 = vmul.f32 %v827, %v1357
      %v1378 = vmul.f32 %v828, %v1357
      %v1379 = vmul.f32 %v829, %v1357
      %v1380 = vmul.f32 %v830, %v1357
      %v1381 = vmul.f32 %v831, %v1357
      %v1382 = vmul.f32 %v834, %v1357
      %v1383 = vmul.f32 %v835, %v1357
      %v1384 = vmul.f32 %v836, %v1357
      %v1385 = vmul.f32 %v837, %v1357
      %v1386 = vmul.f32 %v838, %v1357
      %v1387 = vmul.f32 %v839, %v1357
      %v1388 = vmul.f32 %v840, %v1357
      %v1389 = vmul.f32 %v841, %v1357
      %v1390 = vadd.f32 %v1322, %v1358
      %v1391 = vadd.f32 %v1323, %v1359
      %v1392 = vadd.f32 %v1324, %v1360
      %v1393 = vadd.f32 %v1325, %v1361
      %v1394 = vadd.f32 %v1326, %v1362
      %v1395 = vadd.f32 %v1327, %v1363
      %v1396 = vadd.f32 %v1328, %v1364
      %v1397 = vadd.f32 %v1329, %v1365
      %v1398 = vadd.f32 %v1330, %v1366
      %v1399 = vadd.f32 %v1331, %v1367
      %v1400 = vadd.f32 %v1332, %v1368
      %v1401 = vadd.f32 %v1333, %v1369
      %v1402 = vadd.f32 %v1334, %v1370
      %v1403 = vadd.f32 %v1335, %v1371
      %v1404 = vadd.f32 %v1336, %v1372
      %v1405 = vadd.f32 %v1337, %v1373
      %v1406 = vadd.f32 %v1338, %v1374
      %v1407 = vadd.f32 %v1339, %v1375
      %v1408 = vadd.f32 %v1340, %v1376
      %v1409 = vadd.f32 %v1341, %v1377
      %v1410 = vadd.f32 %v1342, %v1378
      %v1411 = vadd.f32 %v1343, %v1379
      %v1412 = vadd.f32 %v1344, %v1380
      %v1413 = vadd.f32 %v1345, %v1381
      %v1414 = vadd.f32 %v1346, %v1382
      %v1415 = vadd.f32 %v1347, %v1383
      %v1416 = vadd.f32 %v1348, %v1384
      %v1417 = vadd.f32 %v1349, %v1385
      %v1418 = vadd.f32 %v1350, %v1386
      %v1419 = vadd.f32 %v1351, %v1387
      %v1420 = vadd.f32 %v1352, %v1388
      %v1421 = vadd.f32 %v1353, %v1389
      %v1422 = vld [vmem:[%s476 + $0x1] sm:$0xff]
      %v1423 = vld [vmem:[%s476 + $0x11] sm:$0xff]
      %v1424 = vld [vmem:[%s476 + $0x21] sm:$0xff]
      %v1425 = vld [vmem:[%s476 + $0x31] sm:$0xff]
      %v1426 = vld [vmem:[%s476 + $0x41] sm:$0xff]
      %v1427 = vld [vmem:[%s476 + $0x51] sm:$0xff]
      %v1428 = vld [vmem:[%s476 + $0x61] sm:$0xff]
      %v1429 = vld [vmem:[%s476 + $0x71] sm:$0xff]
      %v1430 = vld [vmem:[%s476 + $0x81] sm:$0xff]
      %v1431 = vld [vmem:[%s476 + $0x91] sm:$0xff]
      %v1432 = vld [vmem:[%s476 + $0xa1] sm:$0xff]
      %v1433 = vld [vmem:[%s476 + $0xb1] sm:$0xff]
      %v1434 = vld [vmem:[%s476 + $0xc1] sm:$0xff]
      %v1435 = vld [vmem:[%s476 + $0xd1] sm:$0xff]
      %v1436 = vld [vmem:[%s476 + $0xe1] sm:$0xff]
      %v1437 = vld [vmem:[%s476 + $0xf1] sm:$0xff]
      %v1438 = vld [vmem:[%s476 + $0x101] sm:$0xff]
      %v1439 = vld [vmem:[%s476 + $0x111] sm:$0xff]
      %v1440 = vld [vmem:[%s476 + $0x121] sm:$0xff]
      %v1441 = vld [vmem:[%s476 + $0x131] sm:$0xff]
      %v1442 = vld [vmem:[%s476 + $0x141] sm:$0xff]
      %v1443 = vld [vmem:[%s476 + $0x151] sm:$0xff]
      %v1444 = vld [vmem:[%s476 + $0x161] sm:$0xff]
      %v1445 = vld [vmem:[%s476 + $0x171] sm:$0xff]
      %v1446 = vld [vmem:[%s476 + $0x181] sm:$0xff]
      %v1447 = vld [vmem:[%s476 + $0x191] sm:$0xff]
      %v1448 = vld [vmem:[%s476 + $0x1a1] sm:$0xff]
      %v1449 = vld [vmem:[%s476 + $0x1b1] sm:$0xff]
      %v1450 = vld [vmem:[%s476 + $0x1c1] sm:$0xff]
      %v1451 = vld [vmem:[%s476 + $0x1d1] sm:$0xff]
      %v1452 = vld [vmem:[%s476 + $0x1e1] sm:$0xff]
      %v1453 = vld [vmem:[%s476 + $0x1f1] sm:$0xff]
      %v1454 = vld [vmem:[%s476 + $0x201] sm:$0xff]
      %v1455 = vld [vmem:[%s476 + $0x211] sm:$0xff]
      %v1456 = vld [vmem:[%s476 + $0x221] sm:$0xff]
      %v1457 = vld [vmem:[%s476 + $0x231] sm:$0xff]
      %v1458 = vld [vmem:[%s476 + $0x241] sm:$0xff]
      %v1459 = vld [vmem:[%s476 + $0x251] sm:$0xff]
      %v1460 = vld [vmem:[%s476 + $0x261] sm:$0xff]
      %v1461 = vld [vmem:[%s476 + $0x271] sm:$0xff]
      %v1462 = vld [vmem:[%s476 + $0x281] sm:$0xff]
      %v1463 = vld [vmem:[%s476 + $0x291] sm:$0xff]
      %v1464 = vld [vmem:[%s476 + $0x2a1] sm:$0xff]
      %v1465 = vld [vmem:[%s476 + $0x2b1] sm:$0xff]
      %v1466 = vld [vmem:[%s476 + $0x2c1] sm:$0xff]
      %v1467 = vld [vmem:[%s476 + $0x2d1] sm:$0xff]
      %v1468 = vld [vmem:[%s476 + $0x2e1] sm:$0xff]
      %v1469 = vld [vmem:[%s476 + $0x2f1] sm:$0xff]
      %v1470 = vld [vmem:[%s476 + $0x301] sm:$0xff]
      %v1471 = vld [vmem:[%s476 + $0x311] sm:$0xff]
      %v1472 = vld [vmem:[%s476 + $0x321] sm:$0xff]
      %v1473 = vld [vmem:[%s476 + $0x331] sm:$0xff]
      %v1474 = vld [vmem:[%s476 + $0x341] sm:$0xff]
      %v1475 = vld [vmem:[%s476 + $0x351] sm:$0xff]
      %v1476 = vld [vmem:[%s476 + $0x361] sm:$0xff]
      %v1477 = vld [vmem:[%s476 + $0x371] sm:$0xff]
      %v1478 = vld [vmem:[%s476 + $0x381] sm:$0xff]
      %v1479 = vld [vmem:[%s476 + $0x391] sm:$0xff]
      %v1480 = vld [vmem:[%s476 + $0x3a1] sm:$0xff]
      %v1481 = vld [vmem:[%s476 + $0x3b1] sm:$0xff]
      %v1482 = vlaneseq
      %v1483 = vshrl.u32 %v1482, 7
      %v1484 = vsub.s32 1, %v1483
      %v1485 = vrot.slane %v778, %v1484
      %v1486 = vmul.f32 %v1422, %v1485
      %v1487 = vmul.f32 %v1423, %v1485
      %v1488 = vmul.f32 %v1424, %v1485
      %v1489 = vmul.f32 %v1425, %v1485
      %v1490 = vmul.f32 %v1426, %v1485
      %v1491 = vmul.f32 %v1427, %v1485
      %v1492 = vmul.f32 %v1428, %v1485
      %v1493 = vmul.f32 %v1429, %v1485
      %v1494 = vmul.f32 %v1432, %v1485
      %v1495 = vmul.f32 %v1433, %v1485
      %v1496 = vmul.f32 %v1434, %v1485
      %v1497 = vmul.f32 %v1435, %v1485
      %v1498 = vmul.f32 %v1436, %v1485
      %v1499 = vmul.f32 %v1437, %v1485
      %v1500 = vmul.f32 %v1438, %v1485
      %v1501 = vmul.f32 %v1439, %v1485
      %v1502 = vmul.f32 %v1442, %v1485
      %v1503 = vmul.f32 %v1443, %v1485
      %v1504 = vmul.f32 %v1444, %v1485
      %v1505 = vmul.f32 %v1445, %v1485
      %v1506 = vmul.f32 %v1446, %v1485
      %v1507 = vmul.f32 %v1447, %v1485
      %v1508 = vmul.f32 %v1448, %v1485
      %v1509 = vmul.f32 %v1449, %v1485
      %v1510 = vmul.f32 %v1452, %v1485
      %v1511 = vmul.f32 %v1453, %v1485
      %v1512 = vmul.f32 %v1454, %v1485
      %v1513 = vmul.f32 %v1455, %v1485
      %v1514 = vmul.f32 %v1456, %v1485
      %v1515 = vmul.f32 %v1457, %v1485
      %v1516 = vmul.f32 %v1458, %v1485
      %v1517 = vmul.f32 %v1459, %v1485
      %v1518 = vlaneseq
      %v1519 = vshrl.u32 %v1518, 7
      %v1520 = vsub.s32 4, %v1519
      %v1521 = vrot.slane %v778, %v1520
      %v1522 = vmul.f32 %v1423, %v1521
      %v1523 = vmul.f32 %v1424, %v1521
      %v1524 = vmul.f32 %v1425, %v1521
      %v1525 = vmul.f32 %v1426, %v1521
      %v1526 = vmul.f32 %v1427, %v1521
      %v1527 = vmul.f32 %v1428, %v1521
      %v1528 = vmul.f32 %v1429, %v1521
      %v1529 = vmul.f32 %v1430, %v1521
      %v1530 = vmul.f32 %v1433, %v1521
      %v1531 = vmul.f32 %v1434, %v1521
      %v1532 = vmul.f32 %v1435, %v1521
      %v1533 = vmul.f32 %v1436, %v1521
      %v1534 = vmul.f32 %v1437, %v1521
      %v1535 = vmul.f32 %v1438, %v1521
      %v1536 = vmul.f32 %v1439, %v1521
      %v1537 = vmul.f32 %v1440, %v1521
      %v1538 = vmul.f32 %v1443, %v1521
      %v1539 = vmul.f32 %v1444, %v1521
      %v1540 = vmul.f32 %v1445, %v1521
      %v1541 = vmul.f32 %v1446, %v1521
      %v1542 = vmul.f32 %v1447, %v1521
      %v1543 = vmul.f32 %v1448, %v1521
      %v1544 = vmul.f32 %v1449, %v1521
      %v1545 = vmul.f32 %v1450, %v1521
      %v1546 = vmul.f32 %v1453, %v1521
      %v1547 = vmul.f32 %v1454, %v1521
      %v1548 = vmul.f32 %v1455, %v1521
      %v1549 = vmul.f32 %v1456, %v1521
      %v1550 = vmul.f32 %v1457, %v1521
      %v1551 = vmul.f32 %v1458, %v1521
      %v1552 = vmul.f32 %v1459, %v1521
      %v1553 = vmul.f32 %v1460, %v1521
      %v1554 = vadd.f32 %v1486, %v1522
      %v1555 = vadd.f32 %v1487, %v1523
      %v1556 = vadd.f32 %v1488, %v1524
      %v1557 = vadd.f32 %v1489, %v1525
      %v1558 = vadd.f32 %v1490, %v1526
      %v1559 = vadd.f32 %v1491, %v1527
      %v1560 = vadd.f32 %v1492, %v1528
      %v1561 = vadd.f32 %v1493, %v1529
      %v1562 = vadd.f32 %v1494, %v1530
      %v1563 = vadd.f32 %v1495, %v1531
      %v1564 = vadd.f32 %v1496, %v1532
      %v1565 = vadd.f32 %v1497, %v1533
      %v1566 = vadd.f32 %v1498, %v1534
      %v1567 = vadd.f32 %v1499, %v1535
      %v1568 = vadd.f32 %v1500, %v1536
      %v1569 = vadd.f32 %v1501, %v1537
      %v1570 = vadd.f32 %v1502, %v1538
      %v1571 = vadd.f32 %v1503, %v1539
      %v1572 = vadd.f32 %v1504, %v1540
      %v1573 = vadd.f32 %v1505, %v1541
      %v1574 = vadd.f32 %v1506, %v1542
      %v1575 = vadd.f32 %v1507, %v1543
      %v1576 = vadd.f32 %v1508, %v1544
      %v1577 = vadd.f32 %v1509, %v1545
      %v1578 = vadd.f32 %v1510, %v1546
      %v1579 = vadd.f32 %v1511, %v1547
      %v1580 = vadd.f32 %v1512, %v1548
      %v1581 = vadd.f32 %v1513, %v1549
      %v1582 = vadd.f32 %v1514, %v1550
      %v1583 = vadd.f32 %v1515, %v1551
      %v1584 = vadd.f32 %v1516, %v1552
      %v1585 = vadd.f32 %v1517, %v1553
      %v1586 = vlaneseq
      %v1587 = vshrl.u32 %v1586, 7
      %v1588 = vsub.s32 7, %v1587
      %v1589 = vrot.slane %v778, %v1588
      %v1590 = vmul.f32 %v1424, %v1589
      %v1591 = vmul.f32 %v1425, %v1589
      %v1592 = vmul.f32 %v1426, %v1589
      %v1593 = vmul.f32 %v1427, %v1589
      %v1594 = vmul.f32 %v1428, %v1589
      %v1595 = vmul.f32 %v1429, %v1589
      %v1596 = vmul.f32 %v1430, %v1589
      %v1597 = vmul.f32 %v1431, %v1589
      %v1598 = vmul.f32 %v1434, %v1589
      %v1599 = vmul.f32 %v1435, %v1589
      %v1600 = vmul.f32 %v1436, %v1589
      %v1601 = vmul.f32 %v1437, %v1589
      %v1602 = vmul.f32 %v1438, %v1589
      %v1603 = vmul.f32 %v1439, %v1589
      %v1604 = vmul.f32 %v1440, %v1589
      %v1605 = vmul.f32 %v1441, %v1589
      %v1606 = vmul.f32 %v1444, %v1589
      %v1607 = vmul.f32 %v1445, %v1589
      %v1608 = vmul.f32 %v1446, %v1589
      %v1609 = vmul.f32 %v1447, %v1589
      %v1610 = vmul.f32 %v1448, %v1589
      %v1611 = vmul.f32 %v1449, %v1589
      %v1612 = vmul.f32 %v1450, %v1589
      %v1613 = vmul.f32 %v1451, %v1589
      %v1614 = vmul.f32 %v1454, %v1589
      %v1615 = vmul.f32 %v1455, %v1589
      %v1616 = vmul.f32 %v1456, %v1589
      %v1617 = vmul.f32 %v1457, %v1589
      %v1618 = vmul.f32 %v1458, %v1589
      %v1619 = vmul.f32 %v1459, %v1589
      %v1620 = vmul.f32 %v1460, %v1589
      %v1621 = vmul.f32 %v1461, %v1589
      %v1622 = vadd.f32 %v1554, %v1590
      %v1623 = vadd.f32 %v1555, %v1591
      %v1624 = vadd.f32 %v1556, %v1592
      %v1625 = vadd.f32 %v1557, %v1593
      %v1626 = vadd.f32 %v1558, %v1594
      %v1627 = vadd.f32 %v1559, %v1595
      %v1628 = vadd.f32 %v1560, %v1596
      %v1629 = vadd.f32 %v1561, %v1597
      %v1630 = vadd.f32 %v1562, %v1598
      %v1631 = vadd.f32 %v1563, %v1599
      %v1632 = vadd.f32 %v1564, %v1600
      %v1633 = vadd.f32 %v1565, %v1601
      %v1634 = vadd.f32 %v1566, %v1602
      %v1635 = vadd.f32 %v1567, %v1603
      %v1636 = vadd.f32 %v1568, %v1604
      %v1637 = vadd.f32 %v1569, %v1605
      %v1638 = vadd.f32 %v1570, %v1606
      %v1639 = vadd.f32 %v1571, %v1607
      %v1640 = vadd.f32 %v1572, %v1608
      %v1641 = vadd.f32 %v1573, %v1609
      %v1642 = vadd.f32 %v1574, %v1610
      %v1643 = vadd.f32 %v1575, %v1611
      %v1644 = vadd.f32 %v1576, %v1612
      %v1645 = vadd.f32 %v1577, %v1613
      %v1646 = vadd.f32 %v1578, %v1614
      %v1647 = vadd.f32 %v1579, %v1615
      %v1648 = vadd.f32 %v1580, %v1616
      %v1649 = vadd.f32 %v1581, %v1617
      %v1650 = vadd.f32 %v1582, %v1618
      %v1651 = vadd.f32 %v1583, %v1619
      %v1652 = vadd.f32 %v1584, %v1620
      %v1653 = vadd.f32 %v1585, %v1621
      %v1654 = vlaneseq
      %v1655 = vshrl.u32 %v1654, 7
      %v1656 = vsub.s32 2, %v1655
      %v1657 = vrot.slane %v779, %v1656
      %v1658 = vmul.f32 %v1432, %v1657
      %v1659 = vmul.f32 %v1433, %v1657
      %v1660 = vmul.f32 %v1434, %v1657
      %v1661 = vmul.f32 %v1435, %v1657
      %v1662 = vmul.f32 %v1436, %v1657
      %v1663 = vmul.f32 %v1437, %v1657
      %v1664 = vmul.f32 %v1438, %v1657
      %v1665 = vmul.f32 %v1439, %v1657
      %v1666 = vmul.f32 %v1442, %v1657
      %v1667 = vmul.f32 %v1443, %v1657
      %v1668 = vmul.f32 %v1444, %v1657
      %v1669 = vmul.f32 %v1445, %v1657
      %v1670 = vmul.f32 %v1446, %v1657
      %v1671 = vmul.f32 %v1447, %v1657
      %v1672 = vmul.f32 %v1448, %v1657
      %v1673 = vmul.f32 %v1449, %v1657
      %v1674 = vmul.f32 %v1452, %v1657
      %v1675 = vmul.f32 %v1453, %v1657
      %v1676 = vmul.f32 %v1454, %v1657
      %v1677 = vmul.f32 %v1455, %v1657
      %v1678 = vmul.f32 %v1456, %v1657
      %v1679 = vmul.f32 %v1457, %v1657
      %v1680 = vmul.f32 %v1458, %v1657
      %v1681 = vmul.f32 %v1459, %v1657
      %v1682 = vmul.f32 %v1462, %v1657
      %v1683 = vmul.f32 %v1463, %v1657
      %v1684 = vmul.f32 %v1464, %v1657
      %v1685 = vmul.f32 %v1465, %v1657
      %v1686 = vmul.f32 %v1466, %v1657
      %v1687 = vmul.f32 %v1467, %v1657
      %v1688 = vmul.f32 %v1468, %v1657
      %v1689 = vmul.f32 %v1469, %v1657
      %v1690 = vadd.f32 %v1622, %v1658
      %v1691 = vadd.f32 %v1623, %v1659
      %v1692 = vadd.f32 %v1624, %v1660
      %v1693 = vadd.f32 %v1625, %v1661
      %v1694 = vadd.f32 %v1626, %v1662
      %v1695 = vadd.f32 %v1627, %v1663
      %v1696 = vadd.f32 %v1628, %v1664
      %v1697 = vadd.f32 %v1629, %v1665
      %v1698 = vadd.f32 %v1630, %v1666
      %v1699 = vadd.f32 %v1631, %v1667
      %v1700 = vadd.f32 %v1632, %v1668
      %v1701 = vadd.f32 %v1633, %v1669
      %v1702 = vadd.f32 %v1634, %v1670
      %v1703 = vadd.f32 %v1635, %v1671
      %v1704 = vadd.f32 %v1636, %v1672
      %v1705 = vadd.f32 %v1637, %v1673
      %v1706 = vadd.f32 %v1638, %v1674
      %v1707 = vadd.f32 %v1639, %v1675
      %v1708 = vadd.f32 %v1640, %v1676
      %v1709 = vadd.f32 %v1641, %v1677
      %v1710 = vadd.f32 %v1642, %v1678
      %v1711 = vadd.f32 %v1643, %v1679
      %v1712 = vadd.f32 %v1644, %v1680
      %v1713 = vadd.f32 %v1645, %v1681
      %v1714 = vadd.f32 %v1646, %v1682
      %v1715 = vadd.f32 %v1647, %v1683
      %v1716 = vadd.f32 %v1648, %v1684
      %v1717 = vadd.f32 %v1649, %v1685
      %v1718 = vadd.f32 %v1650, %v1686
      %v1719 = vadd.f32 %v1651, %v1687
      %v1720 = vadd.f32 %v1652, %v1688
      %v1721 = vadd.f32 %v1653, %v1689
      %v1722 = vlaneseq
      %v1723 = vshrl.u32 %v1722, 7
      %v1724 = vsub.s32 5, %v1723
      %v1725 = vrot.slane %v779, %v1724
      %v1726 = vmul.f32 %v1433, %v1725
      %v1727 = vmul.f32 %v1434, %v1725
      %v1728 = vmul.f32 %v1435, %v1725
      %v1729 = vmul.f32 %v1436, %v1725
      %v1730 = vmul.f32 %v1437, %v1725
      %v1731 = vmul.f32 %v1438, %v1725
      %v1732 = vmul.f32 %v1439, %v1725
      %v1733 = vmul.f32 %v1440, %v1725
      %v1734 = vmul.f32 %v1443, %v1725
      %v1735 = vmul.f32 %v1444, %v1725
      %v1736 = vmul.f32 %v1445, %v1725
      %v1737 = vmul.f32 %v1446, %v1725
      %v1738 = vmul.f32 %v1447, %v1725
      %v1739 = vmul.f32 %v1448, %v1725
      %v1740 = vmul.f32 %v1449, %v1725
      %v1741 = vmul.f32 %v1450, %v1725
      %v1742 = vmul.f32 %v1453, %v1725
      %v1743 = vmul.f32 %v1454, %v1725
      %v1744 = vmul.f32 %v1455, %v1725
      %v1745 = vmul.f32 %v1456, %v1725
      %v1746 = vmul.f32 %v1457, %v1725
      %v1747 = vmul.f32 %v1458, %v1725
      %v1748 = vmul.f32 %v1459, %v1725
      %v1749 = vmul.f32 %v1460, %v1725
      %v1750 = vmul.f32 %v1463, %v1725
      %v1751 = vmul.f32 %v1464, %v1725
      %v1752 = vmul.f32 %v1465, %v1725
      %v1753 = vmul.f32 %v1466, %v1725
      %v1754 = vmul.f32 %v1467, %v1725
      %v1755 = vmul.f32 %v1468, %v1725
      %v1756 = vmul.f32 %v1469, %v1725
      %v1757 = vmul.f32 %v1470, %v1725
      %v1758 = vadd.f32 %v1690, %v1726
      %v1759 = vadd.f32 %v1691, %v1727
      %v1760 = vadd.f32 %v1692, %v1728
      %v1761 = vadd.f32 %v1693, %v1729
      %v1762 = vadd.f32 %v1694, %v1730
      %v1763 = vadd.f32 %v1695, %v1731
      %v1764 = vadd.f32 %v1696, %v1732
      %v1765 = vadd.f32 %v1697, %v1733
      %v1766 = vadd.f32 %v1698, %v1734
      %v1767 = vadd.f32 %v1699, %v1735
      %v1768 = vadd.f32 %v1700, %v1736
      %v1769 = vadd.f32 %v1701, %v1737
      %v1770 = vadd.f32 %v1702, %v1738
      %v1771 = vadd.f32 %v1703, %v1739
      %v1772 = vadd.f32 %v1704, %v1740
      %v1773 = vadd.f32 %v1705, %v1741
      %v1774 = vadd.f32 %v1706, %v1742
      %v1775 = vadd.f32 %v1707, %v1743
      %v1776 = vadd.f32 %v1708, %v1744
      %v1777 = vadd.f32 %v1709, %v1745
      %v1778 = vadd.f32 %v1710, %v1746
      %v1779 = vadd.f32 %v1711, %v1747
      %v1780 = vadd.f32 %v1712, %v1748
      %v1781 = vadd.f32 %v1713, %v1749
      %v1782 = vadd.f32 %v1714, %v1750
      %v1783 = vadd.f32 %v1715, %v1751
      %v1784 = vadd.f32 %v1716, %v1752
      %v1785 = vadd.f32 %v1717, %v1753
      %v1786 = vadd.f32 %v1718, %v1754
      %v1787 = vadd.f32 %v1719, %v1755
      %v1788 = vadd.f32 %v1720, %v1756
      %v1789 = vadd.f32 %v1721, %v1757
      %v1790 = vlaneseq
      %v1791 = vshrl.u32 %v1790, 7
      %v1792 = vsub.s32 0, %v1791
      %v1793 = vrot.slane %v780, %v1792
      %v1794 = vmul.f32 %v1434, %v1793
      %v1795 = vmul.f32 %v1435, %v1793
      %v1796 = vmul.f32 %v1436, %v1793
      %v1797 = vmul.f32 %v1437, %v1793
      %v1798 = vmul.f32 %v1438, %v1793
      %v1799 = vmul.f32 %v1439, %v1793
      %v1800 = vmul.f32 %v1440, %v1793
      %v1801 = vmul.f32 %v1441, %v1793
      %v1802 = vmul.f32 %v1444, %v1793
      %v1803 = vmul.f32 %v1445, %v1793
      %v1804 = vmul.f32 %v1446, %v1793
      %v1805 = vmul.f32 %v1447, %v1793
      %v1806 = vmul.f32 %v1448, %v1793
      %v1807 = vmul.f32 %v1449, %v1793
      %v1808 = vmul.f32 %v1450, %v1793
      %v1809 = vmul.f32 %v1451, %v1793
      %v1810 = vmul.f32 %v1454, %v1793
      %v1811 = vmul.f32 %v1455, %v1793
      %v1812 = vmul.f32 %v1456, %v1793
      %v1813 = vmul.f32 %v1457, %v1793
      %v1814 = vmul.f32 %v1458, %v1793
      %v1815 = vmul.f32 %v1459, %v1793
      %v1816 = vmul.f32 %v1460, %v1793
      %v1817 = vmul.f32 %v1461, %v1793
      %v1818 = vmul.f32 %v1464, %v1793
      %v1819 = vmul.f32 %v1465, %v1793
      %v1820 = vmul.f32 %v1466, %v1793
      %v1821 = vmul.f32 %v1467, %v1793
      %v1822 = vmul.f32 %v1468, %v1793
      %v1823 = vmul.f32 %v1469, %v1793
      %v1824 = vmul.f32 %v1470, %v1793
      %v1825 = vmul.f32 %v1471, %v1793
      %v1826 = vadd.f32 %v1758, %v1794
      %v1827 = vadd.f32 %v1759, %v1795
      %v1828 = vadd.f32 %v1760, %v1796
      %v1829 = vadd.f32 %v1761, %v1797
      %v1830 = vadd.f32 %v1762, %v1798
      %v1831 = vadd.f32 %v1763, %v1799
      %v1832 = vadd.f32 %v1764, %v1800
      %v1833 = vadd.f32 %v1765, %v1801
      %v1834 = vadd.f32 %v1766, %v1802
      %v1835 = vadd.f32 %v1767, %v1803
      %v1836 = vadd.f32 %v1768, %v1804
      %v1837 = vadd.f32 %v1769, %v1805
      %v1838 = vadd.f32 %v1770, %v1806
      %v1839 = vadd.f32 %v1771, %v1807
      %v1840 = vadd.f32 %v1772, %v1808
      %v1841 = vadd.f32 %v1773, %v1809
      %v1842 = vadd.f32 %v1774, %v1810
      %v1843 = vadd.f32 %v1775, %v1811
      %v1844 = vadd.f32 %v1776, %v1812
      %v1845 = vadd.f32 %v1777, %v1813
      %v1846 = vadd.f32 %v1778, %v1814
      %v1847 = vadd.f32 %v1779, %v1815
      %v1848 = vadd.f32 %v1780, %v1816
      %v1849 = vadd.f32 %v1781, %v1817
      %v1850 = vadd.f32 %v1782, %v1818
      %v1851 = vadd.f32 %v1783, %v1819
      %v1852 = vadd.f32 %v1784, %v1820
      %v1853 = vadd.f32 %v1785, %v1821
      %v1854 = vadd.f32 %v1786, %v1822
      %v1855 = vadd.f32 %v1787, %v1823
      %v1856 = vadd.f32 %v1788, %v1824
      %v1857 = vadd.f32 %v1789, %v1825
      %v1858 = vlaneseq
      %v1859 = vshrl.u32 %v1858, 7
      %v1860 = vsub.s32 3, %v1859
      %v1861 = vrot.slane %v780, %v1860
      %v1862 = vmul.f32 %v1442, %v1861
      %v1863 = vmul.f32 %v1443, %v1861
      %v1864 = vmul.f32 %v1444, %v1861
      %v1865 = vmul.f32 %v1445, %v1861
      %v1866 = vmul.f32 %v1446, %v1861
      %v1867 = vmul.f32 %v1447, %v1861
      %v1868 = vmul.f32 %v1448, %v1861
      %v1869 = vmul.f32 %v1449, %v1861
      %v1870 = vmul.f32 %v1452, %v1861
      %v1871 = vmul.f32 %v1453, %v1861
      %v1872 = vmul.f32 %v1454, %v1861
      %v1873 = vmul.f32 %v1455, %v1861
      %v1874 = vmul.f32 %v1456, %v1861
      %v1875 = vmul.f32 %v1457, %v1861
      %v1876 = vmul.f32 %v1458, %v1861
      %v1877 = vmul.f32 %v1459, %v1861
      %v1878 = vmul.f32 %v1462, %v1861
      %v1879 = vmul.f32 %v1463, %v1861
      %v1880 = vmul.f32 %v1464, %v1861
      %v1881 = vmul.f32 %v1465, %v1861
      %v1882 = vmul.f32 %v1466, %v1861
      %v1883 = vmul.f32 %v1467, %v1861
      %v1884 = vmul.f32 %v1468, %v1861
      %v1885 = vmul.f32 %v1469, %v1861
      %v1886 = vmul.f32 %v1472, %v1861
      %v1887 = vmul.f32 %v1473, %v1861
      %v1888 = vmul.f32 %v1474, %v1861
      %v1889 = vmul.f32 %v1475, %v1861
      %v1890 = vmul.f32 %v1476, %v1861
      %v1891 = vmul.f32 %v1477, %v1861
      %v1892 = vmul.f32 %v1478, %v1861
      %v1893 = vmul.f32 %v1479, %v1861
      %v1894 = vadd.f32 %v1826, %v1862
      %v1895 = vadd.f32 %v1827, %v1863
      %v1896 = vadd.f32 %v1828, %v1864
      %v1897 = vadd.f32 %v1829, %v1865
      %v1898 = vadd.f32 %v1830, %v1866
      %v1899 = vadd.f32 %v1831, %v1867
      %v1900 = vadd.f32 %v1832, %v1868
      %v1901 = vadd.f32 %v1833, %v1869
      %v1902 = vadd.f32 %v1834, %v1870
      %v1903 = vadd.f32 %v1835, %v1871
      %v1904 = vadd.f32 %v1836, %v1872
      %v1905 = vadd.f32 %v1837, %v1873
      %v1906 = vadd.f32 %v1838, %v1874
      %v1907 = vadd.f32 %v1839, %v1875
      %v1908 = vadd.f32 %v1840, %v1876
      %v1909 = vadd.f32 %v1841, %v1877
      %v1910 = vadd.f32 %v1842, %v1878
      %v1911 = vadd.f32 %v1843, %v1879
      %v1912 = vadd.f32 %v1844, %v1880
      %v1913 = vadd.f32 %v1845, %v1881
      %v1914 = vadd.f32 %v1846, %v1882
      %v1915 = vadd.f32 %v1847, %v1883
      %v1916 = vadd.f32 %v1848, %v1884
      %v1917 = vadd.f32 %v1849, %v1885
      %v1918 = vadd.f32 %v1850, %v1886
      %v1919 = vadd.f32 %v1851, %v1887
      %v1920 = vadd.f32 %v1852, %v1888
      %v1921 = vadd.f32 %v1853, %v1889
      %v1922 = vadd.f32 %v1854, %v1890
      %v1923 = vadd.f32 %v1855, %v1891
      %v1924 = vadd.f32 %v1856, %v1892
      %v1925 = vadd.f32 %v1857, %v1893
      %v1926 = vlaneseq
      %v1927 = vshrl.u32 %v1926, 7
      %v1928 = vsub.s32 6, %v1927
      %v1929 = vrot.slane %v780, %v1928
      %v1930 = vmul.f32 %v1443, %v1929
      %v1931 = vmul.f32 %v1444, %v1929
      %v1932 = vmul.f32 %v1445, %v1929
      %v1933 = vmul.f32 %v1446, %v1929
      %v1934 = vmul.f32 %v1447, %v1929
      %v1935 = vmul.f32 %v1448, %v1929
      %v1936 = vmul.f32 %v1449, %v1929
      %v1937 = vmul.f32 %v1450, %v1929
      %v1938 = vmul.f32 %v1453, %v1929
      %v1939 = vmul.f32 %v1454, %v1929
      %v1940 = vmul.f32 %v1455, %v1929
      %v1941 = vmul.f32 %v1456, %v1929
      %v1942 = vmul.f32 %v1457, %v1929
      %v1943 = vmul.f32 %v1458, %v1929
      %v1944 = vmul.f32 %v1459, %v1929
      %v1945 = vmul.f32 %v1460, %v1929
      %v1946 = vmul.f32 %v1463, %v1929
      %v1947 = vmul.f32 %v1464, %v1929
      %v1948 = vmul.f32 %v1465, %v1929
      %v1949 = vmul.f32 %v1466, %v1929
      %v1950 = vmul.f32 %v1467, %v1929
      %v1951 = vmul.f32 %v1468, %v1929
      %v1952 = vmul.f32 %v1469, %v1929
      %v1953 = vmul.f32 %v1470, %v1929
      %v1954 = vmul.f32 %v1473, %v1929
      %v1955 = vmul.f32 %v1474, %v1929
      %v1956 = vmul.f32 %v1475, %v1929
      %v1957 = vmul.f32 %v1476, %v1929
      %v1958 = vmul.f32 %v1477, %v1929
      %v1959 = vmul.f32 %v1478, %v1929
      %v1960 = vmul.f32 %v1479, %v1929
      %v1961 = vmul.f32 %v1480, %v1929
      %v1962 = vadd.f32 %v1894, %v1930
      %v1963 = vadd.f32 %v1895, %v1931
      %v1964 = vadd.f32 %v1896, %v1932
      %v1965 = vadd.f32 %v1897, %v1933
      %v1966 = vadd.f32 %v1898, %v1934
      %v1967 = vadd.f32 %v1899, %v1935
      %v1968 = vadd.f32 %v1900, %v1936
      %v1969 = vadd.f32 %v1901, %v1937
      %v1970 = vadd.f32 %v1902, %v1938
      %v1971 = vadd.f32 %v1903, %v1939
      %v1972 = vadd.f32 %v1904, %v1940
      %v1973 = vadd.f32 %v1905, %v1941
      %v1974 = vadd.f32 %v1906, %v1942
      %v1975 = vadd.f32 %v1907, %v1943
      %v1976 = vadd.f32 %v1908, %v1944
      %v1977 = vadd.f32 %v1909, %v1945
      %v1978 = vadd.f32 %v1910, %v1946
      %v1979 = vadd.f32 %v1911, %v1947
      %v1980 = vadd.f32 %v1912, %v1948
      %v1981 = vadd.f32 %v1913, %v1949
      %v1982 = vadd.f32 %v1914, %v1950
      %v1983 = vadd.f32 %v1915, %v1951
      %v1984 = vadd.f32 %v1916, %v1952
      %v1985 = vadd.f32 %v1917, %v1953
      %v1986 = vadd.f32 %v1918, %v1954
      %v1987 = vadd.f32 %v1919, %v1955
      %v1988 = vadd.f32 %v1920, %v1956
      %v1989 = vadd.f32 %v1921, %v1957
      %v1990 = vadd.f32 %v1922, %v1958
      %v1991 = vadd.f32 %v1923, %v1959
      %v1992 = vadd.f32 %v1924, %v1960
      %v1993 = vadd.f32 %v1925, %v1961
      %v1994 = vlaneseq
      %v1995 = vshrl.u32 %v1994, 7
      %v1996 = vsub.s32 1, %v1995
      %v1997 = vrot.slane %v781, %v1996
      %v1998 = vmul.f32 %v1444, %v1997
      %v1999 = vmul.f32 %v1445, %v1997
      %v2000 = vmul.f32 %v1446, %v1997
      %v2001 = vmul.f32 %v1447, %v1997
      %v2002 = vmul.f32 %v1448, %v1997
      %v2003 = vmul.f32 %v1449, %v1997
      %v2004 = vmul.f32 %v1450, %v1997
      %v2005 = vmul.f32 %v1451, %v1997
      %v2006 = vmul.f32 %v1454, %v1997
      %v2007 = vmul.f32 %v1455, %v1997
      %v2008 = vmul.f32 %v1456, %v1997
      %v2009 = vmul.f32 %v1457, %v1997
      %v2010 = vmul.f32 %v1458, %v1997
      %v2011 = vmul.f32 %v1459, %v1997
      %v2012 = vmul.f32 %v1460, %v1997
      %v2013 = vmul.f32 %v1461, %v1997
      %v2014 = vmul.f32 %v1464, %v1997
      %v2015 = vmul.f32 %v1465, %v1997
      %v2016 = vmul.f32 %v1466, %v1997
      %v2017 = vmul.f32 %v1467, %v1997
      %v2018 = vmul.f32 %v1468, %v1997
      %v2019 = vmul.f32 %v1469, %v1997
      %v2020 = vmul.f32 %v1470, %v1997
      %v2021 = vmul.f32 %v1471, %v1997
      %v2022 = vmul.f32 %v1474, %v1997
      %v2023 = vmul.f32 %v1475, %v1997
      %v2024 = vmul.f32 %v1476, %v1997
      %v2025 = vmul.f32 %v1477, %v1997
      %v2026 = vmul.f32 %v1478, %v1997
      %v2027 = vmul.f32 %v1479, %v1997
      %v2028 = vmul.f32 %v1480, %v1997
      %v2029 = vmul.f32 %v1481, %v1997
      %v2030 = vadd.f32 %v1962, %v1998
      %v2031 = vadd.f32 %v1963, %v1999
      %v2032 = vadd.f32 %v1964, %v2000
      %v2033 = vadd.f32 %v1965, %v2001
      %v2034 = vadd.f32 %v1966, %v2002
      %v2035 = vadd.f32 %v1967, %v2003
      %v2036 = vadd.f32 %v1968, %v2004
      %v2037 = vadd.f32 %v1969, %v2005
      %v2038 = vadd.f32 %v1970, %v2006
      %v2039 = vadd.f32 %v1971, %v2007
      %v2040 = vadd.f32 %v1972, %v2008
      %v2041 = vadd.f32 %v1973, %v2009
      %v2042 = vadd.f32 %v1974, %v2010
      %v2043 = vadd.f32 %v1975, %v2011
      %v2044 = vadd.f32 %v1976, %v2012
      %v2045 = vadd.f32 %v1977, %v2013
      %v2046 = vadd.f32 %v1978, %v2014
      %v2047 = vadd.f32 %v1979, %v2015
      %v2048 = vadd.f32 %v1980, %v2016
      %v2049 = vadd.f32 %v1981, %v2017
      %v2050 = vadd.f32 %v1982, %v2018
      %v2051 = vadd.f32 %v1983, %v2019
      %v2052 = vadd.f32 %v1984, %v2020
      %v2053 = vadd.f32 %v1985, %v2021
      %v2054 = vadd.f32 %v1986, %v2022
      %v2055 = vadd.f32 %v1987, %v2023
      %v2056 = vadd.f32 %v1988, %v2024
      %v2057 = vadd.f32 %v1989, %v2025
      %v2058 = vadd.f32 %v1990, %v2026
      %v2059 = vadd.f32 %v1991, %v2027
      %v2060 = vadd.f32 %v1992, %v2028
      %v2061 = vadd.f32 %v1993, %v2029
      %v2062 = vld [vmem:[%s476 + $0x2] sm:$0xff]
      %v2063 = vld [vmem:[%s476 + $0x12] sm:$0xff]
      %v2064 = vld [vmem:[%s476 + $0x22] sm:$0xff]
      %v2065 = vld [vmem:[%s476 + $0x32] sm:$0xff]
      %v2066 = vld [vmem:[%s476 + $0x42] sm:$0xff]
      %v2067 = vld [vmem:[%s476 + $0x52] sm:$0xff]
      %v2068 = vld [vmem:[%s476 + $0x62] sm:$0xff]
      %v2069 = vld [vmem:[%s476 + $0x72] sm:$0xff]
      %v2070 = vld [vmem:[%s476 + $0x82] sm:$0xff]
      %v2071 = vld [vmem:[%s476 + $0x92] sm:$0xff]
      %v2072 = vld [vmem:[%s476 + $0xa2] sm:$0xff]
      %v2073 = vld [vmem:[%s476 + $0xb2] sm:$0xff]
      %v2074 = vld [vmem:[%s476 + $0xc2] sm:$0xff]
      %v2075 = vld [vmem:[%s476 + $0xd2] sm:$0xff]
      %v2076 = vld [vmem:[%s476 + $0xe2] sm:$0xff]
      %v2077 = vld [vmem:[%s476 + $0xf2] sm:$0xff]
      %v2078 = vld [vmem:[%s476 + $0x102] sm:$0xff]
      %v2079 = vld [vmem:[%s476 + $0x112] sm:$0xff]
      %v2080 = vld [vmem:[%s476 + $0x122] sm:$0xff]
      %v2081 = vld [vmem:[%s476 + $0x132] sm:$0xff]
      %v2082 = vld [vmem:[%s476 + $0x142] sm:$0xff]
      %v2083 = vld [vmem:[%s476 + $0x152] sm:$0xff]
      %v2084 = vld [vmem:[%s476 + $0x162] sm:$0xff]
      %v2085 = vld [vmem:[%s476 + $0x172] sm:$0xff]
      %v2086 = vld [vmem:[%s476 + $0x182] sm:$0xff]
      %v2087 = vld [vmem:[%s476 + $0x192] sm:$0xff]
      %v2088 = vld [vmem:[%s476 + $0x1a2] sm:$0xff]
      %v2089 = vld [vmem:[%s476 + $0x1b2] sm:$0xff]
      %v2090 = vld [vmem:[%s476 + $0x1c2] sm:$0xff]
      %v2091 = vld [vmem:[%s476 + $0x1d2] sm:$0xff]
      %v2092 = vld [vmem:[%s476 + $0x1e2] sm:$0xff]
      %v2093 = vld [vmem:[%s476 + $0x1f2] sm:$0xff]
      %v2094 = vld [vmem:[%s476 + $0x202] sm:$0xff]
      %v2095 = vld [vmem:[%s476 + $0x212] sm:$0xff]
      %v2096 = vld [vmem:[%s476 + $0x222] sm:$0xff]
      %v2097 = vld [vmem:[%s476 + $0x232] sm:$0xff]
      %v2098 = vld [vmem:[%s476 + $0x242] sm:$0xff]
      %v2099 = vld [vmem:[%s476 + $0x252] sm:$0xff]
      %v2100 = vld [vmem:[%s476 + $0x262] sm:$0xff]
      %v2101 = vld [vmem:[%s476 + $0x272] sm:$0xff]
      %v2102 = vld [vmem:[%s476 + $0x282] sm:$0xff]
      %v2103 = vld [vmem:[%s476 + $0x292] sm:$0xff]
      %v2104 = vld [vmem:[%s476 + $0x2a2] sm:$0xff]
      %v2105 = vld [vmem:[%s476 + $0x2b2] sm:$0xff]
      %v2106 = vld [vmem:[%s476 + $0x2c2] sm:$0xff]
      %v2107 = vld [vmem:[%s476 + $0x2d2] sm:$0xff]
      %v2108 = vld [vmem:[%s476 + $0x2e2] sm:$0xff]
      %v2109 = vld [vmem:[%s476 + $0x2f2] sm:$0xff]
      %v2110 = vld [vmem:[%s476 + $0x302] sm:$0xff]
      %v2111 = vld [vmem:[%s476 + $0x312] sm:$0xff]
      %v2112 = vld [vmem:[%s476 + $0x322] sm:$0xff]
      %v2113 = vld [vmem:[%s476 + $0x332] sm:$0xff]
      %v2114 = vld [vmem:[%s476 + $0x342] sm:$0xff]
      %v2115 = vld [vmem:[%s476 + $0x352] sm:$0xff]
      %v2116 = vld [vmem:[%s476 + $0x362] sm:$0xff]
      %v2117 = vld [vmem:[%s476 + $0x372] sm:$0xff]
      %v2118 = vld [vmem:[%s476 + $0x382] sm:$0xff]
      %v2119 = vld [vmem:[%s476 + $0x392] sm:$0xff]
      %v2120 = vld [vmem:[%s476 + $0x3a2] sm:$0xff]
      %v2121 = vld [vmem:[%s476 + $0x3b2] sm:$0xff]
      %v2122 = vlaneseq
      %v2123 = vshrl.u32 %v2122, 7
      %v2124 = vsub.s32 2, %v2123
      %v2125 = vrot.slane %v778, %v2124
      %v2126 = vmul.f32 %v2062, %v2125
      %v2127 = vmul.f32 %v2063, %v2125
      %v2128 = vmul.f32 %v2064, %v2125
      %v2129 = vmul.f32 %v2065, %v2125
      %v2130 = vmul.f32 %v2066, %v2125
      %v2131 = vmul.f32 %v2067, %v2125
      %v2132 = vmul.f32 %v2068, %v2125
      %v2133 = vmul.f32 %v2069, %v2125
      %v2134 = vmul.f32 %v2072, %v2125
      %v2135 = vmul.f32 %v2073, %v2125
      %v2136 = vmul.f32 %v2074, %v2125
      %v2137 = vmul.f32 %v2075, %v2125
      %v2138 = vmul.f32 %v2076, %v2125
      %v2139 = vmul.f32 %v2077, %v2125
      %v2140 = vmul.f32 %v2078, %v2125
      %v2141 = vmul.f32 %v2079, %v2125
      %v2142 = vmul.f32 %v2082, %v2125
      %v2143 = vmul.f32 %v2083, %v2125
      %v2144 = vmul.f32 %v2084, %v2125
      %v2145 = vmul.f32 %v2085, %v2125
      %v2146 = vmul.f32 %v2086, %v2125
      %v2147 = vmul.f32 %v2087, %v2125
      %v2148 = vmul.f32 %v2088, %v2125
      %v2149 = vmul.f32 %v2089, %v2125
      %v2150 = vmul.f32 %v2092, %v2125
      %v2151 = vmul.f32 %v2093, %v2125
      %v2152 = vmul.f32 %v2094, %v2125
      %v2153 = vmul.f32 %v2095, %v2125
      %v2154 = vmul.f32 %v2096, %v2125
      %v2155 = vmul.f32 %v2097, %v2125
      %v2156 = vmul.f32 %v2098, %v2125
      %v2157 = vmul.f32 %v2099, %v2125
      %v2158 = vlaneseq
      %v2159 = vshrl.u32 %v2158, 7
      %v2160 = vsub.s32 5, %v2159
      %v2161 = vrot.slane %v778, %v2160
      %v2162 = vmul.f32 %v2063, %v2161
      %v2163 = vmul.f32 %v2064, %v2161
      %v2164 = vmul.f32 %v2065, %v2161
      %v2165 = vmul.f32 %v2066, %v2161
      %v2166 = vmul.f32 %v2067, %v2161
      %v2167 = vmul.f32 %v2068, %v2161
      %v2168 = vmul.f32 %v2069, %v2161
      %v2169 = vmul.f32 %v2070, %v2161
      %v2170 = vmul.f32 %v2073, %v2161
      %v2171 = vmul.f32 %v2074, %v2161
      %v2172 = vmul.f32 %v2075, %v2161
      %v2173 = vmul.f32 %v2076, %v2161
      %v2174 = vmul.f32 %v2077, %v2161
      %v2175 = vmul.f32 %v2078, %v2161
      %v2176 = vmul.f32 %v2079, %v2161
      %v2177 = vmul.f32 %v2080, %v2161
      %v2178 = vmul.f32 %v2083, %v2161
      %v2179 = vmul.f32 %v2084, %v2161
      %v2180 = vmul.f32 %v2085, %v2161
      %v2181 = vmul.f32 %v2086, %v2161
      %v2182 = vmul.f32 %v2087, %v2161
      %v2183 = vmul.f32 %v2088, %v2161
      %v2184 = vmul.f32 %v2089, %v2161
      %v2185 = vmul.f32 %v2090, %v2161
      %v2186 = vmul.f32 %v2093, %v2161
      %v2187 = vmul.f32 %v2094, %v2161
      %v2188 = vmul.f32 %v2095, %v2161
      %v2189 = vmul.f32 %v2096, %v2161
      %v2190 = vmul.f32 %v2097, %v2161
      %v2191 = vmul.f32 %v2098, %v2161
      %v2192 = vmul.f32 %v2099, %v2161
      %v2193 = vmul.f32 %v2100, %v2161
      %v2194 = vadd.f32 %v2126, %v2162
      %v2195 = vadd.f32 %v2127, %v2163
      %v2196 = vadd.f32 %v2128, %v2164
      %v2197 = vadd.f32 %v2129, %v2165
      %v2198 = vadd.f32 %v2130, %v2166
      %v2199 = vadd.f32 %v2131, %v2167
      %v2200 = vadd.f32 %v2132, %v2168
      %v2201 = vadd.f32 %v2133, %v2169
      %v2202 = vadd.f32 %v2134, %v2170
      %v2203 = vadd.f32 %v2135, %v2171
      %v2204 = vadd.f32 %v2136, %v2172
      %v2205 = vadd.f32 %v2137, %v2173
      %v2206 = vadd.f32 %v2138, %v2174
      %v2207 = vadd.f32 %v2139, %v2175
      %v2208 = vadd.f32 %v2140, %v2176
      %v2209 = vadd.f32 %v2141, %v2177
      %v2210 = vadd.f32 %v2142, %v2178
      %v2211 = vadd.f32 %v2143, %v2179
      %v2212 = vadd.f32 %v2144, %v2180
      %v2213 = vadd.f32 %v2145, %v2181
      %v2214 = vadd.f32 %v2146, %v2182
      %v2215 = vadd.f32 %v2147, %v2183
      %v2216 = vadd.f32 %v2148, %v2184
      %v2217 = vadd.f32 %v2149, %v2185
      %v2218 = vadd.f32 %v2150, %v2186
      %v2219 = vadd.f32 %v2151, %v2187
      %v2220 = vadd.f32 %v2152, %v2188
      %v2221 = vadd.f32 %v2153, %v2189
      %v2222 = vadd.f32 %v2154, %v2190
      %v2223 = vadd.f32 %v2155, %v2191
      %v2224 = vadd.f32 %v2156, %v2192
      %v2225 = vadd.f32 %v2157, %v2193
      %v2226 = vlaneseq
      %v2227 = vshrl.u32 %v2226, 7
      %v2228 = vsub.s32 0, %v2227
      %v2229 = vrot.slane %v779, %v2228
      %v2230 = vmul.f32 %v2064, %v2229
      %v2231 = vmul.f32 %v2065, %v2229
      %v2232 = vmul.f32 %v2066, %v2229
      %v2233 = vmul.f32 %v2067, %v2229
      %v2234 = vmul.f32 %v2068, %v2229
      %v2235 = vmul.f32 %v2069, %v2229
      %v2236 = vmul.f32 %v2070, %v2229
      %v2237 = vmul.f32 %v2071, %v2229
      %v2238 = vmul.f32 %v2074, %v2229
      %v2239 = vmul.f32 %v2075, %v2229
      %v2240 = vmul.f32 %v2076, %v2229
      %v2241 = vmul.f32 %v2077, %v2229
      %v2242 = vmul.f32 %v2078, %v2229
      %v2243 = vmul.f32 %v2079, %v2229
      %v2244 = vmul.f32 %v2080, %v2229
      %v2245 = vmul.f32 %v2081, %v2229
      %v2246 = vmul.f32 %v2084, %v2229
      %v2247 = vmul.f32 %v2085, %v2229
      %v2248 = vmul.f32 %v2086, %v2229
      %v2249 = vmul.f32 %v2087, %v2229
      %v2250 = vmul.f32 %v2088, %v2229
      %v2251 = vmul.f32 %v2089, %v2229
      %v2252 = vmul.f32 %v2090, %v2229
      %v2253 = vmul.f32 %v2091, %v2229
      %v2254 = vmul.f32 %v2094, %v2229
      %v2255 = vmul.f32 %v2095, %v2229
      %v2256 = vmul.f32 %v2096, %v2229
      %v2257 = vmul.f32 %v2097, %v2229
      %v2258 = vmul.f32 %v2098, %v2229
      %v2259 = vmul.f32 %v2099, %v2229
      %v2260 = vmul.f32 %v2100, %v2229
      %v2261 = vmul.f32 %v2101, %v2229
      %v2262 = vadd.f32 %v2194, %v2230
      %v2263 = vadd.f32 %v2195, %v2231
      %v2264 = vadd.f32 %v2196, %v2232
      %v2265 = vadd.f32 %v2197, %v2233
      %v2266 = vadd.f32 %v2198, %v2234
      %v2267 = vadd.f32 %v2199, %v2235
      %v2268 = vadd.f32 %v2200, %v2236
      %v2269 = vadd.f32 %v2201, %v2237
      %v2270 = vadd.f32 %v2202, %v2238
      %v2271 = vadd.f32 %v2203, %v2239
      %v2272 = vadd.f32 %v2204, %v2240
      %v2273 = vadd.f32 %v2205, %v2241
      %v2274 = vadd.f32 %v2206, %v2242
      %v2275 = vadd.f32 %v2207, %v2243
      %v2276 = vadd.f32 %v2208, %v2244
      %v2277 = vadd.f32 %v2209, %v2245
      %v2278 = vadd.f32 %v2210, %v2246
      %v2279 = vadd.f32 %v2211, %v2247
      %v2280 = vadd.f32 %v2212, %v2248
      %v2281 = vadd.f32 %v2213, %v2249
      %v2282 = vadd.f32 %v2214, %v2250
      %v2283 = vadd.f32 %v2215, %v2251
      %v2284 = vadd.f32 %v2216, %v2252
      %v2285 = vadd.f32 %v2217, %v2253
      %v2286 = vadd.f32 %v2218, %v2254
      %v2287 = vadd.f32 %v2219, %v2255
      %v2288 = vadd.f32 %v2220, %v2256
      %v2289 = vadd.f32 %v2221, %v2257
      %v2290 = vadd.f32 %v2222, %v2258
      %v2291 = vadd.f32 %v2223, %v2259
      %v2292 = vadd.f32 %v2224, %v2260
      %v2293 = vadd.f32 %v2225, %v2261
      %v2294 = vlaneseq
      %v2295 = vshrl.u32 %v2294, 7
      %v2296 = vsub.s32 3, %v2295
      %v2297 = vrot.slane %v779, %v2296
      %v2298 = vmul.f32 %v2072, %v2297
      %v2299 = vmul.f32 %v2073, %v2297
      %v2300 = vmul.f32 %v2074, %v2297
      %v2301 = vmul.f32 %v2075, %v2297
      %v2302 = vmul.f32 %v2076, %v2297
      %v2303 = vmul.f32 %v2077, %v2297
      %v2304 = vmul.f32 %v2078, %v2297
      %v2305 = vmul.f32 %v2079, %v2297
      %v2306 = vmul.f32 %v2082, %v2297
      %v2307 = vmul.f32 %v2083, %v2297
      %v2308 = vmul.f32 %v2084, %v2297
      %v2309 = vmul.f32 %v2085, %v2297
      %v2310 = vmul.f32 %v2086, %v2297
      %v2311 = vmul.f32 %v2087, %v2297
      %v2312 = vmul.f32 %v2088, %v2297
      %v2313 = vmul.f32 %v2089, %v2297
      %v2314 = vmul.f32 %v2092, %v2297
      %v2315 = vmul.f32 %v2093, %v2297
      %v2316 = vmul.f32 %v2094, %v2297
      %v2317 = vmul.f32 %v2095, %v2297
      %v2318 = vmul.f32 %v2096, %v2297
      %v2319 = vmul.f32 %v2097, %v2297
      %v2320 = vmul.f32 %v2098, %v2297
      %v2321 = vmul.f32 %v2099, %v2297
      %v2322 = vmul.f32 %v2102, %v2297
      %v2323 = vmul.f32 %v2103, %v2297
      %v2324 = vmul.f32 %v2104, %v2297
      %v2325 = vmul.f32 %v2105, %v2297
      %v2326 = vmul.f32 %v2106, %v2297
      %v2327 = vmul.f32 %v2107, %v2297
      %v2328 = vmul.f32 %v2108, %v2297
      %v2329 = vmul.f32 %v2109, %v2297
      %v2330 = vadd.f32 %v2262, %v2298
      %v2331 = vadd.f32 %v2263, %v2299
      %v2332 = vadd.f32 %v2264, %v2300
      %v2333 = vadd.f32 %v2265, %v2301
      %v2334 = vadd.f32 %v2266, %v2302
      %v2335 = vadd.f32 %v2267, %v2303
      %v2336 = vadd.f32 %v2268, %v2304
      %v2337 = vadd.f32 %v2269, %v2305
      %v2338 = vadd.f32 %v2270, %v2306
      %v2339 = vadd.f32 %v2271, %v2307
      %v2340 = vadd.f32 %v2272, %v2308
      %v2341 = vadd.f32 %v2273, %v2309
      %v2342 = vadd.f32 %v2274, %v2310
      %v2343 = vadd.f32 %v2275, %v2311
      %v2344 = vadd.f32 %v2276, %v2312
      %v2345 = vadd.f32 %v2277, %v2313
      %v2346 = vadd.f32 %v2278, %v2314
      %v2347 = vadd.f32 %v2279, %v2315
      %v2348 = vadd.f32 %v2280, %v2316
      %v2349 = vadd.f32 %v2281, %v2317
      %v2350 = vadd.f32 %v2282, %v2318
      %v2351 = vadd.f32 %v2283, %v2319
      %v2352 = vadd.f32 %v2284, %v2320
      %v2353 = vadd.f32 %v2285, %v2321
      %v2354 = vadd.f32 %v2286, %v2322
      %v2355 = vadd.f32 %v2287, %v2323
      %v2356 = vadd.f32 %v2288, %v2324
      %v2357 = vadd.f32 %v2289, %v2325
      %v2358 = vadd.f32 %v2290, %v2326
      %v2359 = vadd.f32 %v2291, %v2327
      %v2360 = vadd.f32 %v2292, %v2328
      %v2361 = vadd.f32 %v2293, %v2329
      %v2362 = vlaneseq
      %v2363 = vshrl.u32 %v2362, 7
      %v2364 = vsub.s32 6, %v2363
      %v2365 = vrot.slane %v779, %v2364
      %v2366 = vmul.f32 %v2073, %v2365
      %v2367 = vmul.f32 %v2074, %v2365
      %v2368 = vmul.f32 %v2075, %v2365
      %v2369 = vmul.f32 %v2076, %v2365
      %v2370 = vmul.f32 %v2077, %v2365
      %v2371 = vmul.f32 %v2078, %v2365
      %v2372 = vmul.f32 %v2079, %v2365
      %v2373 = vmul.f32 %v2080, %v2365
      %v2374 = vmul.f32 %v2083, %v2365
      %v2375 = vmul.f32 %v2084, %v2365
      %v2376 = vmul.f32 %v2085, %v2365
      %v2377 = vmul.f32 %v2086, %v2365
      %v2378 = vmul.f32 %v2087, %v2365
      %v2379 = vmul.f32 %v2088, %v2365
      %v2380 = vmul.f32 %v2089, %v2365
      %v2381 = vmul.f32 %v2090, %v2365
      %v2382 = vmul.f32 %v2093, %v2365
      %v2383 = vmul.f32 %v2094, %v2365
      %v2384 = vmul.f32 %v2095, %v2365
      %v2385 = vmul.f32 %v2096, %v2365
      %v2386 = vmul.f32 %v2097, %v2365
      %v2387 = vmul.f32 %v2098, %v2365
      %v2388 = vmul.f32 %v2099, %v2365
      %v2389 = vmul.f32 %v2100, %v2365
      %v2390 = vmul.f32 %v2103, %v2365
      %v2391 = vmul.f32 %v2104, %v2365
      %v2392 = vmul.f32 %v2105, %v2365
      %v2393 = vmul.f32 %v2106, %v2365
      %v2394 = vmul.f32 %v2107, %v2365
      %v2395 = vmul.f32 %v2108, %v2365
      %v2396 = vmul.f32 %v2109, %v2365
      %v2397 = vmul.f32 %v2110, %v2365
      %v2398 = vadd.f32 %v2330, %v2366
      %v2399 = vadd.f32 %v2331, %v2367
      %v2400 = vadd.f32 %v2332, %v2368
      %v2401 = vadd.f32 %v2333, %v2369
      %v2402 = vadd.f32 %v2334, %v2370
      %v2403 = vadd.f32 %v2335, %v2371
      %v2404 = vadd.f32 %v2336, %v2372
      %v2405 = vadd.f32 %v2337, %v2373
      %v2406 = vadd.f32 %v2338, %v2374
      %v2407 = vadd.f32 %v2339, %v2375
      %v2408 = vadd.f32 %v2340, %v2376
      %v2409 = vadd.f32 %v2341, %v2377
      %v2410 = vadd.f32 %v2342, %v2378
      %v2411 = vadd.f32 %v2343, %v2379
      %v2412 = vadd.f32 %v2344, %v2380
      %v2413 = vadd.f32 %v2345, %v2381
      %v2414 = vadd.f32 %v2346, %v2382
      %v2415 = vadd.f32 %v2347, %v2383
      %v2416 = vadd.f32 %v2348, %v2384
      %v2417 = vadd.f32 %v2349, %v2385
      %v2418 = vadd.f32 %v2350, %v2386
      %v2419 = vadd.f32 %v2351, %v2387
      %v2420 = vadd.f32 %v2352, %v2388
      %v2421 = vadd.f32 %v2353, %v2389
      %v2422 = vadd.f32 %v2354, %v2390
      %v2423 = vadd.f32 %v2355, %v2391
      %v2424 = vadd.f32 %v2356, %v2392
      %v2425 = vadd.f32 %v2357, %v2393
      %v2426 = vadd.f32 %v2358, %v2394
      %v2427 = vadd.f32 %v2359, %v2395
      %v2428 = vadd.f32 %v2360, %v2396
      %v2429 = vadd.f32 %v2361, %v2397
      %v2430 = vlaneseq
      %v2431 = vshrl.u32 %v2430, 7
      %v2432 = vsub.s32 1, %v2431
      %v2433 = vrot.slane %v780, %v2432
      %v2434 = vmul.f32 %v2074, %v2433
      %v2435 = vmul.f32 %v2075, %v2433
      %v2436 = vmul.f32 %v2076, %v2433
      %v2437 = vmul.f32 %v2077, %v2433
      %v2438 = vmul.f32 %v2078, %v2433
      %v2439 = vmul.f32 %v2079, %v2433
      %v2440 = vmul.f32 %v2080, %v2433
      %v2441 = vmul.f32 %v2081, %v2433
      %v2442 = vmul.f32 %v2084, %v2433
      %v2443 = vmul.f32 %v2085, %v2433
      %v2444 = vmul.f32 %v2086, %v2433
      %v2445 = vmul.f32 %v2087, %v2433
      %v2446 = vmul.f32 %v2088, %v2433
      %v2447 = vmul.f32 %v2089, %v2433
      %v2448 = vmul.f32 %v2090, %v2433
      %v2449 = vmul.f32 %v2091, %v2433
      %v2450 = vmul.f32 %v2094, %v2433
      %v2451 = vmul.f32 %v2095, %v2433
      %v2452 = vmul.f32 %v2096, %v2433
      %v2453 = vmul.f32 %v2097, %v2433
      %v2454 = vmul.f32 %v2098, %v2433
      %v2455 = vmul.f32 %v2099, %v2433
      %v2456 = vmul.f32 %v2100, %v2433
      %v2457 = vmul.f32 %v2101, %v2433
      %v2458 = vmul.f32 %v2104, %v2433
      %v2459 = vmul.f32 %v2105, %v2433
      %v2460 = vmul.f32 %v2106, %v2433
      %v2461 = vmul.f32 %v2107, %v2433
      %v2462 = vmul.f32 %v2108, %v2433
      %v2463 = vmul.f32 %v2109, %v2433
      %v2464 = vmul.f32 %v2110, %v2433
      %v2465 = vmul.f32 %v2111, %v2433
      %v2466 = vadd.f32 %v2398, %v2434
      %v2467 = vadd.f32 %v2399, %v2435
      %v2468 = vadd.f32 %v2400, %v2436
      %v2469 = vadd.f32 %v2401, %v2437
      %v2470 = vadd.f32 %v2402, %v2438
      %v2471 = vadd.f32 %v2403, %v2439
      %v2472 = vadd.f32 %v2404, %v2440
      %v2473 = vadd.f32 %v2405, %v2441
      %v2474 = vadd.f32 %v2406, %v2442
      %v2475 = vadd.f32 %v2407, %v2443
      %v2476 = vadd.f32 %v2408, %v2444
      %v2477 = vadd.f32 %v2409, %v2445
      %v2478 = vadd.f32 %v2410, %v2446
      %v2479 = vadd.f32 %v2411, %v2447
      %v2480 = vadd.f32 %v2412, %v2448
      %v2481 = vadd.f32 %v2413, %v2449
      %v2482 = vadd.f32 %v2414, %v2450
      %v2483 = vadd.f32 %v2415, %v2451
      %v2484 = vadd.f32 %v2416, %v2452
      %v2485 = vadd.f32 %v2417, %v2453
      %v2486 = vadd.f32 %v2418, %v2454
      %v2487 = vadd.f32 %v2419, %v2455
      %v2488 = vadd.f32 %v2420, %v2456
      %v2489 = vadd.f32 %v2421, %v2457
      %v2490 = vadd.f32 %v2422, %v2458
      %v2491 = vadd.f32 %v2423, %v2459
      %v2492 = vadd.f32 %v2424, %v2460
      %v2493 = vadd.f32 %v2425, %v2461
      %v2494 = vadd.f32 %v2426, %v2462
      %v2495 = vadd.f32 %v2427, %v2463
      %v2496 = vadd.f32 %v2428, %v2464
      %v2497 = vadd.f32 %v2429, %v2465
      %v2498 = vlaneseq
      %v2499 = vshrl.u32 %v2498, 7
      %v2500 = vsub.s32 4, %v2499
      %v2501 = vrot.slane %v780, %v2500
      %v2502 = vmul.f32 %v2082, %v2501
      %v2503 = vmul.f32 %v2083, %v2501
      %v2504 = vmul.f32 %v2084, %v2501
      %v2505 = vmul.f32 %v2085, %v2501
      %v2506 = vmul.f32 %v2086, %v2501
      %v2507 = vmul.f32 %v2087, %v2501
      %v2508 = vmul.f32 %v2088, %v2501
      %v2509 = vmul.f32 %v2089, %v2501
      %v2510 = vmul.f32 %v2092, %v2501
      %v2511 = vmul.f32 %v2093, %v2501
      %v2512 = vmul.f32 %v2094, %v2501
      %v2513 = vmul.f32 %v2095, %v2501
      %v2514 = vmul.f32 %v2096, %v2501
      %v2515 = vmul.f32 %v2097, %v2501
      %v2516 = vmul.f32 %v2098, %v2501
      %v2517 = vmul.f32 %v2099, %v2501
      %v2518 = vmul.f32 %v2102, %v2501
      %v2519 = vmul.f32 %v2103, %v2501
      %v2520 = vmul.f32 %v2104, %v2501
      %v2521 = vmul.f32 %v2105, %v2501
      %v2522 = vmul.f32 %v2106, %v2501
      %v2523 = vmul.f32 %v2107, %v2501
      %v2524 = vmul.f32 %v2108, %v2501
      %v2525 = vmul.f32 %v2109, %v2501
      %v2526 = vmul.f32 %v2112, %v2501
      %v2527 = vmul.f32 %v2113, %v2501
      %v2528 = vmul.f32 %v2114, %v2501
      %v2529 = vmul.f32 %v2115, %v2501
      %v2530 = vmul.f32 %v2116, %v2501
      %v2531 = vmul.f32 %v2117, %v2501
      %v2532 = vmul.f32 %v2118, %v2501
      %v2533 = vmul.f32 %v2119, %v2501
      %v2534 = vadd.f32 %v2466, %v2502
      %v2535 = vadd.f32 %v2467, %v2503
      %v2536 = vadd.f32 %v2468, %v2504
      %v2537 = vadd.f32 %v2469, %v2505
      %v2538 = vadd.f32 %v2470, %v2506
      %v2539 = vadd.f32 %v2471, %v2507
      %v2540 = vadd.f32 %v2472, %v2508
      %v2541 = vadd.f32 %v2473, %v2509
      %v2542 = vadd.f32 %v2474, %v2510
      %v2543 = vadd.f32 %v2475, %v2511
      %v2544 = vadd.f32 %v2476, %v2512
      %v2545 = vadd.f32 %v2477, %v2513
      %v2546 = vadd.f32 %v2478, %v2514
      %v2547 = vadd.f32 %v2479, %v2515
      %v2548 = vadd.f32 %v2480, %v2516
      %v2549 = vadd.f32 %v2481, %v2517
      %v2550 = vadd.f32 %v2482, %v2518
      %v2551 = vadd.f32 %v2483, %v2519
      %v2552 = vadd.f32 %v2484, %v2520
      %v2553 = vadd.f32 %v2485, %v2521
      %v2554 = vadd.f32 %v2486, %v2522
      %v2555 = vadd.f32 %v2487, %v2523
      %v2556 = vadd.f32 %v2488, %v2524
      %v2557 = vadd.f32 %v2489, %v2525
      %v2558 = vadd.f32 %v2490, %v2526
      %v2559 = vadd.f32 %v2491, %v2527
      %v2560 = vadd.f32 %v2492, %v2528
      %v2561 = vadd.f32 %v2493, %v2529
      %v2562 = vadd.f32 %v2494, %v2530
      %v2563 = vadd.f32 %v2495, %v2531
      %v2564 = vadd.f32 %v2496, %v2532
      %v2565 = vadd.f32 %v2497, %v2533
      %v2566 = vlaneseq
      %v2567 = vshrl.u32 %v2566, 7
      %v2568 = vsub.s32 7, %v2567
      %v2569 = vrot.slane %v780, %v2568
      %v2570 = vmul.f32 %v2083, %v2569
      %v2571 = vmul.f32 %v2084, %v2569
      %v2572 = vmul.f32 %v2085, %v2569
      %v2573 = vmul.f32 %v2086, %v2569
      %v2574 = vmul.f32 %v2087, %v2569
      %v2575 = vmul.f32 %v2088, %v2569
      %v2576 = vmul.f32 %v2089, %v2569
      %v2577 = vmul.f32 %v2090, %v2569
      %v2578 = vmul.f32 %v2093, %v2569
      %v2579 = vmul.f32 %v2094, %v2569
      %v2580 = vmul.f32 %v2095, %v2569
      %v2581 = vmul.f32 %v2096, %v2569
      %v2582 = vmul.f32 %v2097, %v2569
      %v2583 = vmul.f32 %v2098, %v2569
      %v2584 = vmul.f32 %v2099, %v2569
      %v2585 = vmul.f32 %v2100, %v2569
      %v2586 = vmul.f32 %v2103, %v2569
      %v2587 = vmul.f32 %v2104, %v2569
      %v2588 = vmul.f32 %v2105, %v2569
      %v2589 = vmul.f32 %v2106, %v2569
      %v2590 = vmul.f32 %v2107, %v2569
      %v2591 = vmul.f32 %v2108, %v2569
      %v2592 = vmul.f32 %v2109, %v2569
      %v2593 = vmul.f32 %v2110, %v2569
      %v2594 = vmul.f32 %v2113, %v2569
      %v2595 = vmul.f32 %v2114, %v2569
      %v2596 = vmul.f32 %v2115, %v2569
      %v2597 = vmul.f32 %v2116, %v2569
      %v2598 = vmul.f32 %v2117, %v2569
      %v2599 = vmul.f32 %v2118, %v2569
      %v2600 = vmul.f32 %v2119, %v2569
      %v2601 = vmul.f32 %v2120, %v2569
      %v2602 = vadd.f32 %v2534, %v2570
      %v2603 = vadd.f32 %v2535, %v2571
      %v2604 = vadd.f32 %v2536, %v2572
      %v2605 = vadd.f32 %v2537, %v2573
      %v2606 = vadd.f32 %v2538, %v2574
      %v2607 = vadd.f32 %v2539, %v2575
      %v2608 = vadd.f32 %v2540, %v2576
      %v2609 = vadd.f32 %v2541, %v2577
      %v2610 = vadd.f32 %v2542, %v2578
      %v2611 = vadd.f32 %v2543, %v2579
      %v2612 = vadd.f32 %v2544, %v2580
      %v2613 = vadd.f32 %v2545, %v2581
      %v2614 = vadd.f32 %v2546, %v2582
      %v2615 = vadd.f32 %v2547, %v2583
      %v2616 = vadd.f32 %v2548, %v2584
      %v2617 = vadd.f32 %v2549, %v2585
      %v2618 = vadd.f32 %v2550, %v2586
      %v2619 = vadd.f32 %v2551, %v2587
      %v2620 = vadd.f32 %v2552, %v2588
      %v2621 = vadd.f32 %v2553, %v2589
      %v2622 = vadd.f32 %v2554, %v2590
      %v2623 = vadd.f32 %v2555, %v2591
      %v2624 = vadd.f32 %v2556, %v2592
      %v2625 = vadd.f32 %v2557, %v2593
      %v2626 = vadd.f32 %v2558, %v2594
      %v2627 = vadd.f32 %v2559, %v2595
      %v2628 = vadd.f32 %v2560, %v2596
      %v2629 = vadd.f32 %v2561, %v2597
      %v2630 = vadd.f32 %v2562, %v2598
      %v2631 = vadd.f32 %v2563, %v2599
      %v2632 = vadd.f32 %v2564, %v2600
      %v2633 = vadd.f32 %v2565, %v2601
      %v2634 = vlaneseq
      %v2635 = vshrl.u32 %v2634, 7
      %v2636 = vsub.s32 2, %v2635
      %v2637 = vrot.slane %v781, %v2636
      %v2638 = vmul.f32 %v2084, %v2637
      %v2639 = vmul.f32 %v2085, %v2637
      %v2640 = vmul.f32 %v2086, %v2637
      %v2641 = vmul.f32 %v2087, %v2637
      %v2642 = vmul.f32 %v2088, %v2637
      %v2643 = vmul.f32 %v2089, %v2637
      %v2644 = vmul.f32 %v2090, %v2637
      %v2645 = vmul.f32 %v2091, %v2637
      %v2646 = vmul.f32 %v2094, %v2637
      %v2647 = vmul.f32 %v2095, %v2637
      %v2648 = vmul.f32 %v2096, %v2637
      %v2649 = vmul.f32 %v2097, %v2637
      %v2650 = vmul.f32 %v2098, %v2637
      %v2651 = vmul.f32 %v2099, %v2637
      %v2652 = vmul.f32 %v2100, %v2637
      %v2653 = vmul.f32 %v2101, %v2637
      %v2654 = vmul.f32 %v2104, %v2637
      %v2655 = vmul.f32 %v2105, %v2637
      %v2656 = vmul.f32 %v2106, %v2637
      %v2657 = vmul.f32 %v2107, %v2637
      %v2658 = vmul.f32 %v2108, %v2637
      %v2659 = vmul.f32 %v2109, %v2637
      %v2660 = vmul.f32 %v2110, %v2637
      %v2661 = vmul.f32 %v2111, %v2637
      %v2662 = vmul.f32 %v2114, %v2637
      %v2663 = vmul.f32 %v2115, %v2637
      %v2664 = vmul.f32 %v2116, %v2637
      %v2665 = vmul.f32 %v2117, %v2637
      %v2666 = vmul.f32 %v2118, %v2637
      %v2667 = vmul.f32 %v2119, %v2637
      %v2668 = vmul.f32 %v2120, %v2637
      %v2669 = vmul.f32 %v2121, %v2637
      %v2670 = vadd.f32 %v2602, %v2638
      %v2671 = vadd.f32 %v2603, %v2639
      %v2672 = vadd.f32 %v2604, %v2640
      %v2673 = vadd.f32 %v2605, %v2641
      %v2674 = vadd.f32 %v2606, %v2642
      %v2675 = vadd.f32 %v2607, %v2643
      %v2676 = vadd.f32 %v2608, %v2644
      %v2677 = vadd.f32 %v2609, %v2645
      %v2678 = vadd.f32 %v2610, %v2646
      %v2679 = vadd.f32 %v2611, %v2647
      %v2680 = vadd.f32 %v2612, %v2648
      %v2681 = vadd.f32 %v2613, %v2649
      %v2682 = vadd.f32 %v2614, %v2650
      %v2683 = vadd.f32 %v2615, %v2651
      %v2684 = vadd.f32 %v2616, %v2652
      %v2685 = vadd.f32 %v2617, %v2653
      %v2686 = vadd.f32 %v2618, %v2654
      %v2687 = vadd.f32 %v2619, %v2655
      %v2688 = vadd.f32 %v2620, %v2656
      %v2689 = vadd.f32 %v2621, %v2657
      %v2690 = vadd.f32 %v2622, %v2658
      %v2691 = vadd.f32 %v2623, %v2659
      %v2692 = vadd.f32 %v2624, %v2660
      %v2693 = vadd.f32 %v2625, %v2661
      %v2694 = vadd.f32 %v2626, %v2662
      %v2695 = vadd.f32 %v2627, %v2663
      %v2696 = vadd.f32 %v2628, %v2664
      %v2697 = vadd.f32 %v2629, %v2665
      %v2698 = vadd.f32 %v2630, %v2666
      %v2699 = vadd.f32 %v2631, %v2667
      %v2700 = vadd.f32 %v2632, %v2668
      %v2701 = vadd.f32 %v2633, %v2669
      %v2702 = vadd.f32 %v1390, %v2030
      %v2703 = vadd.f32 %v1391, %v2031
      %v2704 = vadd.f32 %v1392, %v2032
      %v2705 = vadd.f32 %v1393, %v2033
      %v2706 = vadd.f32 %v1394, %v2034
      %v2707 = vadd.f32 %v1395, %v2035
      %v2708 = vadd.f32 %v1396, %v2036
      %v2709 = vadd.f32 %v1397, %v2037
      %v2710 = vadd.f32 %v1398, %v2038
      %v2711 = vadd.f32 %v1399, %v2039
      %v2712 = vadd.f32 %v1400, %v2040
      %v2713 = vadd.f32 %v1401, %v2041
      %v2714 = vadd.f32 %v1402, %v2042
      %v2715 = vadd.f32 %v1403, %v2043
      %v2716 = vadd.f32 %v1404, %v2044
      %v2717 = vadd.f32 %v1405, %v2045
      %v2718 = vadd.f32 %v1406, %v2046
      %v2719 = vadd.f32 %v1407, %v2047
      %v2720 = vadd.f32 %v1408, %v2048
      %v2721 = vadd.f32 %v1409, %v2049
      %v2722 = vadd.f32 %v1410, %v2050
      %v2723 = vadd.f32 %v1411, %v2051
      %v2724 = vadd.f32 %v1412, %v2052
      %v2725 = vadd.f32 %v1413, %v2053
      %v2726 = vadd.f32 %v1414, %v2054
      %v2727 = vadd.f32 %v1415, %v2055
      %v2728 = vadd.f32 %v1416, %v2056
      %v2729 = vadd.f32 %v1417, %v2057
      %v2730 = vadd.f32 %v1418, %v2058
      %v2731 = vadd.f32 %v1419, %v2059
      %v2732 = vadd.f32 %v1420, %v2060
      %v2733 = vadd.f32 %v1421, %v2061
      %v2734 = vadd.f32 %v2702, %v2670
      %v2735 = vadd.f32 %v2703, %v2671
      %v2736 = vadd.f32 %v2704, %v2672
      %v2737 = vadd.f32 %v2705, %v2673
      %v2738 = vadd.f32 %v2706, %v2674
      %v2739 = vadd.f32 %v2707, %v2675
      %v2740 = vadd.f32 %v2708, %v2676
      %v2741 = vadd.f32 %v2709, %v2677
      %v2742 = vadd.f32 %v2710, %v2678
      %v2743 = vadd.f32 %v2711, %v2679
      %v2744 = vadd.f32 %v2712, %v2680
      %v2745 = vadd.f32 %v2713, %v2681
      %v2746 = vadd.f32 %v2714, %v2682
      %v2747 = vadd.f32 %v2715, %v2683
      %v2748 = vadd.f32 %v2716, %v2684
      %v2749 = vadd.f32 %v2717, %v2685
      %v2750 = vadd.f32 %v2718, %v2686
      %v2751 = vadd.f32 %v2719, %v2687
      %v2752 = vadd.f32 %v2720, %v2688
      %v2753 = vadd.f32 %v2721, %v2689
      %v2754 = vadd.f32 %v2722, %v2690
      %v2755 = vadd.f32 %v2723, %v2691
      %v2756 = vadd.f32 %v2724, %v2692
      %v2757 = vadd.f32 %v2725, %v2693
      %v2758 = vadd.f32 %v2726, %v2694
      %v2759 = vadd.f32 %v2727, %v2695
      %v2760 = vadd.f32 %v2728, %v2696
      %v2761 = vadd.f32 %v2729, %v2697
      %v2762 = vadd.f32 %v2730, %v2698
      %v2763 = vadd.f32 %v2731, %v2699
      %v2764 = vadd.f32 %v2732, %v2700
      %v2765 = vadd.f32 %v2733, %v2701
      %2766 = vst [vmem:[%s161] sm:$0xff] %v2734
      %2767 = vst [vmem:[%s161 + $0x8] sm:$0xff] %v2735
      %2768 = vst [vmem:[%s161 + $0x10] sm:$0xff] %v2736
      %2769 = vst [vmem:[%s161 + $0x18] sm:$0xff] %v2737
      %2770 = vst [vmem:[%s161 + $0x20] sm:$0xff] %v2738
      %2771 = vst [vmem:[%s161 + $0x28] sm:$0xff] %v2739
      %2772 = vst [vmem:[%s161 + $0x30] sm:$0xff] %v2740
      %2773 = vst [vmem:[%s161 + $0x38] sm:$0xff] %v2741
      %2774 = vst [vmem:[%s161 + $0x40] sm:$0xff] %v2742
      %2775 = vst [vmem:[%s161 + $0x48] sm:$0xff] %v2743
      %2776 = vst [vmem:[%s161 + $0x50] sm:$0xff] %v2744
      %2777 = vst [vmem:[%s161 + $0x58] sm:$0xff] %v2745
      %2778 = vst [vmem:[%s161 + $0x60] sm:$0xff] %v2746
      %2779 = vst [vmem:[%s161 + $0x68] sm:$0xff] %v2747
      %2780 = vst [vmem:[%s161 + $0x70] sm:$0xff] %v2748
      %2781 = vst [vmem:[%s161 + $0x78] sm:$0xff] %v2749
      %2782 = vst [vmem:[%s161 + $0x80] sm:$0xff] %v2750
      %2783 = vst [vmem:[%s161 + $0x88] sm:$0xff] %v2751
      %2784 = vst [vmem:[%s161 + $0x90] sm:$0xff] %v2752
      %2785 = vst [vmem:[%s161 + $0x98] sm:$0xff] %v2753
      %2786 = vst [vmem:[%s161 + $0xa0] sm:$0xff] %v2754
      %2787 = vst [vmem:[%s161 + $0xa8] sm:$0xff] %v2755
      %2788 = vst [vmem:[%s161 + $0xb0] sm:$0xff] %v2756
      %2789 = vst [vmem:[%s161 + $0xb8] sm:$0xff] %v2757
      %2790 = vst [vmem:[%s161 + $0xc0] sm:$0xff] %v2758
      %2791 = vst [vmem:[%s161 + $0xc8] sm:$0xff] %v2759
      %2792 = vst [vmem:[%s161 + $0xd0] sm:$0xff] %v2760
      %2793 = vst [vmem:[%s161 + $0xd8] sm:$0xff] %v2761
      %2794 = vst [vmem:[%s161 + $0xe0] sm:$0xff] %v2762
      %2795 = vst [vmem:[%s161 + $0xe8] sm:$0xff] %v2763
      %2796 = vst [vmem:[%s161 + $0xf0] sm:$0xff] %v2764
      %2797 = vst [vmem:[%s161 + $0xf8] sm:$0xff] %v2765
      %v2798 = vadd.f32 %v2734, %v2735
      %v2799 = vadd.f32 %v2798, %v2736
      %v2800 = vadd.f32 %v2799, %v2737
      %v2801 = vadd.f32 %v2800, %v2738
      %v2802 = vadd.f32 %v2801, %v2739
      %v2803 = vadd.f32 %v2802, %v2740
      %v2804 = vadd.f32 %v2803, %v2741
      %v2805 = vadd.f32 %v2804, %v2742
      %v2806 = vadd.f32 %v2805, %v2743
      %v2807 = vadd.f32 %v2806, %v2744
      %v2808 = vadd.f32 %v2807, %v2745
      %v2809 = vadd.f32 %v2808, %v2746
      %v2810 = vadd.f32 %v2809, %v2747
      %v2811 = vadd.f32 %v2810, %v2748
      %v2812 = vadd.f32 %v2811, %v2749
      %v2813 = vadd.f32 %v2812, %v2750
      %v2814 = vadd.f32 %v2813, %v2751
      %v2815 = vadd.f32 %v2814, %v2752
      %v2816 = vadd.f32 %v2815, %v2753
      %v2817 = vadd.f32 %v2816, %v2754
      %v2818 = vadd.f32 %v2817, %v2755
      %v2819 = vadd.f32 %v2818, %v2756
      %v2820 = vadd.f32 %v2819, %v2757
      %v2821 = vadd.f32 %v2820, %v2758
      %v2822 = vadd.f32 %v2821, %v2759
      %v2823 = vadd.f32 %v2822, %v2760
      %v2824 = vadd.f32 %v2823, %v2761
      %v2825 = vadd.f32 %v2824, %v2762
      %v2826 = vadd.f32 %v2825, %v2763
      %v2827 = vadd.f32 %v2826, %v2764
      %v2828 = vadd.f32 %v2827, %v2765
      %v2829 = vrot.slane %v2828, 4
      %v2830 = vadd.f32 %v2828, %v2829
      %v2831 = vrot.slane %v2830, 2
      %v2832 = vadd.f32 %v2830, %v2831
      %v2833 = vrot.slane %v2832, 1
      %v2834 = vadd.f32 %v2832, %v2833
      %v2835 = vmul.f32 %v2734, %v2734
      %v2836 = vmul.f32 %v2735, %v2735
      %v2837 = vmul.f32 %v2736, %v2736
      %v2838 = vmul.f32 %v2737, %v2737
      %v2839 = vmul.f32 %v2738, %v2738
      %v2840 = vmul.f32 %v2739, %v2739
      %v2841 = vmul.f32 %v2740, %v2740
      %v2842 = vmul.f32 %v2741, %v2741
      %v2843 = vmul.f32 %v2742, %v2742
      %v2844 = vmul.f32 %v2743, %v2743
      %v2845 = vmul.f32 %v2744, %v2744
      %v2846 = vmul.f32 %v2745, %v2745
      %v2847 = vmul.f32 %v2746, %v2746
      %v2848 = vmul.f32 %v2747, %v2747
      %v2849 = vmul.f32 %v2748, %v2748
      %v2850 = vmul.f32 %v2749, %v2749
      %v2851 = vmul.f32 %v2750, %v2750
      %v2852 = vmul.f32 %v2751, %v2751
      %v2853 = vmul.f32 %v2752, %v2752
      %v2854 = vmul.f32 %v2753, %v2753
      %v2855 = vmul.f32 %v2754, %v2754
      %v2856 = vmul.f32 %v2755, %v2755
      %v2857 = vmul.f32 %v2756, %v2756
      %v2858 = vmul.f32 %v2757, %v2757
      %v2859 = vmul.f32 %v2758, %v2758
      %v2860 = vmul.f32 %v2759, %v2759
      %v2861 = vmul.f32 %v2760, %v2760
      %v2862 = vmul.f32 %v2761, %v2761
      %v2863 = vmul.f32 %v2762, %v2762
      %v2864 = vmul.f32 %v2763, %v2763
      %v2865 = vmul.f32 %v2764, %v2764
      %v2866 = vmul.f32 %v2765, %v2765
      %v2867 = vadd.f32 %v2835, %v2836
      %v2868 = vadd.f32 %v2867, %v2837
      %v2869 = vadd.f32 %v2868, %v2838
      %v2870 = vadd.f32 %v2869, %v2839
      %v2871 = vadd.f32 %v2870, %v2840
      %v2872 = vadd.f32 %v2871, %v2841
      %v2873 = vadd.f32 %v2872, %v2842
      %v2874 = vadd.f32 %v2873, %v2843
      %v2875 = vadd.f32 %v2874, %v2844
      %v2876 = vadd.f32 %v2875, %v2845
      %v2877 = vadd.f32 %v2876, %v2846
      %v2878 = vadd.f32 %v2877, %v2847
      %v2879 = vadd.f32 %v2878, %v2848
      %v2880 = vadd.f32 %v2879, %v2849
      %v2881 = vadd.f32 %v2880, %v2850
      %v2882 = vadd.f32 %v2881, %v2851
      %v2883 = vadd.f32 %v2882, %v2852
      %v2884 = vadd.f32 %v2883, %v2853
      %v2885 = vadd.f32 %v2884, %v2854
      %v2886 = vadd.f32 %v2885, %v2855
      %v2887 = vadd.f32 %v2886, %v2856
      %v2888 = vadd.f32 %v2887, %v2857
      %v2889 = vadd.f32 %v2888, %v2858
      %v2890 = vadd.f32 %v2889, %v2859
      %v2891 = vadd.f32 %v2890, %v2860
      %v2892 = vadd.f32 %v2891, %v2861
      %v2893 = vadd.f32 %v2892, %v2862
      %v2894 = vadd.f32 %v2893, %v2863
      %v2895 = vadd.f32 %v2894, %v2864
      %v2896 = vadd.f32 %v2895, %v2865
      %v2897 = vadd.f32 %v2896, %v2866
      %v2898 = vrot.slane %v2897, 4
      %v2899 = vadd.f32 %v2897, %v2898
      %v2900 = vrot.slane %v2899, 2
      %v2901 = vadd.f32 %v2899, %v2900
      %v2902 = vrot.slane %v2901, 1
      %v2903 = vadd.f32 %v2901, %v2902
      %vm2904 = vcmask 1040384
      %v2905 = vsel %vm2904, %v2834, %v2903
      %vm2906 = vcmask 1041408
      %v2907 = vsel %vm2906, %v2905, 0.0
      %2908 = vst [vmem:[%s170] sm:$0xff] %v2907
      %s2909 = smul.u32 4, %s20
      %p2910 = scmp.lt.s32.totalorder %s19, 1
      %s2911 = scalar_select %p2910, %s19, 1
      %p2912 = scmp.lt.s32.totalorder %s2909, 7
      %s2913 = scalar_select %p2912, %s2909, 7
      %s2914 = smul.addr %s2913, 8
      %s2915 = smul.addr %s2911, 64
      %s2916 = sadd.s32 %s2914, %s2915
      %s2917 = smul.addr %s2916, 8
      %s2918 = scalar_lea.vmem %s2, %s2917
      %p2919 = scmp.lt.s32.totalorder %s19, 1
      %s2920 = scalar_select %p2919, %s19, 1
      %p2921 = scmp.lt.s32.totalorder %s20, 1
      %s2922 = scalar_select %p2921, %s20, 1
      %s2923 = smul.addr %s2920, 2
      %s2924 = sadd.s32 %s2922, %s2923
      %s2925 = smul.addr %s2924, 8
      %s2926 = scalar_lea.vmem %s3, %s2925
      // Predicated region
      $region101: #{repux_block_forward.2} parent=23 // pred_check
        %p2927 = pneg %p68
      $region102: #{repux_block_forward.2} parent=23 // pred_check_branch
        %2929 = sbr.rel (%p2927) target = $region104
      $region103: #{repux_block_forward.2} parent=23 // pred_region
        %s2930 = smul.u32 4, %s20
      $region104: #{repux_block_forward.2} parent=23 // pred_fallthru
        _
      // Predicated region
      $region105: #{repux_block_forward.2} parent=23 // pred_check
        %p2931 = pneg %p96
      $region106: #{repux_block_forward.2} parent=23 // pred_check_branch
        %2933 = sbr.rel (%p2931) target = $region108
      $region107: #{repux_block_forward.2} parent=23 // pred_region
        _
      $region108: #{repux_block_forward.2} parent=23 // pred_fallthru
        _
    $region24: #{repux_block_forward.2} parent=5 // pred_fallthru
      _
    %p2934 = scmp.le.s32.totalorder 2, %s10
    // Predicated region
    $region109: #{repux_block_forward.2} parent=5 // pred_check
      %p2935 = pneg %p2934
    $region110: #{repux_block_forward.2} parent=5 // pred_check_branch
      %2937 = sbr.rel (%p2935) target = $region112
    $region111: #{repux_block_forward.2} parent=5 // pred_region
      %s2938 = ssub.s32 %s10, 2
      // Predicated region
      $region113: #{repux_block_forward.2} parent=111 // pred_check
        %p2939 = pneg %p74
      $region114: #{repux_block_forward.2} parent=111 // pred_check_branch
        %2941 = sbr.rel (%p2939) target = $region116
      $region115: #{repux_block_forward.2} parent=111 // pred_region
        %s2942 = smul.u32 4, %s22
        %p2943 = scmp.lt.s32.totalorder %s21, 1
        %s2944 = scalar_select %p2943, %s21, 1
        %p2945 = scmp.lt.s32.totalorder %s2942, 7
        %s2946 = scalar_select %p2945, %s2942, 7
        %s2947 = smul.addr %s2946, 8
        %s2948 = smul.addr %s2944, 64
        %s2949 = sadd.s32 %s2947, %s2948
        %s2950 = smul.addr %s2949, 8
        %s2951 = scalar_lea.vmem %s2, %s2950
      $region116: #{repux_block_forward.2} parent=111 // pred_fallthru
        _
      // Predicated region
      $region117: #{repux_block_forward.2} parent=111 // pred_check
        %p2952 = pneg %p102
      $region118: #{repux_block_forward.2} parent=111 // pred_check_branch
        %2954 = sbr.rel (%p2952) target = $region120
      $region119: #{repux_block_forward.2} parent=111 // pred_region
        %p2955 = scmp.lt.s32.totalorder %s21, 1
        %s2956 = scalar_select %p2955, %s21, 1
        %p2957 = scmp.lt.s32.totalorder %s22, 1
        %s2958 = scalar_select %p2957, %s22, 1
        %s2959 = smul.addr %s2956, 2
        %s2960 = sadd.s32 %s2958, %s2959
        %s2961 = smul.addr %s2960, 8
        %s2962 = scalar_lea.vmem %s3, %s2961
      $region120: #{repux_block_forward.2} parent=111 // pred_fallthru
        _
    $region112: #{repux_block_forward.2} parent=5 // pred_fallthru
      _
  $region6: #{repux_block_forward.2} parent=0 // loop_footer
    %s14 = sadd.s32 1, %s10
  $region7: #{repux_block_forward.2} parent=0 // loop_footer_branch
    %9 = sbr.rel target = $region3
  $region8: #{repux_block_forward.2} parent=0 // loop_exit
    _
  %2963 = vsyncmov [#allocation3]
  %s2964 = vpop.sfrf %2963
  %p2965 = scmp.eq.s32.totalorder %s2964, 0
  %p2966 = pneg %p2965
  %2968 = shalt.err (%p2966)
  %s2969 = scalar_lea.sflag [#allocation3], 1
  %2970 = vsyncmov %s2969
  %s2971 = vpop.sfrf %2970
  %p2972 = scmp.eq.s32.totalorder %s2971, 0
  %p2973 = pneg %p2972
  %2975 = shalt.err (%p2973)

</llo_original>
